<compile_context>
chip_gen: v5e
topology: v5e:2x2
jax: 0.10.0
libtpu: 0.0.40
codegen_flags: <defaults>
</compile_context>

<pallas_src>
import functools

import jax
import jax.numpy as jnp
from jax.experimental import pallas as pl
from jax.experimental.pallas import tpu as pltpu


def _round_up(n, m):
    return ((n + m - 1) // m) * m


def _vmem_limit_bytes():
    """~3/4 of physical VMEM, capped at 96 MiB (48 MiB v7x, 96 MiB v5e/v6e)."""
    try:
        cap = int(pltpu.get_tpu_info().vmem_capacity_bytes)
    except Exception:
        cap = 64 * 1024 * 1024
    return min((cap * 3) // 4, 96 * 1024 * 1024)


def _resident_spec(shape):
    """BlockSpec for a grid-invariant operand (weights / folded-BN affine).

    Constant index_map keeps it VMEM-resident for the whole kernel; request
    single buffering so it does not pay 2x VMEM on v7x.  Falls back to the
    default (double-buffered) spec if this jax version lacks pipeline_mode.
    """
    index_map = lambda b, j: (0,) * len(shape)
    try:
        return pl.BlockSpec(shape, index_map, pipeline_mode=pl.Buffered(1))
    except TypeError:
        return pl.BlockSpec(shape, index_map)


def _postnet_fused_kernel(x_hbm, *refs, num_blocks, K, TT, T, HP, tanh_flags):
    """Fused Postnet: num_blocks x (conv + folded-BN affine + tanh) + residual.

    x_hbm : (B, Tp + 2*HP, Cp_in) bf16 in HBM (time zero-padded by HP halo).
    refs  : per-block (w, scale, shift) triples, then (o_ref, xbuf, sem):
      w_i     : (K, Cpin_i, Cpout_i) bf16 conv weights (tap-major)
      scale_i : (1, Cpout_i) f32 folded BN scale
      shift_i : (1, Cpout_i) f32 folded BN shift (includes conv bias)
      o_ref   : (1, TT, Cp_out) output tile
      xbuf    : (2, TT + 2*HP, Cp_in) bf16 double-buffered staging window
      sem     : DMA semaphores, one per buffer slot
    """
    params = refs[:3 * num_blocks]
    o_ref, xbuf, sem = refs[3 * num_blocks:]
    w_refs, scale_refs, shift_refs = params[0::3], params[1::3], params[2::3]

    pad = (K - 1) // 2
    L = TT + 2 * HP                      # staging-window rows (multiple of 8)
    b = pl.program_id(0)
    j = pl.program_id(1)
    nt = pl.num_programs(1)
    slot = j % 2

    def start_copy(jj, s):
        t0 = pl.multiple_of(jj * TT, TT)
        pltpu.make_async_copy(x_hbm.at[b, pl.ds(t0, L), :],
                              xbuf.at[s], sem.at[s]).start()

    # Manual double-buffered halo DMA: prime on the first time-tile of this
    # batch row, then always prefetch the next tile before computing.
    @pl.when(j == 0)
    def _():
        start_copy(j, slot)

    @pl.when(j + 1 < nt)
    def _():
        start_copy(j + 1, 1 - slot)

    # Wait for the current window (src operand of the wait is shape-only).
    pltpu.make_async_copy(x_hbm.at[b, pl.ds(0, L), :],
                          xbuf.at[slot], sem.at[slot]).wait()

    x = xbuf[slot]                                   # (L, Cp_in) bf16
    residual = x[HP:HP + TT, :].astype(jnp.float32)  # TODO(synk): bf16-staged

    # Hoisted boundary mask: global time of every buffer row, computed once.
    rows = jax.lax.broadcasted_iota(jnp.int32, (L, 1), 0)
    t_glob = j * TT + rows - HP
    in_seq = (t_glob >= 0) & (t_glob < T)

    y = None
    for i in range(num_blocks):                      # static unroll (N small)
        l_in = L - 2 * i * pad
        l_out = l_in - 2 * pad
        acc = jnp.zeros((l_out, w_refs[i].shape[-1]), jnp.float32)
        # K shifted matmuls == "same" 1D conv.  The shifted slices may lower
        # to sublane relayout copies; cheap VPU/XLU work hidden under the MXU
        # at lane-dense widths (audit with pl.lower_as_mlir if MXU-bound).
        for k in range(K):
            acc += jnp.dot(x[k:k + l_out, :], w_refs[i][k],
                           preferred_element_type=jnp.float32)
        y = acc * scale_refs[i][...] + shift_refs[i][...]   # folded BN, f32
        if tanh_flags[i]:
            y = jnp.tanh(y)
        if i < num_blocks - 1:
            # Re-impose the per-block zero "same" padding outside the real
            # sequence [0, T) so fusion matches the unfused reference exactly.
            off = (i + 1) * pad    # buffer row of this block's output row 0
            y = jnp.where(in_seq[off:off + l_out], y, 0.0)
            x = y.astype(xbuf.dtype)                 # bf16 for next MXU pass

    # Final-block output row r corresponds to buffer row num_blocks*pad + r;
    # the central TT rows of the tile sit at buffer rows [HP, HP + TT).
    c0 = HP - num_blocks * pad
    o_ref[0] = (y[c0:c0 + TT, :] + residual).astype(o_ref.dtype)


def _pack_postnet_params(params, *, lane=128):
    """Per-block lane-dense padding (Cp may differ between I/O and interior)."""
    packed = []
    for p in params:
        k, ci, co = p["w"].shape
        cpi, cpo = _round_up(ci, lane), _round_up(co, lane)
        w = jnp.zeros((k, cpi, cpo), jnp.float32).at[:, :ci, :co].set(p["w"])
        scale = jnp.zeros((1, cpo), jnp.float32).at[0, :co].set(
            p["scale"].reshape(-1))
        shift = jnp.zeros((1, cpo), jnp.float32).at[0, :co].set(
            p["shift"].reshape(-1))                  # padded shift must be 0
        packed.append((w.astype(jnp.bfloat16), scale, shift))
    return packed


def postnet_forward(x_bct, x_lengths, params, *, time_tile=256):
    """Postnet.forward: x is (B, C, T) (PyTorch NCW); x_lengths is unused,
    matching the reference module."""
    del x_lengths
    assert len(params) > 1, "at least two convolutional blocks required"
    K = params[0]["w"].shape[0]
    assert K % 2 == 1, "even kernel_size padding semantics not supported"

    N = len(params)
    pad = (K - 1) // 2
    H = N * pad
    HP = _round_up(H, 8)          # sublane-aligned halo for the staging window
    tanh_flags = tuple(bool(p["tanh"]) for p in params)

    B, C, T = x_bct.shape
    # Big time tiles keep the MXU M-dim full and amortize the halo; clamp for
    # short utterances so we do not compute on pure padding.
    TT = max(8, min(_round_up(time_tile, 8), _round_up(T, 8)))
    NT = pl.cdiv(T, TT)
    Tp = NT * TT
    L = TT + 2 * HP

    # One-time parameter packing (would normally be done at load time).
    packed = _pack_postnet_params(params)
    cp_in = packed[0][0].shape[1]
    cp_out = packed[-1][0].shape[2]
    assert cp_in == cp_out, "postnet output width must equal its input width"

    # Boundary glue on the small (mel-width) input only: NCW->NTC, pad time by
    # the halo and channels to a lane-dense width, cast to bf16.  All large
    # intermediate activations stay in VMEM inside the fused kernel.
    x_btc = jnp.transpose(x_bct, (0, 2, 1))
    x_pad = jnp.pad(x_btc, ((0, 0), (HP, HP + Tp - T), (0, cp_in - C)))
    x_pad = x_pad.astype(jnp.bfloat16)

    kernel = functools.partial(
        _postnet_fused_kernel,
        num_blocks=N, K=K, TT=TT, T=T, HP=HP, tanh_flags=tanh_flags)

    in_specs = [pl.BlockSpec(memory_space=pl.ANY)]    # x: manual halo DMA
    operands = [x_pad]
    for (w, scale, shift) in packed:
        in_specs += [_resident_spec(w.shape),
                     _resident_spec(scale.shape),
                     _resident_spec(shift.shape)]
        operands += [w, scale, shift]

    out = pl.pallas_call(
        kernel,
        out_shape=jax.ShapeDtypeStruct((B, Tp, cp_out), x_bct.dtype),
        grid=(B, NT),
        in_specs=in_specs,
        out_specs=pl.BlockSpec((1, TT, cp_out), lambda b, j: (b, j, 0)),
        scratch_shapes=[
            pltpu.VMEM((2, L, cp_in), jnp.bfloat16),   # double-buffered window
            pltpu.SemaphoreType.DMA((2,)),
        ],
        compiler_params=pltpu.CompilerParams(
            # Batch is megacore-parallel; time stays "arbitrary" so the manual
            # cross-step halo prefetch always sees a sequential j per core.
            dimension_semantics=("parallel", "arbitrary"),
            vmem_limit_bytes=_vmem_limit_bytes(),
        ),
    )(*operands)

    # Slice off lane/time padding; residual already added in-kernel.
    return jnp.transpose(out[:, :T, :C], (0, 2, 1))


def make_postnet_params(key, input_dim, postnet_dim, num_blocks, kernel_size):
    """Deterministic synthetic parameters matching the module's __init__ shapes."""
    dims = ([(input_dim, postnet_dim)]
            + [(postnet_dim, postnet_dim)] * (num_blocks - 2)
            + [(postnet_dim, input_dim)])
    params = []
    eps = 1e-5
    for i, (cin, cout) in enumerate(dims):
        k_w, k_b, k_g, k_be, k_m, k_v, key = jax.random.split(key, 7)
        # conv weight stored as (K, C_in, C_out); PyTorch stores (C_out, C_in, K)
        w = 0.1 * jax.random.normal(k_w, (kernel_size, cin, cout), jnp.float32)
        bias = 0.1 * jax.random.normal(k_b, (cout,), jnp.float32)
        gamma = 1.0 + 0.1 * jax.random.normal(k_g, (cout,), jnp.float32)
        beta = 0.1 * jax.random.normal(k_be, (cout,), jnp.float32)
        run_mean = 0.1 * jax.random.normal(k_m, (cout,), jnp.float32)
        run_var = 1.0 + 0.1 * jnp.abs(jax.random.normal(k_v, (cout,), jnp.float32))
        # Fold BatchNorm (eval mode, running stats) + conv bias into an affine:
        #   BN(conv + bias) = scale * conv + shift
        scale = gamma / jnp.sqrt(run_var + eps)
        shift = scale * (bias - run_mean) + beta
        params.append({
            "w": w,
            "scale": scale.reshape(1, cout),
            "shift": shift.reshape(1, cout),
            "tanh": i != num_blocks - 1,   # last block: identity activation
        })
    return params


def postnet_reference(x_bct, params):
    """Pure-JAX f32 reference of Postnet.forward (correctness oracle)."""
    x = jnp.transpose(x_bct, (0, 2, 1))     # (B, T, C)
    residual = x
    T = x.shape[1]
    for p in params:
        K = p["w"].shape[0]
        pad = (K - 1) // 2
        xp = jnp.pad(x, ((0, 0), (pad, pad), (0, 0)))
        y = sum(jnp.einsum("btc,cd->btd", xp[:, k:k + T, :], p["w"][k])
                for k in range(K))
        y = y * p["scale"] + p["shift"]
        if p["tanh"]:
            y = jnp.tanh(y)
        x = y
    return jnp.transpose(x + residual, (0, 2, 1))


if __name__ == "__main__":
    batch = 2
    input_dim = 8          # number of mel channels
    postnet_dim = 16
    num_blocks = 5
    kernel_size = 5
    seq_len = 200          # deliberately not a multiple of time_tile
    time_tile = 128        # exercises the multi-tile halo + prefetch path

    key = jax.random.PRNGKey(0)
    k_x, k_p = jax.random.split(key)
    x = jax.random.normal(k_x, (batch, input_dim, seq_len), jnp.float32)  # (B, C, T)
    x_lengths = jnp.full((batch,), seq_len, jnp.int32)

    params = make_postnet_params(k_p, input_dim, postnet_dim, num_blocks, kernel_size)

    out = postnet_forward(x, x_lengths, params, time_tile=time_tile)
    out = jax.block_until_ready(out)
    assert out.shape == x.shape and out.dtype == x.dtype

    # Numerical check against the pure-JAX f32 reference (bf16 matmul tolerance).
    ref = postnet_reference(x, params)
    err = float(jnp.max(jnp.abs(out - ref)))
    assert err < 1e-1, f"max abs error {err}"
    print("KERNEL_OK")
</pallas_src>

<mosaic_0001>
module attributes {stable_mosaic.version = 11 : i64} {
  func.func @_postnet_fused_kernel(%arg0: i32, %arg1: i32, %arg2: memref<2x288x128xbf16, #tpu.memory_space<any>>, %arg3: memref<5x128x128xbf16, #tpu.memory_space<vmem>>, %arg4: memref<1x128xf32, #tpu.memory_space<vmem>>, %arg5: memref<1x128xf32, #tpu.memory_space<vmem>>, %arg6: memref<5x128x128xbf16, #tpu.memory_space<vmem>>, %arg7: memref<1x128xf32, #tpu.memory_space<vmem>>, %arg8: memref<1x128xf32, #tpu.memory_space<vmem>>, %arg9: memref<5x128x128xbf16, #tpu.memory_space<vmem>>, %arg10: memref<1x128xf32, #tpu.memory_space<vmem>>, %arg11: memref<1x128xf32, #tpu.memory_space<vmem>>, %arg12: memref<5x128x128xbf16, #tpu.memory_space<vmem>>, %arg13: memref<1x128xf32, #tpu.memory_space<vmem>>, %arg14: memref<1x128xf32, #tpu.memory_space<vmem>>, %arg15: memref<5x128x128xbf16, #tpu.memory_space<vmem>>, %arg16: memref<1x128xf32, #tpu.memory_space<vmem>>, %arg17: memref<1x128xf32, #tpu.memory_space<vmem>>, %arg18: memref<1x128x128xf32, #tpu.memory_space<vmem>>, %arg19: memref<2x160x128xbf16, #tpu.memory_space<vmem>>, %arg20: memref<2x!tpu.dma_semaphore, #tpu.memory_space<semaphore_mem>>) attributes {dimension_semantics = [#tpu.dimension_semantics<parallel>, #tpu.dimension_semantics<arbitrary>], iteration_bounds = array<i64: 2, 2>, scalar_prefetch = 0 : i64, scratch_operands = 2 : i64, tpu.core_type = #tpu.core_type<tc>, window_params = [{}, {pipeline_mode = #tpu.pipeline_mode<synchronous>, transform_indices = @transform_1, window_bounds = array<i64: 5, 128, 128>}, {pipeline_mode = #tpu.pipeline_mode<synchronous>, transform_indices = @transform_2, window_bounds = array<i64: 1, 128>}, {pipeline_mode = #tpu.pipeline_mode<synchronous>, transform_indices = @transform_3, window_bounds = array<i64: 1, 128>}, {pipeline_mode = #tpu.pipeline_mode<synchronous>, transform_indices = @transform_4, window_bounds = array<i64: 5, 128, 128>}, {pipeline_mode = #tpu.pipeline_mode<synchronous>, transform_indices = @transform_5, window_bounds = array<i64: 1, 128>}, {pipeline_mode = #tpu.pipeline_mode<synchronous>, transform_indices = @transform_6, window_bounds = array<i64: 1, 128>}, {pipeline_mode = #tpu.pipeline_mode<synchronous>, transform_indices = @transform_7, window_bounds = array<i64: 5, 128, 128>}, {pipeline_mode = #tpu.pipeline_mode<synchronous>, transform_indices = @transform_8, window_bounds = array<i64: 1, 128>}, {pipeline_mode = #tpu.pipeline_mode<synchronous>, transform_indices = @transform_9, window_bounds = array<i64: 1, 128>}, {pipeline_mode = #tpu.pipeline_mode<synchronous>, transform_indices = @transform_10, window_bounds = array<i64: 5, 128, 128>}, {pipeline_mode = #tpu.pipeline_mode<synchronous>, transform_indices = @transform_11, window_bounds = array<i64: 1, 128>}, {pipeline_mode = #tpu.pipeline_mode<synchronous>, transform_indices = @transform_12, window_bounds = array<i64: 1, 128>}, {pipeline_mode = #tpu.pipeline_mode<synchronous>, transform_indices = @transform_13, window_bounds = array<i64: 5, 128, 128>}, {pipeline_mode = #tpu.pipeline_mode<synchronous>, transform_indices = @transform_14, window_bounds = array<i64: 1, 128>}, {pipeline_mode = #tpu.pipeline_mode<synchronous>, transform_indices = @transform_15, window_bounds = array<i64: 1, 128>}, {transform_indices = @transform_16, window_bounds = array<i64: 1, 128, 128>}]} {
    %c2_i32 = arith.constant 2 : i32
    %c0_i32 = arith.constant 0 : i32
    %0 = arith.cmpi eq, %c2_i32, %c0_i32 : i32
    %c1_i32 = arith.constant 1 : i32
    %1 = arith.select %0, %c1_i32, %c2_i32 : i32
    %2 = arith.remsi %arg1, %1 : i32
    %c0_i32_0 = arith.constant 0 : i32
    %3 = arith.cmpi ne, %2, %c0_i32_0 : i32
    %c0_i32_1 = arith.constant 0 : i32
    %4 = arith.cmpi slt, %2, %c0_i32_1 : i32
    %c0_i32_2 = arith.constant 0 : i32
    %5 = arith.cmpi slt, %1, %c0_i32_2 : i32
    %6 = arith.xori %4, %5 : i1
    %7 = arith.andi %6, %3 : i1
    %8 = arith.addi %2, %1 : i32
    %9 = arith.select %7, %8, %2 : i32
    %c0_i32_3 = arith.constant 0 : i32
    %10 = arith.cmpi eq, %arg1, %c0_i32_3 : i32
    %11 = arith.extui %10 : i1 to i32
    %c0_i32_4 = arith.constant 0 : i32
    %12 = arith.cmpi ne, %11, %c0_i32_4 : i32
    scf.if %12 {
      %c128_i32_141 = arith.constant 128 : i32
      %232 = arith.muli %arg1, %c128_i32_141 : i32
      %233 = tpu.assume_multiple %232, 128 : i32
      %c0_i32_142 = arith.constant 0 : i32
      %234 = tpu.memref_slice %arg2[%arg0, %233, %c0_i32_142] : memref<2x288x128xbf16, #tpu.memory_space<any>> -> memref<1x160x128xbf16, #tpu.memory_space<any>>
      %235 = tpu.memref_squeeze %234 : memref<1x160x128xbf16, #tpu.memory_space<any>> -> memref<160x128xbf16, #tpu.memory_space<any>>
      %c0_i32_143 = arith.constant 0 : i32
      %c0_i32_144 = arith.constant 0 : i32
      %236 = tpu.memref_slice %arg19[%9, %c0_i32_143, %c0_i32_144] : memref<2x160x128xbf16, #tpu.memory_space<vmem>> -> memref<1x160x128xbf16, #tpu.memory_space<vmem>>
      %237 = tpu.memref_squeeze %236 : memref<1x160x128xbf16, #tpu.memory_space<vmem>> -> memref<160x128xbf16, #tpu.memory_space<vmem>>
      %238 = tpu.memref_slice %arg20[%9] : memref<2x!tpu.dma_semaphore, #tpu.memory_space<semaphore_mem>> -> memref<1x!tpu.dma_semaphore, #tpu.memory_space<semaphore_mem>>
      %239 = tpu.memref_squeeze %238 : memref<1x!tpu.dma_semaphore, #tpu.memory_space<semaphore_mem>> -> memref<!tpu.dma_semaphore, #tpu.memory_space<semaphore_mem>>
      tpu.enqueue_dma source(%235 : memref<160x128xbf16, #tpu.memory_space<any>>) target(%237 : memref<160x128xbf16, #tpu.memory_space<vmem>>) target_semaphore(%239 : memref<!tpu.dma_semaphore, #tpu.memory_space<semaphore_mem>>)
    } else {
    }
    %c1_i32_5 = arith.constant 1 : i32
    %13 = arith.addi %arg1, %c1_i32_5 : i32
    %c2_i32_6 = arith.constant 2 : i32
    %14 = arith.cmpi slt, %13, %c2_i32_6 : i32
    %15 = arith.extui %14 : i1 to i32
    %c0_i32_7 = arith.constant 0 : i32
    %16 = arith.cmpi ne, %15, %c0_i32_7 : i32
    scf.if %16 {
      %c1_i32_141 = arith.constant 1 : i32
      %232 = arith.addi %arg1, %c1_i32_141 : i32
      %c1_i32_142 = arith.constant 1 : i32
      %233 = arith.subi %c1_i32_142, %9 : i32
      %c128_i32_143 = arith.constant 128 : i32
      %234 = arith.muli %232, %c128_i32_143 : i32
      %235 = tpu.assume_multiple %234, 128 : i32
      %c0_i32_144 = arith.constant 0 : i32
      %236 = tpu.memref_slice %arg2[%arg0, %235, %c0_i32_144] : memref<2x288x128xbf16, #tpu.memory_space<any>> -> memref<1x160x128xbf16, #tpu.memory_space<any>>
      %237 = tpu.memref_squeeze %236 : memref<1x160x128xbf16, #tpu.memory_space<any>> -> memref<160x128xbf16, #tpu.memory_space<any>>
      %c0_i32_145 = arith.constant 0 : i32
      %c0_i32_146 = arith.constant 0 : i32
      %238 = tpu.memref_slice %arg19[%233, %c0_i32_145, %c0_i32_146] : memref<2x160x128xbf16, #tpu.memory_space<vmem>> -> memref<1x160x128xbf16, #tpu.memory_space<vmem>>
      %239 = tpu.memref_squeeze %238 : memref<1x160x128xbf16, #tpu.memory_space<vmem>> -> memref<160x128xbf16, #tpu.memory_space<vmem>>
      %240 = tpu.memref_slice %arg20[%233] : memref<2x!tpu.dma_semaphore, #tpu.memory_space<semaphore_mem>> -> memref<1x!tpu.dma_semaphore, #tpu.memory_space<semaphore_mem>>
      %241 = tpu.memref_squeeze %240 : memref<1x!tpu.dma_semaphore, #tpu.memory_space<semaphore_mem>> -> memref<!tpu.dma_semaphore, #tpu.memory_space<semaphore_mem>>
      tpu.enqueue_dma source(%237 : memref<160x128xbf16, #tpu.memory_space<any>>) target(%239 : memref<160x128xbf16, #tpu.memory_space<vmem>>) target_semaphore(%241 : memref<!tpu.dma_semaphore, #tpu.memory_space<semaphore_mem>>)
    } else {
    }
    %c0_i32_8 = arith.constant 0 : i32
    %c0_i32_9 = arith.constant 0 : i32
    %17 = tpu.memref_slice %arg2[%arg0, %c0_i32_8, %c0_i32_9] : memref<2x288x128xbf16, #tpu.memory_space<any>> -> memref<1x160x128xbf16, #tpu.memory_space<any>>
    %18 = tpu.memref_squeeze %17 : memref<1x160x128xbf16, #tpu.memory_space<any>> -> memref<160x128xbf16, #tpu.memory_space<any>>
    %c0_i32_10 = arith.constant 0 : i32
    %c0_i32_11 = arith.constant 0 : i32
    %19 = tpu.memref_slice %arg19[%9, %c0_i32_10, %c0_i32_11] : memref<2x160x128xbf16, #tpu.memory_space<vmem>> -> memref<1x160x128xbf16, #tpu.memory_space<vmem>>
    %20 = tpu.memref_squeeze %19 : memref<1x160x128xbf16, #tpu.memory_space<vmem>> -> memref<160x128xbf16, #tpu.memory_space<vmem>>
    %21 = tpu.memref_slice %arg20[%9] : memref<2x!tpu.dma_semaphore, #tpu.memory_space<semaphore_mem>> -> memref<1x!tpu.dma_semaphore, #tpu.memory_space<semaphore_mem>>
    %22 = tpu.memref_squeeze %21 : memref<1x!tpu.dma_semaphore, #tpu.memory_space<semaphore_mem>> -> memref<!tpu.dma_semaphore, #tpu.memory_space<semaphore_mem>>
    tpu.wait_dma2 semaphore(%22 : memref<!tpu.dma_semaphore, #tpu.memory_space<semaphore_mem>>) src(%18 : memref<160x128xbf16, #tpu.memory_space<any>>) dst(%20 : memref<160x128xbf16, #tpu.memory_space<vmem>>)
    %23 = arith.index_cast %9 : i32 to index
    %c0 = arith.constant 0 : index
    %c0_12 = arith.constant 0 : index
    %24 = vector.load %arg19[%23, %c0, %c0_12] : memref<2x160x128xbf16, #tpu.memory_space<vmem>>, vector<1x160x128xbf16>
    %25 = vector.shape_cast %24 : vector<1x160x128xbf16> to vector<160x128xbf16>
    %26 = vector.extract_strided_slice %25 {offsets = [16, 0], sizes = [128, 128], strides = [1, 1]} : vector<160x128xbf16> to vector<128x128xbf16>
    %27 = arith.extf %26 : vector<128x128xbf16> to vector<128x128xf32>
    %28 = tpu.iota {dimensions = array<i32: 0>} : vector<160x1xi32>
    %c128_i32 = arith.constant 128 : i32
    %29 = arith.muli %arg1, %c128_i32 : i32
    %30 = vector.broadcast %29 : i32 to vector<160x1xi32>
    %31 = arith.addi %30, %28 : vector<160x1xi32>
    %c16_i32 = arith.constant 16 : i32
    %32 = vector.broadcast %c16_i32 : i32 to vector<160x1xi32>
    %33 = arith.subi %31, %32 : vector<160x1xi32>
    %c0_i32_13 = arith.constant 0 : i32
    %34 = vector.broadcast %c0_i32_13 : i32 to vector<160x1xi32>
    %35 = arith.cmpi sge, %33, %34 : vector<160x1xi32>
    %c200_i32 = arith.constant 200 : i32
    %36 = vector.broadcast %c200_i32 : i32 to vector<160x1xi32>
    %37 = arith.cmpi slt, %33, %36 : vector<160x1xi32>
    %38 = arith.andi %35, %37 : vector<160x1xi1>
    %cst = arith.constant 0.000000e+00 : f32
    %39 = vector.broadcast %cst : f32 to vector<156x128xf32>
    %40 = vector.extract_strided_slice %25 {offsets = [0, 0], sizes = [156, 128], strides = [1, 1]} : vector<160x128xbf16> to vector<156x128xbf16>
    %c0_14 = arith.constant 0 : index
    %c0_15 = arith.constant 0 : index
    %c0_16 = arith.constant 0 : index
    %41 = vector.load %arg3[%c0_14, %c0_15, %c0_16] : memref<5x128x128xbf16, #tpu.memory_space<vmem>>, vector<1x128x128xbf16>
    %42 = vector.shape_cast %41 : vector<1x128x128xbf16> to vector<128x128xbf16>
    %cst_17 = arith.constant dense<0.000000e+00> : vector<156x128xf32>
    %43 = tpu.matmul %40, %42, %cst_17 {dimension_numbers = #tpu.dot_dimension_numbers<[1], [0], [0], [1], [0, 0, 1, 1], [], []>} : vector<156x128xbf16>, vector<128x128xbf16>, vector<156x128xf32> -> vector<156x128xf32>
    %44 = arith.addf %39, %43 : vector<156x128xf32>
    %45 = vector.extract_strided_slice %25 {offsets = [1, 0], sizes = [156, 128], strides = [1, 1]} : vector<160x128xbf16> to vector<156x128xbf16>
    %c1 = arith.constant 1 : index
    %c0_18 = arith.constant 0 : index
    %c0_19 = arith.constant 0 : index
    %46 = vector.load %arg3[%c1, %c0_18, %c0_19] : memref<5x128x128xbf16, #tpu.memory_space<vmem>>, vector<1x128x128xbf16>
    %47 = vector.shape_cast %46 : vector<1x128x128xbf16> to vector<128x128xbf16>
    %cst_20 = arith.constant dense<0.000000e+00> : vector<156x128xf32>
    %48 = tpu.matmul %45, %47, %cst_20 {dimension_numbers = #tpu.dot_dimension_numbers<[1], [0], [0], [1], [0, 0, 1, 1], [], []>} : vector<156x128xbf16>, vector<128x128xbf16>, vector<156x128xf32> -> vector<156x128xf32>
    %49 = arith.addf %44, %48 : vector<156x128xf32>
    %50 = vector.extract_strided_slice %25 {offsets = [2, 0], sizes = [156, 128], strides = [1, 1]} : vector<160x128xbf16> to vector<156x128xbf16>
    %c2 = arith.constant 2 : index
    %c0_21 = arith.constant 0 : index
    %c0_22 = arith.constant 0 : index
    %51 = vector.load %arg3[%c2, %c0_21, %c0_22] : memref<5x128x128xbf16, #tpu.memory_space<vmem>>, vector<1x128x128xbf16>
    %52 = vector.shape_cast %51 : vector<1x128x128xbf16> to vector<128x128xbf16>
    %cst_23 = arith.constant dense<0.000000e+00> : vector<156x128xf32>
    %53 = tpu.matmul %50, %52, %cst_23 {dimension_numbers = #tpu.dot_dimension_numbers<[1], [0], [0], [1], [0, 0, 1, 1], [], []>} : vector<156x128xbf16>, vector<128x128xbf16>, vector<156x128xf32> -> vector<156x128xf32>
    %54 = arith.addf %49, %53 : vector<156x128xf32>
    %55 = vector.extract_strided_slice %25 {offsets = [3, 0], sizes = [156, 128], strides = [1, 1]} : vector<160x128xbf16> to vector<156x128xbf16>
    %c3 = arith.constant 3 : index
    %c0_24 = arith.constant 0 : index
    %c0_25 = arith.constant 0 : index
    %56 = vector.load %arg3[%c3, %c0_24, %c0_25] : memref<5x128x128xbf16, #tpu.memory_space<vmem>>, vector<1x128x128xbf16>
    %57 = vector.shape_cast %56 : vector<1x128x128xbf16> to vector<128x128xbf16>
    %cst_26 = arith.constant dense<0.000000e+00> : vector<156x128xf32>
    %58 = tpu.matmul %55, %57, %cst_26 {dimension_numbers = #tpu.dot_dimension_numbers<[1], [0], [0], [1], [0, 0, 1, 1], [], []>} : vector<156x128xbf16>, vector<128x128xbf16>, vector<156x128xf32> -> vector<156x128xf32>
    %59 = arith.addf %54, %58 : vector<156x128xf32>
    %60 = vector.extract_strided_slice %25 {offsets = [4, 0], sizes = [156, 128], strides = [1, 1]} : vector<160x128xbf16> to vector<156x128xbf16>
    %c4 = arith.constant 4 : index
    %c0_27 = arith.constant 0 : index
    %c0_28 = arith.constant 0 : index
    %61 = vector.load %arg3[%c4, %c0_27, %c0_28] : memref<5x128x128xbf16, #tpu.memory_space<vmem>>, vector<1x128x128xbf16>
    %62 = vector.shape_cast %61 : vector<1x128x128xbf16> to vector<128x128xbf16>
    %cst_29 = arith.constant dense<0.000000e+00> : vector<156x128xf32>
    %63 = tpu.matmul %60, %62, %cst_29 {dimension_numbers = #tpu.dot_dimension_numbers<[1], [0], [0], [1], [0, 0, 1, 1], [], []>} : vector<156x128xbf16>, vector<128x128xbf16>, vector<156x128xf32> -> vector<156x128xf32>
    %64 = arith.addf %59, %63 : vector<156x128xf32>
    %c0_30 = arith.constant 0 : index
    %c0_31 = arith.constant 0 : index
    %65 = vector.load %arg4[%c0_30, %c0_31] : memref<1x128xf32, #tpu.memory_space<vmem>>, vector<1x128xf32>
    %66 = vector.broadcast %65 : vector<1x128xf32> to vector<156x128xf32>
    %67 = arith.mulf %64, %66 : vector<156x128xf32>
    %c0_32 = arith.constant 0 : index
    %c0_33 = arith.constant 0 : index
    %68 = vector.load %arg5[%c0_32, %c0_33] : memref<1x128xf32, #tpu.memory_space<vmem>>, vector<1x128xf32>
    %69 = vector.broadcast %68 : vector<1x128xf32> to vector<156x128xf32>
    %70 = arith.addf %67, %69 : vector<156x128xf32>
    %71 = math.tanh %70 : vector<156x128xf32>
    %72 = vector.extract_strided_slice %38 {offsets = [2, 0], sizes = [156, 1], strides = [1, 1]} : vector<160x1xi1> to vector<156x1xi1>
    %cst_34 = arith.constant 0.000000e+00 : f32
    %73 = vector.shape_cast %72 : vector<156x1xi1> to vector<156x1xi1>
    %74 = vector.broadcast %73 : vector<156x1xi1> to vector<156x128xi1>
    %75 = vector.broadcast %cst_34 : f32 to vector<156x128xf32>
    %76 = arith.select %74, %71, %75 : vector<156x128xi1>, vector<156x128xf32>
    %77 = arith.truncf %76 : vector<156x128xf32> to vector<156x128xbf16>
    %cst_35 = arith.constant 0.000000e+00 : f32
    %78 = vector.broadcast %cst_35 : f32 to vector<152x128xf32>
    %79 = vector.extract_strided_slice %77 {offsets = [0, 0], sizes = [152, 128], strides = [1, 1]} : vector<156x128xbf16> to vector<152x128xbf16>
    %c0_36 = arith.constant 0 : index
    %c0_37 = arith.constant 0 : index
    %c0_38 = arith.constant 0 : index
    %80 = vector.load %arg6[%c0_36, %c0_37, %c0_38] : memref<5x128x128xbf16, #tpu.memory_space<vmem>>, vector<1x128x128xbf16>
    %81 = vector.shape_cast %80 : vector<1x128x128xbf16> to vector<128x128xbf16>
    %cst_39 = arith.constant dense<0.000000e+00> : vector<152x128xf32>
    %82 = tpu.matmul %79, %81, %cst_39 {dimension_numbers = #tpu.dot_dimension_numbers<[1], [0], [0], [1], [0, 0, 1, 1], [], []>} : vector<152x128xbf16>, vector<128x128xbf16>, vector<152x128xf32> -> vector<152x128xf32>
    %83 = arith.addf %78, %82 : vector<152x128xf32>
    %84 = vector.extract_strided_slice %77 {offsets = [1, 0], sizes = [152, 128], strides = [1, 1]} : vector<156x128xbf16> to vector<152x128xbf16>
    %c1_40 = arith.constant 1 : index
    %c0_41 = arith.constant 0 : index
    %c0_42 = arith.constant 0 : index
    %85 = vector.load %arg6[%c1_40, %c0_41, %c0_42] : memref<5x128x128xbf16, #tpu.memory_space<vmem>>, vector<1x128x128xbf16>
    %86 = vector.shape_cast %85 : vector<1x128x128xbf16> to vector<128x128xbf16>
    %cst_43 = arith.constant dense<0.000000e+00> : vector<152x128xf32>
    %87 = tpu.matmul %84, %86, %cst_43 {dimension_numbers = #tpu.dot_dimension_numbers<[1], [0], [0], [1], [0, 0, 1, 1], [], []>} : vector<152x128xbf16>, vector<128x128xbf16>, vector<152x128xf32> -> vector<152x128xf32>
    %88 = arith.addf %83, %87 : vector<152x128xf32>
    %89 = vector.extract_strided_slice %77 {offsets = [2, 0], sizes = [152, 128], strides = [1, 1]} : vector<156x128xbf16> to vector<152x128xbf16>
    %c2_44 = arith.constant 2 : index
    %c0_45 = arith.constant 0 : index
    %c0_46 = arith.constant 0 : index
    %90 = vector.load %arg6[%c2_44, %c0_45, %c0_46] : memref<5x128x128xbf16, #tpu.memory_space<vmem>>, vector<1x128x128xbf16>
    %91 = vector.shape_cast %90 : vector<1x128x128xbf16> to vector<128x128xbf16>
    %cst_47 = arith.constant dense<0.000000e+00> : vector<152x128xf32>
    %92 = tpu.matmul %89, %91, %cst_47 {dimension_numbers = #tpu.dot_dimension_numbers<[1], [0], [0], [1], [0, 0, 1, 1], [], []>} : vector<152x128xbf16>, vector<128x128xbf16>, vector<152x128xf32> -> vector<152x128xf32>
    %93 = arith.addf %88, %92 : vector<152x128xf32>
    %94 = vector.extract_strided_slice %77 {offsets = [3, 0], sizes = [152, 128], strides = [1, 1]} : vector<156x128xbf16> to vector<152x128xbf16>
    %c3_48 = arith.constant 3 : index
    %c0_49 = arith.constant 0 : index
    %c0_50 = arith.constant 0 : index
    %95 = vector.load %arg6[%c3_48, %c0_49, %c0_50] : memref<5x128x128xbf16, #tpu.memory_space<vmem>>, vector<1x128x128xbf16>
    %96 = vector.shape_cast %95 : vector<1x128x128xbf16> to vector<128x128xbf16>
    %cst_51 = arith.constant dense<0.000000e+00> : vector<152x128xf32>
    %97 = tpu.matmul %94, %96, %cst_51 {dimension_numbers = #tpu.dot_dimension_numbers<[1], [0], [0], [1], [0, 0, 1, 1], [], []>} : vector<152x128xbf16>, vector<128x128xbf16>, vector<152x128xf32> -> vector<152x128xf32>
    %98 = arith.addf %93, %97 : vector<152x128xf32>
    %99 = vector.extract_strided_slice %77 {offsets = [4, 0], sizes = [152, 128], strides = [1, 1]} : vector<156x128xbf16> to vector<152x128xbf16>
    %c4_52 = arith.constant 4 : index
    %c0_53 = arith.constant 0 : index
    %c0_54 = arith.constant 0 : index
    %100 = vector.load %arg6[%c4_52, %c0_53, %c0_54] : memref<5x128x128xbf16, #tpu.memory_space<vmem>>, vector<1x128x128xbf16>
    %101 = vector.shape_cast %100 : vector<1x128x128xbf16> to vector<128x128xbf16>
    %cst_55 = arith.constant dense<0.000000e+00> : vector<152x128xf32>
    %102 = tpu.matmul %99, %101, %cst_55 {dimension_numbers = #tpu.dot_dimension_numbers<[1], [0], [0], [1], [0, 0, 1, 1], [], []>} : vector<152x128xbf16>, vector<128x128xbf16>, vector<152x128xf32> -> vector<152x128xf32>
    %103 = arith.addf %98, %102 : vector<152x128xf32>
    %c0_56 = arith.constant 0 : index
    %c0_57 = arith.constant 0 : index
    %104 = vector.load %arg7[%c0_56, %c0_57] : memref<1x128xf32, #tpu.memory_space<vmem>>, vector<1x128xf32>
    %105 = vector.broadcast %104 : vector<1x128xf32> to vector<152x128xf32>
    %106 = arith.mulf %103, %105 : vector<152x128xf32>
    %c0_58 = arith.constant 0 : index
    %c0_59 = arith.constant 0 : index
    %107 = vector.load %arg8[%c0_58, %c0_59] : memref<1x128xf32, #tpu.memory_space<vmem>>, vector<1x128xf32>
    %108 = vector.broadcast %107 : vector<1x128xf32> to vector<152x128xf32>
    %109 = arith.addf %106, %108 : vector<152x128xf32>
    %110 = math.tanh %109 : vector<152x128xf32>
    %111 = vector.extract_strided_slice %38 {offsets = [4, 0], sizes = [152, 1], strides = [1, 1]} : vector<160x1xi1> to vector<152x1xi1>
    %cst_60 = arith.constant 0.000000e+00 : f32
    %112 = vector.shape_cast %111 : vector<152x1xi1> to vector<152x1xi1>
    %113 = vector.broadcast %112 : vector<152x1xi1> to vector<152x128xi1>
    %114 = vector.broadcast %cst_60 : f32 to vector<152x128xf32>
    %115 = arith.select %113, %110, %114 : vector<152x128xi1>, vector<152x128xf32>
    %116 = arith.truncf %115 : vector<152x128xf32> to vector<152x128xbf16>
    %cst_61 = arith.constant 0.000000e+00 : f32
    %117 = vector.broadcast %cst_61 : f32 to vector<148x128xf32>
    %118 = vector.extract_strided_slice %116 {offsets = [0, 0], sizes = [148, 128], strides = [1, 1]} : vector<152x128xbf16> to vector<148x128xbf16>
    %c0_62 = arith.constant 0 : index
    %c0_63 = arith.constant 0 : index
    %c0_64 = arith.constant 0 : index
    %119 = vector.load %arg9[%c0_62, %c0_63, %c0_64] : memref<5x128x128xbf16, #tpu.memory_space<vmem>>, vector<1x128x128xbf16>
    %120 = vector.shape_cast %119 : vector<1x128x128xbf16> to vector<128x128xbf16>
    %cst_65 = arith.constant dense<0.000000e+00> : vector<148x128xf32>
    %121 = tpu.matmul %118, %120, %cst_65 {dimension_numbers = #tpu.dot_dimension_numbers<[1], [0], [0], [1], [0, 0, 1, 1], [], []>} : vector<148x128xbf16>, vector<128x128xbf16>, vector<148x128xf32> -> vector<148x128xf32>
    %122 = arith.addf %117, %121 : vector<148x128xf32>
    %123 = vector.extract_strided_slice %116 {offsets = [1, 0], sizes = [148, 128], strides = [1, 1]} : vector<152x128xbf16> to vector<148x128xbf16>
    %c1_66 = arith.constant 1 : index
    %c0_67 = arith.constant 0 : index
    %c0_68 = arith.constant 0 : index
    %124 = vector.load %arg9[%c1_66, %c0_67, %c0_68] : memref<5x128x128xbf16, #tpu.memory_space<vmem>>, vector<1x128x128xbf16>
    %125 = vector.shape_cast %124 : vector<1x128x128xbf16> to vector<128x128xbf16>
    %cst_69 = arith.constant dense<0.000000e+00> : vector<148x128xf32>
    %126 = tpu.matmul %123, %125, %cst_69 {dimension_numbers = #tpu.dot_dimension_numbers<[1], [0], [0], [1], [0, 0, 1, 1], [], []>} : vector<148x128xbf16>, vector<128x128xbf16>, vector<148x128xf32> -> vector<148x128xf32>
    %127 = arith.addf %122, %126 : vector<148x128xf32>
    %128 = vector.extract_strided_slice %116 {offsets = [2, 0], sizes = [148, 128], strides = [1, 1]} : vector<152x128xbf16> to vector<148x128xbf16>
    %c2_70 = arith.constant 2 : index
    %c0_71 = arith.constant 0 : index
    %c0_72 = arith.constant 0 : index
    %129 = vector.load %arg9[%c2_70, %c0_71, %c0_72] : memref<5x128x128xbf16, #tpu.memory_space<vmem>>, vector<1x128x128xbf16>
    %130 = vector.shape_cast %129 : vector<1x128x128xbf16> to vector<128x128xbf16>
    %cst_73 = arith.constant dense<0.000000e+00> : vector<148x128xf32>
    %131 = tpu.matmul %128, %130, %cst_73 {dimension_numbers = #tpu.dot_dimension_numbers<[1], [0], [0], [1], [0, 0, 1, 1], [], []>} : vector<148x128xbf16>, vector<128x128xbf16>, vector<148x128xf32> -> vector<148x128xf32>
    %132 = arith.addf %127, %131 : vector<148x128xf32>
    %133 = vector.extract_strided_slice %116 {offsets = [3, 0], sizes = [148, 128], strides = [1, 1]} : vector<152x128xbf16> to vector<148x128xbf16>
    %c3_74 = arith.constant 3 : index
    %c0_75 = arith.constant 0 : index
    %c0_76 = arith.constant 0 : index
    %134 = vector.load %arg9[%c3_74, %c0_75, %c0_76] : memref<5x128x128xbf16, #tpu.memory_space<vmem>>, vector<1x128x128xbf16>
    %135 = vector.shape_cast %134 : vector<1x128x128xbf16> to vector<128x128xbf16>
    %cst_77 = arith.constant dense<0.000000e+00> : vector<148x128xf32>
    %136 = tpu.matmul %133, %135, %cst_77 {dimension_numbers = #tpu.dot_dimension_numbers<[1], [0], [0], [1], [0, 0, 1, 1], [], []>} : vector<148x128xbf16>, vector<128x128xbf16>, vector<148x128xf32> -> vector<148x128xf32>
    %137 = arith.addf %132, %136 : vector<148x128xf32>
    %138 = vector.extract_strided_slice %116 {offsets = [4, 0], sizes = [148, 128], strides = [1, 1]} : vector<152x128xbf16> to vector<148x128xbf16>
    %c4_78 = arith.constant 4 : index
    %c0_79 = arith.constant 0 : index
    %c0_80 = arith.constant 0 : index
    %139 = vector.load %arg9[%c4_78, %c0_79, %c0_80] : memref<5x128x128xbf16, #tpu.memory_space<vmem>>, vector<1x128x128xbf16>
    %140 = vector.shape_cast %139 : vector<1x128x128xbf16> to vector<128x128xbf16>
    %cst_81 = arith.constant dense<0.000000e+00> : vector<148x128xf32>
    %141 = tpu.matmul %138, %140, %cst_81 {dimension_numbers = #tpu.dot_dimension_numbers<[1], [0], [0], [1], [0, 0, 1, 1], [], []>} : vector<148x128xbf16>, vector<128x128xbf16>, vector<148x128xf32> -> vector<148x128xf32>
    %142 = arith.addf %137, %141 : vector<148x128xf32>
    %c0_82 = arith.constant 0 : index
    %c0_83 = arith.constant 0 : index
    %143 = vector.load %arg10[%c0_82, %c0_83] : memref<1x128xf32, #tpu.memory_space<vmem>>, vector<1x128xf32>
    %144 = vector.broadcast %143 : vector<1x128xf32> to vector<148x128xf32>
    %145 = arith.mulf %142, %144 : vector<148x128xf32>
    %c0_84 = arith.constant 0 : index
    %c0_85 = arith.constant 0 : index
    %146 = vector.load %arg11[%c0_84, %c0_85] : memref<1x128xf32, #tpu.memory_space<vmem>>, vector<1x128xf32>
    %147 = vector.broadcast %146 : vector<1x128xf32> to vector<148x128xf32>
    %148 = arith.addf %145, %147 : vector<148x128xf32>
    %149 = math.tanh %148 : vector<148x128xf32>
    %150 = vector.extract_strided_slice %38 {offsets = [6, 0], sizes = [148, 1], strides = [1, 1]} : vector<160x1xi1> to vector<148x1xi1>
    %cst_86 = arith.constant 0.000000e+00 : f32
    %151 = vector.shape_cast %150 : vector<148x1xi1> to vector<148x1xi1>
    %152 = vector.broadcast %151 : vector<148x1xi1> to vector<148x128xi1>
    %153 = vector.broadcast %cst_86 : f32 to vector<148x128xf32>
    %154 = arith.select %152, %149, %153 : vector<148x128xi1>, vector<148x128xf32>
    %155 = arith.truncf %154 : vector<148x128xf32> to vector<148x128xbf16>
    %cst_87 = arith.constant 0.000000e+00 : f32
    %156 = vector.broadcast %cst_87 : f32 to vector<144x128xf32>
    %157 = vector.extract_strided_slice %155 {offsets = [0, 0], sizes = [144, 128], strides = [1, 1]} : vector<148x128xbf16> to vector<144x128xbf16>
    %c0_88 = arith.constant 0 : index
    %c0_89 = arith.constant 0 : index
    %c0_90 = arith.constant 0 : index
    %158 = vector.load %arg12[%c0_88, %c0_89, %c0_90] : memref<5x128x128xbf16, #tpu.memory_space<vmem>>, vector<1x128x128xbf16>
    %159 = vector.shape_cast %158 : vector<1x128x128xbf16> to vector<128x128xbf16>
    %cst_91 = arith.constant dense<0.000000e+00> : vector<144x128xf32>
    %160 = tpu.matmul %157, %159, %cst_91 {dimension_numbers = #tpu.dot_dimension_numbers<[1], [0], [0], [1], [0, 0, 1, 1], [], []>} : vector<144x128xbf16>, vector<128x128xbf16>, vector<144x128xf32> -> vector<144x128xf32>
    %161 = arith.addf %156, %160 : vector<144x128xf32>
    %162 = vector.extract_strided_slice %155 {offsets = [1, 0], sizes = [144, 128], strides = [1, 1]} : vector<148x128xbf16> to vector<144x128xbf16>
    %c1_92 = arith.constant 1 : index
    %c0_93 = arith.constant 0 : index
    %c0_94 = arith.constant 0 : index
    %163 = vector.load %arg12[%c1_92, %c0_93, %c0_94] : memref<5x128x128xbf16, #tpu.memory_space<vmem>>, vector<1x128x128xbf16>
    %164 = vector.shape_cast %163 : vector<1x128x128xbf16> to vector<128x128xbf16>
    %cst_95 = arith.constant dense<0.000000e+00> : vector<144x128xf32>
    %165 = tpu.matmul %162, %164, %cst_95 {dimension_numbers = #tpu.dot_dimension_numbers<[1], [0], [0], [1], [0, 0, 1, 1], [], []>} : vector<144x128xbf16>, vector<128x128xbf16>, vector<144x128xf32> -> vector<144x128xf32>
    %166 = arith.addf %161, %165 : vector<144x128xf32>
    %167 = vector.extract_strided_slice %155 {offsets = [2, 0], sizes = [144, 128], strides = [1, 1]} : vector<148x128xbf16> to vector<144x128xbf16>
    %c2_96 = arith.constant 2 : index
    %c0_97 = arith.constant 0 : index
    %c0_98 = arith.constant 0 : index
    %168 = vector.load %arg12[%c2_96, %c0_97, %c0_98] : memref<5x128x128xbf16, #tpu.memory_space<vmem>>, vector<1x128x128xbf16>
    %169 = vector.shape_cast %168 : vector<1x128x128xbf16> to vector<128x128xbf16>
    %cst_99 = arith.constant dense<0.000000e+00> : vector<144x128xf32>
    %170 = tpu.matmul %167, %169, %cst_99 {dimension_numbers = #tpu.dot_dimension_numbers<[1], [0], [0], [1], [0, 0, 1, 1], [], []>} : vector<144x128xbf16>, vector<128x128xbf16>, vector<144x128xf32> -> vector<144x128xf32>
    %171 = arith.addf %166, %170 : vector<144x128xf32>
    %172 = vector.extract_strided_slice %155 {offsets = [3, 0], sizes = [144, 128], strides = [1, 1]} : vector<148x128xbf16> to vector<144x128xbf16>
    %c3_100 = arith.constant 3 : index
    %c0_101 = arith.constant 0 : index
    %c0_102 = arith.constant 0 : index
    %173 = vector.load %arg12[%c3_100, %c0_101, %c0_102] : memref<5x128x128xbf16, #tpu.memory_space<vmem>>, vector<1x128x128xbf16>
    %174 = vector.shape_cast %173 : vector<1x128x128xbf16> to vector<128x128xbf16>
    %cst_103 = arith.constant dense<0.000000e+00> : vector<144x128xf32>
    %175 = tpu.matmul %172, %174, %cst_103 {dimension_numbers = #tpu.dot_dimension_numbers<[1], [0], [0], [1], [0, 0, 1, 1], [], []>} : vector<144x128xbf16>, vector<128x128xbf16>, vector<144x128xf32> -> vector<144x128xf32>
    %176 = arith.addf %171, %175 : vector<144x128xf32>
    %177 = vector.extract_strided_slice %155 {offsets = [4, 0], sizes = [144, 128], strides = [1, 1]} : vector<148x128xbf16> to vector<144x128xbf16>
    %c4_104 = arith.constant 4 : index
    %c0_105 = arith.constant 0 : index
    %c0_106 = arith.constant 0 : index
    %178 = vector.load %arg12[%c4_104, %c0_105, %c0_106] : memref<5x128x128xbf16, #tpu.memory_space<vmem>>, vector<1x128x128xbf16>
    %179 = vector.shape_cast %178 : vector<1x128x128xbf16> to vector<128x128xbf16>
    %cst_107 = arith.constant dense<0.000000e+00> : vector<144x128xf32>
    %180 = tpu.matmul %177, %179, %cst_107 {dimension_numbers = #tpu.dot_dimension_numbers<[1], [0], [0], [1], [0, 0, 1, 1], [], []>} : vector<144x128xbf16>, vector<128x128xbf16>, vector<144x128xf32> -> vector<144x128xf32>
    %181 = arith.addf %176, %180 : vector<144x128xf32>
    %c0_108 = arith.constant 0 : index
    %c0_109 = arith.constant 0 : index
    %182 = vector.load %arg13[%c0_108, %c0_109] : memref<1x128xf32, #tpu.memory_space<vmem>>, vector<1x128xf32>
    %183 = vector.broadcast %182 : vector<1x128xf32> to vector<144x128xf32>
    %184 = arith.mulf %181, %183 : vector<144x128xf32>
    %c0_110 = arith.constant 0 : index
    %c0_111 = arith.constant 0 : index
    %185 = vector.load %arg14[%c0_110, %c0_111] : memref<1x128xf32, #tpu.memory_space<vmem>>, vector<1x128xf32>
    %186 = vector.broadcast %185 : vector<1x128xf32> to vector<144x128xf32>
    %187 = arith.addf %184, %186 : vector<144x128xf32>
    %188 = math.tanh %187 : vector<144x128xf32>
    %189 = vector.extract_strided_slice %38 {offsets = [8, 0], sizes = [144, 1], strides = [1, 1]} : vector<160x1xi1> to vector<144x1xi1>
    %cst_112 = arith.constant 0.000000e+00 : f32
    %190 = vector.shape_cast %189 : vector<144x1xi1> to vector<144x1xi1>
    %191 = vector.broadcast %190 : vector<144x1xi1> to vector<144x128xi1>
    %192 = vector.broadcast %cst_112 : f32 to vector<144x128xf32>
    %193 = arith.select %191, %188, %192 : vector<144x128xi1>, vector<144x128xf32>
    %194 = arith.truncf %193 : vector<144x128xf32> to vector<144x128xbf16>
    %cst_113 = arith.constant 0.000000e+00 : f32
    %195 = vector.broadcast %cst_113 : f32 to vector<140x128xf32>
    %196 = vector.extract_strided_slice %194 {offsets = [0, 0], sizes = [140, 128], strides = [1, 1]} : vector<144x128xbf16> to vector<140x128xbf16>
    %c0_114 = arith.constant 0 : index
    %c0_115 = arith.constant 0 : index
    %c0_116 = arith.constant 0 : index
    %197 = vector.load %arg15[%c0_114, %c0_115, %c0_116] : memref<5x128x128xbf16, #tpu.memory_space<vmem>>, vector<1x128x128xbf16>
    %198 = vector.shape_cast %197 : vector<1x128x128xbf16> to vector<128x128xbf16>
    %cst_117 = arith.constant dense<0.000000e+00> : vector<140x128xf32>
    %199 = tpu.matmul %196, %198, %cst_117 {dimension_numbers = #tpu.dot_dimension_numbers<[1], [0], [0], [1], [0, 0, 1, 1], [], []>} : vector<140x128xbf16>, vector<128x128xbf16>, vector<140x128xf32> -> vector<140x128xf32>
    %200 = arith.addf %195, %199 : vector<140x128xf32>
    %201 = vector.extract_strided_slice %194 {offsets = [1, 0], sizes = [140, 128], strides = [1, 1]} : vector<144x128xbf16> to vector<140x128xbf16>
    %c1_118 = arith.constant 1 : index
    %c0_119 = arith.constant 0 : index
    %c0_120 = arith.constant 0 : index
    %202 = vector.load %arg15[%c1_118, %c0_119, %c0_120] : memref<5x128x128xbf16, #tpu.memory_space<vmem>>, vector<1x128x128xbf16>
    %203 = vector.shape_cast %202 : vector<1x128x128xbf16> to vector<128x128xbf16>
    %cst_121 = arith.constant dense<0.000000e+00> : vector<140x128xf32>
    %204 = tpu.matmul %201, %203, %cst_121 {dimension_numbers = #tpu.dot_dimension_numbers<[1], [0], [0], [1], [0, 0, 1, 1], [], []>} : vector<140x128xbf16>, vector<128x128xbf16>, vector<140x128xf32> -> vector<140x128xf32>
    %205 = arith.addf %200, %204 : vector<140x128xf32>
    %206 = vector.extract_strided_slice %194 {offsets = [2, 0], sizes = [140, 128], strides = [1, 1]} : vector<144x128xbf16> to vector<140x128xbf16>
    %c2_122 = arith.constant 2 : index
    %c0_123 = arith.constant 0 : index
    %c0_124 = arith.constant 0 : index
    %207 = vector.load %arg15[%c2_122, %c0_123, %c0_124] : memref<5x128x128xbf16, #tpu.memory_space<vmem>>, vector<1x128x128xbf16>
    %208 = vector.shape_cast %207 : vector<1x128x128xbf16> to vector<128x128xbf16>
    %cst_125 = arith.constant dense<0.000000e+00> : vector<140x128xf32>
    %209 = tpu.matmul %206, %208, %cst_125 {dimension_numbers = #tpu.dot_dimension_numbers<[1], [0], [0], [1], [0, 0, 1, 1], [], []>} : vector<140x128xbf16>, vector<128x128xbf16>, vector<140x128xf32> -> vector<140x128xf32>
    %210 = arith.addf %205, %209 : vector<140x128xf32>
    %211 = vector.extract_strided_slice %194 {offsets = [3, 0], sizes = [140, 128], strides = [1, 1]} : vector<144x128xbf16> to vector<140x128xbf16>
    %c3_126 = arith.constant 3 : index
    %c0_127 = arith.constant 0 : index
    %c0_128 = arith.constant 0 : index
    %212 = vector.load %arg15[%c3_126, %c0_127, %c0_128] : memref<5x128x128xbf16, #tpu.memory_space<vmem>>, vector<1x128x128xbf16>
    %213 = vector.shape_cast %212 : vector<1x128x128xbf16> to vector<128x128xbf16>
    %cst_129 = arith.constant dense<0.000000e+00> : vector<140x128xf32>
    %214 = tpu.matmul %211, %213, %cst_129 {dimension_numbers = #tpu.dot_dimension_numbers<[1], [0], [0], [1], [0, 0, 1, 1], [], []>} : vector<140x128xbf16>, vector<128x128xbf16>, vector<140x128xf32> -> vector<140x128xf32>
    %215 = arith.addf %210, %214 : vector<140x128xf32>
    %216 = vector.extract_strided_slice %194 {offsets = [4, 0], sizes = [140, 128], strides = [1, 1]} : vector<144x128xbf16> to vector<140x128xbf16>
    %c4_130 = arith.constant 4 : index
    %c0_131 = arith.constant 0 : index
    %c0_132 = arith.constant 0 : index
    %217 = vector.load %arg15[%c4_130, %c0_131, %c0_132] : memref<5x128x128xbf16, #tpu.memory_space<vmem>>, vector<1x128x128xbf16>
    %218 = vector.shape_cast %217 : vector<1x128x128xbf16> to vector<128x128xbf16>
    %cst_133 = arith.constant dense<0.000000e+00> : vector<140x128xf32>
    %219 = tpu.matmul %216, %218, %cst_133 {dimension_numbers = #tpu.dot_dimension_numbers<[1], [0], [0], [1], [0, 0, 1, 1], [], []>} : vector<140x128xbf16>, vector<128x128xbf16>, vector<140x128xf32> -> vector<140x128xf32>
    %220 = arith.addf %215, %219 : vector<140x128xf32>
    %c0_134 = arith.constant 0 : index
    %c0_135 = arith.constant 0 : index
    %221 = vector.load %arg16[%c0_134, %c0_135] : memref<1x128xf32, #tpu.memory_space<vmem>>, vector<1x128xf32>
    %222 = vector.broadcast %221 : vector<1x128xf32> to vector<140x128xf32>
    %223 = arith.mulf %220, %222 : vector<140x128xf32>
    %c0_136 = arith.constant 0 : index
    %c0_137 = arith.constant 0 : index
    %224 = vector.load %arg17[%c0_136, %c0_137] : memref<1x128xf32, #tpu.memory_space<vmem>>, vector<1x128xf32>
    %225 = vector.broadcast %224 : vector<1x128xf32> to vector<140x128xf32>
    %226 = arith.addf %223, %225 : vector<140x128xf32>
    %227 = vector.extract_strided_slice %226 {offsets = [6, 0], sizes = [128, 128], strides = [1, 1]} : vector<140x128xf32> to vector<128x128xf32>
    %228 = arith.addf %227, %27 : vector<128x128xf32>
    %c0_138 = arith.constant 0 : index
    %c0_139 = arith.constant 0 : index
    %c0_140 = arith.constant 0 : index
    %229 = vector.load %arg18[%c0_138, %c0_139, %c0_140] : memref<1x128x128xf32, #tpu.memory_space<vmem>>, vector<1x128x128xf32>
    %230 = vector.shape_cast %229 : vector<1x128x128xf32> to vector<128x128xf32>
    %231 = vector.shape_cast %228 : vector<128x128xf32> to vector<1x128x128xf32>
    tpu.vector_store %arg18[%c0_138, %c0_139, %c0_140], %231 {strides = array<i32>} : memref<1x128x128xf32, #tpu.memory_space<vmem>>, vector<1x128x128xf32>,
    return
  }
  func.func @transform_1(%arg0: i32, %arg1: i32) -> (i32, i32, i32) {
    %c0_i32 = arith.constant 0 : i32
    %c0_i32_0 = arith.constant 0 : i32
    %c0_i32_1 = arith.constant 0 : i32
    %c0_i32_2 = arith.constant 0 : i32
    return %c0_i32, %c0_i32_0, %c0_i32_1 : i32, i32, i32
  }
  func.func @transform_2(%arg0: i32, %arg1: i32) -> (i32, i32) {
    %c0_i32 = arith.constant 0 : i32
    %c0_i32_0 = arith.constant 0 : i32
    %c0_i32_1 = arith.constant 0 : i32
    return %c0_i32, %c0_i32_0 : i32, i32
  }
  func.func @transform_3(%arg0: i32, %arg1: i32) -> (i32, i32) {
    %c0_i32 = arith.constant 0 : i32
    %c0_i32_0 = arith.constant 0 : i32
    %c0_i32_1 = arith.constant 0 : i32
    return %c0_i32, %c0_i32_0 : i32, i32
  }
  func.func @transform_4(%arg0: i32, %arg1: i32) -> (i32, i32, i32) {
    %c0_i32 = arith.constant 0 : i32
    %c0_i32_0 = arith.constant 0 : i32
    %c0_i32_1 = arith.constant 0 : i32
    %c0_i32_2 = arith.constant 0 : i32
    return %c0_i32, %c0_i32_0, %c0_i32_1 : i32, i32, i32
  }
  func.func @transform_5(%arg0: i32, %arg1: i32) -> (i32, i32) {
    %c0_i32 = arith.constant 0 : i32
    %c0_i32_0 = arith.constant 0 : i32
    %c0_i32_1 = arith.constant 0 : i32
    return %c0_i32, %c0_i32_0 : i32, i32
  }
  func.func @transform_6(%arg0: i32, %arg1: i32) -> (i32, i32) {
    %c0_i32 = arith.constant 0 : i32
    %c0_i32_0 = arith.constant 0 : i32
    %c0_i32_1 = arith.constant 0 : i32
    return %c0_i32, %c0_i32_0 : i32, i32
  }
  func.func @transform_7(%arg0: i32, %arg1: i32) -> (i32, i32, i32) {
    %c0_i32 = arith.constant 0 : i32
    %c0_i32_0 = arith.constant 0 : i32
    %c0_i32_1 = arith.constant 0 : i32
    %c0_i32_2 = arith.constant 0 : i32
    return %c0_i32, %c0_i32_0, %c0_i32_1 : i32, i32, i32
  }
  func.func @transform_8(%arg0: i32, %arg1: i32) -> (i32, i32) {
    %c0_i32 = arith.constant 0 : i32
    %c0_i32_0 = arith.constant 0 : i32
    %c0_i32_1 = arith.constant 0 : i32
    return %c0_i32, %c0_i32_0 : i32, i32
  }
  func.func @transform_9(%arg0: i32, %arg1: i32) -> (i32, i32) {
    %c0_i32 = arith.constant 0 : i32
    %c0_i32_0 = arith.constant 0 : i32
    %c0_i32_1 = arith.constant 0 : i32
    return %c0_i32, %c0_i32_0 : i32, i32
  }
  func.func @transform_10(%arg0: i32, %arg1: i32) -> (i32, i32, i32) {
    %c0_i32 = arith.constant 0 : i32
    %c0_i32_0 = arith.constant 0 : i32
    %c0_i32_1 = arith.constant 0 : i32
    %c0_i32_2 = arith.constant 0 : i32
    return %c0_i32, %c0_i32_0, %c0_i32_1 : i32, i32, i32
  }
  func.func @transform_11(%arg0: i32, %arg1: i32) -> (i32, i32) {
    %c0_i32 = arith.constant 0 : i32
    %c0_i32_0 = arith.constant 0 : i32
    %c0_i32_1 = arith.constant 0 : i32
    return %c0_i32, %c0_i32_0 : i32, i32
  }
  func.func @transform_12(%arg0: i32, %arg1: i32) -> (i32, i32) {
    %c0_i32 = arith.constant 0 : i32
    %c0_i32_0 = arith.constant 0 : i32
    %c0_i32_1 = arith.constant 0 : i32
    return %c0_i32, %c0_i32_0 : i32, i32
  }
  func.func @transform_13(%arg0: i32, %arg1: i32) -> (i32, i32, i32) {
    %c0_i32 = arith.constant 0 : i32
    %c0_i32_0 = arith.constant 0 : i32
    %c0_i32_1 = arith.constant 0 : i32
    %c0_i32_2 = arith.constant 0 : i32
    return %c0_i32, %c0_i32_0, %c0_i32_1 : i32, i32, i32
  }
  func.func @transform_14(%arg0: i32, %arg1: i32) -> (i32, i32) {
    %c0_i32 = arith.constant 0 : i32
    %c0_i32_0 = arith.constant 0 : i32
    %c0_i32_1 = arith.constant 0 : i32
    return %c0_i32, %c0_i32_0 : i32, i32
  }
  func.func @transform_15(%arg0: i32, %arg1: i32) -> (i32, i32) {
    %c0_i32 = arith.constant 0 : i32
    %c0_i32_0 = arith.constant 0 : i32
    %c0_i32_1 = arith.constant 0 : i32
    return %c0_i32, %c0_i32_0 : i32, i32
  }
  func.func @transform_16(%arg0: i32, %arg1: i32) -> (i32, i32, i32) {
    %c0_i32 = arith.constant 0 : i32
    %c0_i32_0 = arith.constant 0 : i32
    return %arg0, %arg1, %c0_i32 : i32, i32, i32
  }
}

</mosaic_0001>

<llo_original>
// kernel: tpu_custom_call.1
$region0: #{tpu_custom_call.1}
  #allocation0 [shape = 'u32[]', space=smem, size = 0x4, offset = 0x4, fixed_abs, tag = 'smem constant byte address 0x4 - core index']
  #allocation1 [shape = 'u32[72,128]{1,0:T(1,128)}', space=vmem, size = 0x9000, scoped, tag = 'internal scratch']
  #allocation2 [shape = 'bf16[2,160,128]{2,1,0:T(8,128)(2,1)}', space=vmem, size = 0x14000, scoped, tag = 'scratch operand']
  #allocation3 [shape = 's32[2]{0}', space=sflag, size = 0x8, scoped, tag = 'scratch operand']
  #allocation14 [shape = 's32[]', space=sflag, size = 0x4, offset = 0, fixed_abs, tag = 'sflag constant byte address 0x0 - dummy sync flag']
  #allocation15 [shape = 's32[]', space=sflag, size = 0x4, offset = 0, fixed_abs, tag = 'sflag constant byte address 0x0 - dummy sync flag']
  #allocation16 [shape = 'u32[]', space=smem, size = 0x4, offset = 0x44, fixed_abs, tag = 'smem constant byte address 0x44 - assertion arg 0']
  #allocation17 [shape = 'u32[]', space=smem, size = 0x4, offset = 0x48, fixed_abs, tag = 'smem constant byte address 0x48 - assertion arg 1']
  #allocation18 [shape = 's32[]', space=sflag, size = 0x4, offset = 0, fixed_abs, tag = 'sflag constant byte address 0x0 - dummy sync flag']
  #allocation19 [shape = 's32[]', space=sflag, size = 0x4, offset = 0, fixed_abs, tag = 'sflag constant byte address 0x0 - dummy sync flag']
  %s0 = inlined_call_operand.hbm [shape: bf16[2,288,128], index: 0, kind: input, shape index: {}]
  %s1 = inlined_call_operand.hbm [shape: bf16[5,128,128], index: 1, kind: input, shape index: {}]
  %s2 = inlined_call_operand.vmem [shape: f32[1,128], index: 2, kind: input, shape index: {}]
  %s3 = inlined_call_operand.vmem [shape: f32[1,128], index: 3, kind: input, shape index: {}]
  %s4 = inlined_call_operand.hbm [shape: bf16[5,128,128], index: 4, kind: input, shape index: {}]
  %s5 = inlined_call_operand.vmem [shape: f32[1,128], index: 5, kind: input, shape index: {}]
  %s6 = inlined_call_operand.vmem [shape: f32[1,128], index: 6, kind: input, shape index: {}]
  %s7 = inlined_call_operand.hbm [shape: bf16[5,128,128], index: 7, kind: input, shape index: {}]
  %s8 = inlined_call_operand.vmem [shape: f32[1,128], index: 8, kind: input, shape index: {}]
  %s9 = inlined_call_operand.vmem [shape: f32[1,128], index: 9, kind: input, shape index: {}]
  %s10 = inlined_call_operand.hbm [shape: bf16[5,128,128], index: 10, kind: input, shape index: {}]
  %s11 = inlined_call_operand.vmem [shape: f32[1,128], index: 11, kind: input, shape index: {}]
  %s12 = inlined_call_operand.vmem [shape: f32[1,128], index: 12, kind: input, shape index: {}]
  %s13 = inlined_call_operand.hbm [shape: bf16[5,128,128], index: 13, kind: input, shape index: {}]
  %s14 = inlined_call_operand.vmem [shape: f32[1,128], index: 14, kind: input, shape index: {}]
  %s15 = inlined_call_operand.vmem [shape: f32[1,128], index: 15, kind: input, shape index: {}]
  %s16 = inlined_call_operand.hbm [shape: f32[2,256,128], index: 16, kind: output, shape index: {}]
  %s17 = sld [smem:[#allocation0]]
  $region129: #{tpu_custom_call.1} parent=0
    _
  %s19 = ssub.s32 1, %s17
  %s20 = scalar_select 0, %s19, %s17
  $region1: #{tpu_custom_call.1} parent=0
    #allocation4 [shape = 'u8[163840]{0}', space=vmem, size = 0x28000, scoped, tag = 'input window, operand 1, single buffered']
    #allocation5 [shape = 's32[2]{0}', space=sflag, size = 0x8, scoped, tag = 'scoped memory for tpu_custom_call.1']
    #allocation6 [shape = 's32[2]{0}', space=sflag, size = 0x8, scoped, tag = 'scoped memory for tpu_custom_call.1']
    #allocation7 [shape = 'u8[163840]{0}', space=vmem, size = 0x28000, scoped, tag = 'input window, operand 4, single buffered']
    #allocation8 [shape = 's32[1]{0}', space=sflag, size = 0x4, scoped, tag = 'scoped memory for tpu_custom_call.1']
    #allocation9 [shape = 'u8[163840]{0}', space=vmem, size = 0x28000, scoped, tag = 'input window, operand 7, single buffered']
    #allocation10 [shape = 'u8[163840]{0}', space=vmem, size = 0x28000, scoped, tag = 'input window, operand 10, single buffered']
    #allocation11 [shape = 's32[1]{0}', space=sflag, size = 0x4, scoped, tag = 'scoped memory for tpu_custom_call.1']
    #allocation12 [shape = 'u8[163840]{0}', space=vmem, size = 0x28000, scoped, tag = 'input window, operand 13, single buffered']
    #allocation13 [shape = 'u8[131072]{0}', space=vmem, size = 0x20000, scoped, tag = 'output window, operand 0']
    %21 = vsyncpa [#allocation5], 0
    %22 = vsyncpa [#allocation8], 0
    %23 = vsyncpa [#allocation11], 0
    %24 = vsyncpa [#allocation6], 0
    %s25 = scalar_lea.sflag [#allocation6], 1
    %26 = vsyncpa %s25, 0
    loop: start=0, step=1, limit=6
    $region2: #{tpu_custom_call.1} parent=1 // loop_pre_header
      _
    $region3: #{tpu_custom_call.1} parent=1 // loop_header
      %s28 = sphi 0, %s32
      %p29 = scmp.ge.s32.totalorder %s28, 6
      %s35 = sphi 0, %s47
      %s36 = sphi 0, %s43
      %s37 = sphi 0, %s35
      %s38 = sphi 0, %s36
      %s39 = sphi 0, %s37
      %s40 = sphi 0, %s38
      %s48 = sphi 0, %s48
      %s50 = sphi 0, %s48
      %s51 = sphi 0, %s50
      %s65 = sphi 0, %s51
      %s69 = sphi 0, %s69
      %s71 = sphi 0, %s69
      %s72 = sphi 0, %s71
      %s86 = sphi 0, %s72
      %s90 = sphi 0, %s90
      %s92 = sphi 0, %s90
      %s93 = sphi 0, %s92
      %s107 = sphi 0, %s93
      %s111 = sphi 0, %s111
      %s113 = sphi 0, %s111
      %s114 = sphi 0, %s113
      %s128 = sphi 0, %s114
      %s132 = sphi 0, %s132
      %s134 = sphi 0, %s132
      %s135 = sphi 0, %s134
      %s149 = sphi 0, %s135
      %s153 = sphi 0, %s153
      %s155 = sphi 0, %s153
      %s156 = sphi 0, %s155
      %s170 = sphi 0, %s156
      %s174 = sphi 0, %s174
      %s176 = sphi 0, %s174
      %s177 = sphi 0, %s176
      %s191 = sphi 0, %s177
      %s195 = sphi 0, %s195
      %s197 = sphi 0, %s195
      %s198 = sphi 0, %s197
      %s212 = sphi 0, %s198
      %s216 = sphi 0, %s216
      %s218 = sphi 0, %s216
      %s219 = sphi 0, %s218
      %s233 = sphi 0, %s219
      %s237 = sphi 0, %s237
      %s239 = sphi 0, %s237
      %s240 = sphi 0, %s239
      %s254 = sphi 0, %s240
      %s258 = sphi 0, %s258
      %s260 = sphi 0, %s258
      %s261 = sphi 0, %s260
      %s275 = sphi 0, %s261
      %s279 = sphi 0, %s279
      %s281 = sphi 0, %s279
      %s282 = sphi 0, %s281
      %s296 = sphi 0, %s282
      %s300 = sphi 0, %s300
      %s302 = sphi 0, %s300
      %s303 = sphi 0, %s302
      %s317 = sphi 0, %s303
      %s321 = sphi 0, %s321
      %s323 = sphi 0, %s321
      %s324 = sphi 0, %s323
      %s338 = sphi 0, %s324
      %s342 = sphi 0, %s342
      %s344 = sphi 0, %s342
      %s345 = sphi 0, %s344
      %s359 = sphi 0, %s345
      %s367 = sphi 0, %s369
      %s370 = sphi 0, %s367
      %s371 = sphi 0, %s370
      %s387 = sphi 0, %s371
    $region4: #{tpu_custom_call.1} parent=1 // loop_header_branch
      %31 = sbr.rel (%p29) target = $region8
    $region5: #{tpu_custom_call.1} parent=1 // loop_body
      %s33 = ssub.s32 %s28, 1
      %s34 = ssub.s32 %s28, 2
      %s41 = sadd.s32 1, %s36
      %p42 = scmp.ge.s32.totalorder %s41, 2
      %s43 = scalar_select %p42, 0, %s41
      %s44 = sadd.s32 1, %s35
      %s45 = scalar_select %p42, %s44, %s35
      %p46 = scmp.ge.s32.totalorder %s45, 2
      %s47 = scalar_select %p46, 0, %s45
      %s49 = sadd.s32 %s48, 1
      %p52 = scmp.eq.s32.totalorder %s28, 3
      %p53 = scmp.ne.s32.totalorder %s48, %s50
      %p54 = scmp.eq.s32.totalorder %s28, 0
      %p55 = por %p53, %p54
      %p56 = scmp.ne.s32.totalorder %s48, %s50
      %p57 = scmp.eq.s32.totalorder %s33, 3
      %p58 = por %p56, %p57
      %p59 = scmp.ne.s32.totalorder %s50, %s51
      %p60 = scmp.eq.s32.totalorder %s33, 0
      %p61 = por %p59, %p60
      %p62 = scmp.ne.s32.totalorder %s50, %s51
      %p63 = scmp.eq.s32.totalorder %s34, 3
      %p64 = por %p62, %p63
      %p66 = scmp.ne.s32.totalorder %s51, %s65
      %p67 = scmp.eq.s32.totalorder %s34, 0
      %p68 = por %p66, %p67
      %s70 = sadd.s32 %s69, 1
      %p73 = scmp.eq.s32.totalorder %s28, 3
      %p74 = scmp.ne.s32.totalorder %s69, %s71
      %p75 = scmp.eq.s32.totalorder %s28, 0
      %p76 = por %p74, %p75
      %p77 = scmp.ne.s32.totalorder %s69, %s71
      %p78 = scmp.eq.s32.totalorder %s33, 3
      %p79 = por %p77, %p78
      %p80 = scmp.ne.s32.totalorder %s71, %s72
      %p81 = scmp.eq.s32.totalorder %s33, 0
      %p82 = por %p80, %p81
      %p83 = scmp.ne.s32.totalorder %s71, %s72
      %p84 = scmp.eq.s32.totalorder %s34, 3
      %p85 = por %p83, %p84
      %p87 = scmp.ne.s32.totalorder %s72, %s86
      %p88 = scmp.eq.s32.totalorder %s34, 0
      %p89 = por %p87, %p88
      %s91 = sadd.s32 %s90, 1
      %p94 = scmp.eq.s32.totalorder %s28, 3
      %p95 = scmp.ne.s32.totalorder %s90, %s92
      %p96 = scmp.eq.s32.totalorder %s28, 0
      %p97 = por %p95, %p96
      %p98 = scmp.ne.s32.totalorder %s90, %s92
      %p99 = scmp.eq.s32.totalorder %s33, 3
      %p100 = por %p98, %p99
      %p101 = scmp.ne.s32.totalorder %s92, %s93
      %p102 = scmp.eq.s32.totalorder %s33, 0
      %p103 = por %p101, %p102
      %p104 = scmp.ne.s32.totalorder %s92, %s93
      %p105 = scmp.eq.s32.totalorder %s34, 3
      %p106 = por %p104, %p105
      %p108 = scmp.ne.s32.totalorder %s93, %s107
      %p109 = scmp.eq.s32.totalorder %s34, 0
      %p110 = por %p108, %p109
      %s112 = sadd.s32 %s111, 1
      %p115 = scmp.eq.s32.totalorder %s28, 3
      %p116 = scmp.ne.s32.totalorder %s111, %s113
      %p117 = scmp.eq.s32.totalorder %s28, 0
      %p118 = por %p116, %p117
      %p119 = scmp.ne.s32.totalorder %s111, %s113
      %p120 = scmp.eq.s32.totalorder %s33, 3
      %p121 = por %p119, %p120
      %p122 = scmp.ne.s32.totalorder %s113, %s114
      %p123 = scmp.eq.s32.totalorder %s33, 0
      %p124 = por %p122, %p123
      %p125 = scmp.ne.s32.totalorder %s113, %s114
      %p126 = scmp.eq.s32.totalorder %s34, 3
      %p127 = por %p125, %p126
      %p129 = scmp.ne.s32.totalorder %s114, %s128
      %p130 = scmp.eq.s32.totalorder %s34, 0
      %p131 = por %p129, %p130
      %s133 = sadd.s32 %s132, 1
      %p136 = scmp.eq.s32.totalorder %s28, 3
      %p137 = scmp.ne.s32.totalorder %s132, %s134
      %p138 = scmp.eq.s32.totalorder %s28, 0
      %p139 = por %p137, %p138
      %p140 = scmp.ne.s32.totalorder %s132, %s134
      %p141 = scmp.eq.s32.totalorder %s33, 3
      %p142 = por %p140, %p141
      %p143 = scmp.ne.s32.totalorder %s134, %s135
      %p144 = scmp.eq.s32.totalorder %s33, 0
      %p145 = por %p143, %p144
      %p146 = scmp.ne.s32.totalorder %s134, %s135
      %p147 = scmp.eq.s32.totalorder %s34, 3
      %p148 = por %p146, %p147
      %p150 = scmp.ne.s32.totalorder %s135, %s149
      %p151 = scmp.eq.s32.totalorder %s34, 0
      %p152 = por %p150, %p151
      %s154 = sadd.s32 %s153, 1
      %p157 = scmp.eq.s32.totalorder %s28, 3
      %p158 = scmp.ne.s32.totalorder %s153, %s155
      %p159 = scmp.eq.s32.totalorder %s28, 0
      %p160 = por %p158, %p159
      %p161 = scmp.ne.s32.totalorder %s153, %s155
      %p162 = scmp.eq.s32.totalorder %s33, 3
      %p163 = por %p161, %p162
      %p164 = scmp.ne.s32.totalorder %s155, %s156
      %p165 = scmp.eq.s32.totalorder %s33, 0
      %p166 = por %p164, %p165
      %p167 = scmp.ne.s32.totalorder %s155, %s156
      %p168 = scmp.eq.s32.totalorder %s34, 3
      %p169 = por %p167, %p168
      %p171 = scmp.ne.s32.totalorder %s156, %s170
      %p172 = scmp.eq.s32.totalorder %s34, 0
      %p173 = por %p171, %p172
      %s175 = sadd.s32 %s174, 1
      %p178 = scmp.eq.s32.totalorder %s28, 3
      %p179 = scmp.ne.s32.totalorder %s174, %s176
      %p180 = scmp.eq.s32.totalorder %s28, 0
      %p181 = por %p179, %p180
      %p182 = scmp.ne.s32.totalorder %s174, %s176
      %p183 = scmp.eq.s32.totalorder %s33, 3
      %p184 = por %p182, %p183
      %p185 = scmp.ne.s32.totalorder %s176, %s177
      %p186 = scmp.eq.s32.totalorder %s33, 0
      %p187 = por %p185, %p186
      %p188 = scmp.ne.s32.totalorder %s176, %s177
      %p189 = scmp.eq.s32.totalorder %s34, 3
      %p190 = por %p188, %p189
      %p192 = scmp.ne.s32.totalorder %s177, %s191
      %p193 = scmp.eq.s32.totalorder %s34, 0
      %p194 = por %p192, %p193
      %s196 = sadd.s32 %s195, 1
      %p199 = scmp.eq.s32.totalorder %s28, 3
      %p200 = scmp.ne.s32.totalorder %s195, %s197
      %p201 = scmp.eq.s32.totalorder %s28, 0
      %p202 = por %p200, %p201
      %p203 = scmp.ne.s32.totalorder %s195, %s197
      %p204 = scmp.eq.s32.totalorder %s33, 3
      %p205 = por %p203, %p204
      %p206 = scmp.ne.s32.totalorder %s197, %s198
      %p207 = scmp.eq.s32.totalorder %s33, 0
      %p208 = por %p206, %p207
      %p209 = scmp.ne.s32.totalorder %s197, %s198
      %p210 = scmp.eq.s32.totalorder %s34, 3
      %p211 = por %p209, %p210
      %p213 = scmp.ne.s32.totalorder %s198, %s212
      %p214 = scmp.eq.s32.totalorder %s34, 0
      %p215 = por %p213, %p214
      %s217 = sadd.s32 %s216, 1
      %p220 = scmp.eq.s32.totalorder %s28, 3
      %p221 = scmp.ne.s32.totalorder %s216, %s218
      %p222 = scmp.eq.s32.totalorder %s28, 0
      %p223 = por %p221, %p222
      %p224 = scmp.ne.s32.totalorder %s216, %s218
      %p225 = scmp.eq.s32.totalorder %s33, 3
      %p226 = por %p224, %p225
      %p227 = scmp.ne.s32.totalorder %s218, %s219
      %p228 = scmp.eq.s32.totalorder %s33, 0
      %p229 = por %p227, %p228
      %p230 = scmp.ne.s32.totalorder %s218, %s219
      %p231 = scmp.eq.s32.totalorder %s34, 3
      %p232 = por %p230, %p231
      %p234 = scmp.ne.s32.totalorder %s219, %s233
      %p235 = scmp.eq.s32.totalorder %s34, 0
      %p236 = por %p234, %p235
      %s238 = sadd.s32 %s237, 1
      %p241 = scmp.eq.s32.totalorder %s28, 3
      %p242 = scmp.ne.s32.totalorder %s237, %s239
      %p243 = scmp.eq.s32.totalorder %s28, 0
      %p244 = por %p242, %p243
      %p245 = scmp.ne.s32.totalorder %s237, %s239
      %p246 = scmp.eq.s32.totalorder %s33, 3
      %p247 = por %p245, %p246
      %p248 = scmp.ne.s32.totalorder %s239, %s240
      %p249 = scmp.eq.s32.totalorder %s33, 0
      %p250 = por %p248, %p249
      %p251 = scmp.ne.s32.totalorder %s239, %s240
      %p252 = scmp.eq.s32.totalorder %s34, 3
      %p253 = por %p251, %p252
      %p255 = scmp.ne.s32.totalorder %s240, %s254
      %p256 = scmp.eq.s32.totalorder %s34, 0
      %p257 = por %p255, %p256
      %s259 = sadd.s32 %s258, 1
      %p262 = scmp.eq.s32.totalorder %s28, 3
      %p263 = scmp.ne.s32.totalorder %s258, %s260
      %p264 = scmp.eq.s32.totalorder %s28, 0
      %p265 = por %p263, %p264
      %p266 = scmp.ne.s32.totalorder %s258, %s260
      %p267 = scmp.eq.s32.totalorder %s33, 3
      %p268 = por %p266, %p267
      %p269 = scmp.ne.s32.totalorder %s260, %s261
      %p270 = scmp.eq.s32.totalorder %s33, 0
      %p271 = por %p269, %p270
      %p272 = scmp.ne.s32.totalorder %s260, %s261
      %p273 = scmp.eq.s32.totalorder %s34, 3
      %p274 = por %p272, %p273
      %p276 = scmp.ne.s32.totalorder %s261, %s275
      %p277 = scmp.eq.s32.totalorder %s34, 0
      %p278 = por %p276, %p277
      %s280 = sadd.s32 %s279, 1
      %p283 = scmp.eq.s32.totalorder %s28, 3
      %p284 = scmp.ne.s32.totalorder %s279, %s281
      %p285 = scmp.eq.s32.totalorder %s28, 0
      %p286 = por %p284, %p285
      %p287 = scmp.ne.s32.totalorder %s279, %s281
      %p288 = scmp.eq.s32.totalorder %s33, 3
      %p289 = por %p287, %p288
      %p290 = scmp.ne.s32.totalorder %s281, %s282
      %p291 = scmp.eq.s32.totalorder %s33, 0
      %p292 = por %p290, %p291
      %p293 = scmp.ne.s32.totalorder %s281, %s282
      %p294 = scmp.eq.s32.totalorder %s34, 3
      %p295 = por %p293, %p294
      %p297 = scmp.ne.s32.totalorder %s282, %s296
      %p298 = scmp.eq.s32.totalorder %s34, 0
      %p299 = por %p297, %p298
      %s301 = sadd.s32 %s300, 1
      %p304 = scmp.eq.s32.totalorder %s28, 3
      %p305 = scmp.ne.s32.totalorder %s300, %s302
      %p306 = scmp.eq.s32.totalorder %s28, 0
      %p307 = por %p305, %p306
      %p308 = scmp.ne.s32.totalorder %s300, %s302
      %p309 = scmp.eq.s32.totalorder %s33, 3
      %p310 = por %p308, %p309
      %p311 = scmp.ne.s32.totalorder %s302, %s303
      %p312 = scmp.eq.s32.totalorder %s33, 0
      %p313 = por %p311, %p312
      %p314 = scmp.ne.s32.totalorder %s302, %s303
      %p315 = scmp.eq.s32.totalorder %s34, 3
      %p316 = por %p314, %p315
      %p318 = scmp.ne.s32.totalorder %s303, %s317
      %p319 = scmp.eq.s32.totalorder %s34, 0
      %p320 = por %p318, %p319
      %s322 = sadd.s32 %s321, 1
      %p325 = scmp.eq.s32.totalorder %s28, 3
      %p326 = scmp.ne.s32.totalorder %s321, %s323
      %p327 = scmp.eq.s32.totalorder %s28, 0
      %p328 = por %p326, %p327
      %p329 = scmp.ne.s32.totalorder %s321, %s323
      %p330 = scmp.eq.s32.totalorder %s33, 3
      %p331 = por %p329, %p330
      %p332 = scmp.ne.s32.totalorder %s323, %s324
      %p333 = scmp.eq.s32.totalorder %s33, 0
      %p334 = por %p332, %p333
      %p335 = scmp.ne.s32.totalorder %s323, %s324
      %p336 = scmp.eq.s32.totalorder %s34, 3
      %p337 = por %p335, %p336
      %p339 = scmp.ne.s32.totalorder %s324, %s338
      %p340 = scmp.eq.s32.totalorder %s34, 0
      %p341 = por %p339, %p340
      %s343 = sadd.s32 %s342, 1
      %p346 = scmp.eq.s32.totalorder %s28, 3
      %p347 = scmp.ne.s32.totalorder %s342, %s344
      %p348 = scmp.eq.s32.totalorder %s28, 0
      %p349 = por %p347, %p348
      %p350 = scmp.ne.s32.totalorder %s342, %s344
      %p351 = scmp.eq.s32.totalorder %s33, 3
      %p352 = por %p350, %p351
      %p353 = scmp.ne.s32.totalorder %s344, %s345
      %p354 = scmp.eq.s32.totalorder %s33, 0
      %p355 = por %p353, %p354
      %p356 = scmp.ne.s32.totalorder %s344, %s345
      %p357 = scmp.eq.s32.totalorder %s34, 3
      %p358 = por %p356, %p357
      %p360 = scmp.ne.s32.totalorder %s345, %s359
      %p361 = scmp.eq.s32.totalorder %s34, 0
      %p362 = por %p360, %p361
      %s363 = ssub.s32 %s35, %s47
      %s364 = ssub.s32 %s36, %s43
      %s365 = sor.u32 %s363, %s364
      %p366 = scmp.eq.s32.totalorder %s365, 0
      %s368 = sadd.s32 %s367, 1
      %s369 = scalar_select %p366, %s367, %s368
      %p372 = pneg %p366
      %p373 = scmp.eq.s32.totalorder %s28, 3
      %p374 = por %p372, %p373
      %p375 = scmp.ne.s32.totalorder %s367, %s370
      %p376 = scmp.eq.s32.totalorder %s28, 0
      %p377 = por %p375, %p376
      %p378 = scmp.ne.s32.totalorder %s367, %s370
      %p379 = scmp.eq.s32.totalorder %s33, 3
      %p380 = por %p378, %p379
      %p381 = scmp.ne.s32.totalorder %s370, %s371
      %p382 = scmp.eq.s32.totalorder %s33, 0
      %p383 = por %p381, %p382
      %p384 = scmp.ne.s32.totalorder %s370, %s371
      %p385 = scmp.eq.s32.totalorder %s34, 3
      %p386 = por %p384, %p385
      %p388 = scmp.ne.s32.totalorder %s371, %s387
      %p389 = scmp.eq.s32.totalorder %s34, 0
      %p390 = por %p388, %p389
      %p391 = scmp.le.s32.totalorder 1, %s28
      %p392 = scmp.lt.s32.totalorder %s28, 5
      %p393 = pnand %p391, %p392
      %p394 = pneg %p393
      // Predicated region
      $region9: #{tpu_custom_call.1} parent=5 // pred_check
        _
      $region10: #{tpu_custom_call.1} parent=5 // pred_check_branch
        %396 = sbr.rel (%p393) target = $region12
      $region11: #{tpu_custom_call.1} parent=5 // pred_region
        %s397 = ssub.s32 %s28, 1
        // Predicated region
        $region13: #{tpu_custom_call.1} parent=11 // pred_check
          %p398 = pneg %p61
        $region14: #{tpu_custom_call.1} parent=11 // pred_check_branch
          %400 = sbr.rel (%p398) target = $region16
        $region15: #{tpu_custom_call.1} parent=11 // pred_region
          %402 = vsyncadd [#allocation5], 0
          %s403 = sshll.u32 %s1, 4
          %s404 = int_to_ptr.hbm [resolvable:$true] %s403
          %s405 = sshll.u32 [#allocation4], 4
          %s406 = int_to_ptr.vmem [resolvable:$true] %s405
          %411 = dma.hbm_to_vmem [thread:$0]  %s404, 5120, %s406, [#allocation5], 64, 64, 4
        $region16: #{tpu_custom_call.1} parent=11 // pred_fallthru
          _
        // Predicated region
        $region17: #{tpu_custom_call.1} parent=11 // pred_check
          %p412 = pneg %p82
        $region18: #{tpu_custom_call.1} parent=11 // pred_check_branch
          %414 = sbr.rel (%p412) target = $region20
        $region19: #{tpu_custom_call.1} parent=11 // pred_region
          _
        $region20: #{tpu_custom_call.1} parent=11 // pred_fallthru
          _
        // Predicated region
        $region21: #{tpu_custom_call.1} parent=11 // pred_check
          %p415 = pneg %p103
        $region22: #{tpu_custom_call.1} parent=11 // pred_check_branch
          %417 = sbr.rel (%p415) target = $region24
        $region23: #{tpu_custom_call.1} parent=11 // pred_region
          _
        $region24: #{tpu_custom_call.1} parent=11 // pred_fallthru
          _
        // Predicated region
        $region25: #{tpu_custom_call.1} parent=11 // pred_check
          %p418 = pneg %p124
        $region26: #{tpu_custom_call.1} parent=11 // pred_check_branch
          %420 = sbr.rel (%p418) target = $region28
        $region27: #{tpu_custom_call.1} parent=11 // pred_region
          %422 = vsyncadd [#allocation8], 0
          %s423 = sshll.u32 %s4, 4
          %s424 = int_to_ptr.hbm [resolvable:$true] %s423
          %s425 = sshll.u32 [#allocation7], 4
          %s426 = int_to_ptr.vmem [resolvable:$true] %s425
          %431 = dma.hbm_to_vmem [thread:$0]  %s424, 5120, %s426, [#allocation8], 64, 64, 4
        $region28: #{tpu_custom_call.1} parent=11 // pred_fallthru
          _
        // Predicated region
        $region29: #{tpu_custom_call.1} parent=11 // pred_check
          %p432 = pneg %p145
        $region30: #{tpu_custom_call.1} parent=11 // pred_check_branch
          %434 = sbr.rel (%p432) target = $region32
        $region31: #{tpu_custom_call.1} parent=11 // pred_region
          _
        $region32: #{tpu_custom_call.1} parent=11 // pred_fallthru
          _
        // Predicated region
        $region33: #{tpu_custom_call.1} parent=11 // pred_check
          %p435 = pneg %p166
        $region34: #{tpu_custom_call.1} parent=11 // pred_check_branch
          %437 = sbr.rel (%p435) target = $region36
        $region35: #{tpu_custom_call.1} parent=11 // pred_region
          _
        $region36: #{tpu_custom_call.1} parent=11 // pred_fallthru
          _
        // Predicated region
        $region37: #{tpu_custom_call.1} parent=11 // pred_check
          %p438 = pneg %p187
        $region38: #{tpu_custom_call.1} parent=11 // pred_check_branch
          %440 = sbr.rel (%p438) target = $region40
        $region39: #{tpu_custom_call.1} parent=11 // pred_region
          %442 = vsyncadd [#allocation8], 0
          %s443 = sshll.u32 %s7, 4
          %s444 = int_to_ptr.hbm [resolvable:$true] %s443
          %s445 = sshll.u32 [#allocation9], 4
          %s446 = int_to_ptr.vmem [resolvable:$true] %s445
          %451 = dma.hbm_to_vmem [thread:$0]  %s444, 5120, %s446, [#allocation8], 64, 64, 4
        $region40: #{tpu_custom_call.1} parent=11 // pred_fallthru
          _
        // Predicated region
        $region41: #{tpu_custom_call.1} parent=11 // pred_check
          %p452 = pneg %p208
        $region42: #{tpu_custom_call.1} parent=11 // pred_check_branch
          %454 = sbr.rel (%p452) target = $region44
        $region43: #{tpu_custom_call.1} parent=11 // pred_region
          _
        $region44: #{tpu_custom_call.1} parent=11 // pred_fallthru
          _
        // Predicated region
        $region45: #{tpu_custom_call.1} parent=11 // pred_check
          %p455 = pneg %p229
        $region46: #{tpu_custom_call.1} parent=11 // pred_check_branch
          %457 = sbr.rel (%p455) target = $region48
        $region47: #{tpu_custom_call.1} parent=11 // pred_region
          _
        $region48: #{tpu_custom_call.1} parent=11 // pred_fallthru
          _
        // Predicated region
        $region49: #{tpu_custom_call.1} parent=11 // pred_check
          %p458 = pneg %p250
        $region50: #{tpu_custom_call.1} parent=11 // pred_check_branch
          %460 = sbr.rel (%p458) target = $region52
        $region51: #{tpu_custom_call.1} parent=11 // pred_region
          %462 = vsyncadd [#allocation11], 0
          %s463 = sshll.u32 %s10, 4
          %s464 = int_to_ptr.hbm [resolvable:$true] %s463
          %s465 = sshll.u32 [#allocation10], 4
          %s466 = int_to_ptr.vmem [resolvable:$true] %s465
          %471 = dma.hbm_to_vmem [thread:$0]  %s464, 5120, %s466, [#allocation11], 64, 64, 4
        $region52: #{tpu_custom_call.1} parent=11 // pred_fallthru
          _
        // Predicated region
        $region53: #{tpu_custom_call.1} parent=11 // pred_check
          %p472 = pneg %p271
        $region54: #{tpu_custom_call.1} parent=11 // pred_check_branch
          %474 = sbr.rel (%p472) target = $region56
        $region55: #{tpu_custom_call.1} parent=11 // pred_region
          _
        $region56: #{tpu_custom_call.1} parent=11 // pred_fallthru
          _
        // Predicated region
        $region57: #{tpu_custom_call.1} parent=11 // pred_check
          %p475 = pneg %p292
        $region58: #{tpu_custom_call.1} parent=11 // pred_check_branch
          %477 = sbr.rel (%p475) target = $region60
        $region59: #{tpu_custom_call.1} parent=11 // pred_region
          _
        $region60: #{tpu_custom_call.1} parent=11 // pred_fallthru
          _
        // Predicated region
        $region61: #{tpu_custom_call.1} parent=11 // pred_check
          %p478 = pneg %p313
        $region62: #{tpu_custom_call.1} parent=11 // pred_check_branch
          %480 = sbr.rel (%p478) target = $region64
        $region63: #{tpu_custom_call.1} parent=11 // pred_region
          %482 = vsyncadd [#allocation11], 0
          %s483 = sshll.u32 %s13, 4
          %s484 = int_to_ptr.hbm [resolvable:$true] %s483
          %s485 = sshll.u32 [#allocation12], 4
          %s486 = int_to_ptr.vmem [resolvable:$true] %s485
          %491 = dma.hbm_to_vmem [thread:$0]  %s484, 5120, %s486, [#allocation11], 64, 64, 4
        $region64: #{tpu_custom_call.1} parent=11 // pred_fallthru
          _
        // Predicated region
        $region65: #{tpu_custom_call.1} parent=11 // pred_check
          %p492 = pneg %p334
        $region66: #{tpu_custom_call.1} parent=11 // pred_check_branch
          %494 = sbr.rel (%p492) target = $region68
        $region67: #{tpu_custom_call.1} parent=11 // pred_region
          _
        $region68: #{tpu_custom_call.1} parent=11 // pred_fallthru
          _
        // Predicated region
        $region69: #{tpu_custom_call.1} parent=11 // pred_check
          %p495 = pneg %p355
        $region70: #{tpu_custom_call.1} parent=11 // pred_check_branch
          %497 = sbr.rel (%p495) target = $region72
        $region71: #{tpu_custom_call.1} parent=11 // pred_region
          _
        $region72: #{tpu_custom_call.1} parent=11 // pred_fallthru
          _
      $region12: #{tpu_custom_call.1} parent=5 // pred_fallthru
        _
      %p498 = scmp.lt.s32.totalorder %s28, 4
      // Predicated region
      $region73: #{tpu_custom_call.1} parent=5 // pred_check
        %p499 = pneg %p498
      $region74: #{tpu_custom_call.1} parent=5 // pred_check_branch
        %501 = sbr.rel (%p499) target = $region76
      $region75: #{tpu_custom_call.1} parent=5 // pred_region
        _
      $region76: #{tpu_custom_call.1} parent=5 // pred_fallthru
        _
      %p502 = scmp.le.s32.totalorder 1, %s28
      %p503 = scmp.lt.s32.totalorder %s28, 5
      %p504 = pnand %p502, %p503
      %p505 = pneg %p504
      // Predicated region
      $region77: #{tpu_custom_call.1} parent=5 // pred_check
        _
      $region78: #{tpu_custom_call.1} parent=5 // pred_check_branch
        %507 = sbr.rel (%p504) target = $region80
      $region79: #{tpu_custom_call.1} parent=5 // pred_region
        %s508 = ssub.s32 %s28, 1
        // Predicated region
        $region81: #{tpu_custom_call.1} parent=79 // pred_check
          %p509 = pneg %p61
        $region82: #{tpu_custom_call.1} parent=79 // pred_check_branch
          %511 = sbr.rel (%p509) target = $region84
        $region83: #{tpu_custom_call.1} parent=79 // pred_region
          %513 = dma.done [#allocation5], 5120
        $region84: #{tpu_custom_call.1} parent=79 // pred_fallthru
          _
        // Predicated region
        $region85: #{tpu_custom_call.1} parent=79 // pred_check
          %p514 = pneg %p124
        $region86: #{tpu_custom_call.1} parent=79 // pred_check_branch
          %516 = sbr.rel (%p514) target = $region88
        $region87: #{tpu_custom_call.1} parent=79 // pred_region
          %518 = dma.done [#allocation8], 5120
        $region88: #{tpu_custom_call.1} parent=79 // pred_fallthru
          _
        // Predicated region
        $region89: #{tpu_custom_call.1} parent=79 // pred_check
          %p519 = pneg %p187
        $region90: #{tpu_custom_call.1} parent=79 // pred_check_branch
          %521 = sbr.rel (%p519) target = $region92
        $region91: #{tpu_custom_call.1} parent=79 // pred_region
          %523 = dma.done [#allocation8], 5120
        $region92: #{tpu_custom_call.1} parent=79 // pred_fallthru
          _
        // Predicated region
        $region93: #{tpu_custom_call.1} parent=79 // pred_check
          %p524 = pneg %p250
        $region94: #{tpu_custom_call.1} parent=79 // pred_check_branch
          %526 = sbr.rel (%p524) target = $region96
        $region95: #{tpu_custom_call.1} parent=79 // pred_region
          %528 = dma.done [#allocation11], 5120
        $region96: #{tpu_custom_call.1} parent=79 // pred_fallthru
          _
        // Predicated region
        $region97: #{tpu_custom_call.1} parent=79 // pred_check
          %p529 = pneg %p313
        $region98: #{tpu_custom_call.1} parent=79 // pred_check_branch
          %531 = sbr.rel (%p529) target = $region100
        $region99: #{tpu_custom_call.1} parent=79 // pred_region
          %533 = dma.done [#allocation11], 5120
        $region100: #{tpu_custom_call.1} parent=79 // pred_fallthru
          _
        %p534 = pneg %p61
        %p535 = pneg %p58
        %p536 = pneg %p82
        %p537 = pneg %p79
        %p538 = pneg %p103
        %p539 = pneg %p100
        %p540 = pneg %p124
        %p541 = pneg %p121
        %p542 = pneg %p145
        %p543 = pneg %p142
        %p544 = pneg %p166
        %p545 = pneg %p163
        %p546 = pneg %p187
        %p547 = pneg %p184
        %p548 = pneg %p208
        %p549 = pneg %p205
        %p550 = pneg %p229
        %p551 = pneg %p226
        %p552 = pneg %p250
        %p553 = pneg %p247
        %p554 = pneg %p271
        %p555 = pneg %p268
        %p556 = pneg %p292
        %p557 = pneg %p289
        %p558 = pneg %p313
        %p559 = pneg %p310
        %p560 = pneg %p334
        %p561 = pneg %p331
        %p562 = pneg %p355
        %p563 = pneg %p352
        %p564 = pneg %p383
        %p565 = pneg %p380
        %s566 = sand.u32 %s370, 1
        %s567 = scalar_lea.sflag [#allocation6], %s566
        %s568 = sand.u32 %s370, 1
        %s569 = smul.addr %s568, 128
        %s570 = scalar_lea.vmem [#allocation13], %s569
        %s571 = smul.u32 16, %s38
        %p572 = scmp.lt.s32.totalorder %s38, 0
        %s573 = ssub.s32 0, %s38
        %s574 = scalar_select %p572, %s573, %s38
        %s575 = sand.u32 %s574, 1
        %s576 = ssub.s32 0, %s575
        %s577 = scalar_select %p572, %s576, %s575
        %p578 = scmp.ne.s32.totalorder %s577, 0
        %p579 = scmp.lt.s32.totalorder %s577, 0
        %p580 = pnand %p579, %p578
        %p581 = pneg %p580
        %s582 = sadd.s32 %s577, 2
        %s583 = scalar_select %p581, %s582, %s577
        %p584 = scmp.eq.s32.totalorder %s38, 0
        // Predicated region
        $region101: #{tpu_custom_call.1} parent=79 // pred_check
          %p585 = pneg %p584
        $region102: #{tpu_custom_call.1} parent=79 // pred_check_branch
          %587 = sbr.rel (%p585) target = $region104
        $region103: #{tpu_custom_call.1} parent=79 // pred_region
          %s588 = smul.u32 %s38, 128
          %s589 = sshra.s32 %s588, 3
          %s590 = sand.u32 %s588, 7
          %s591 = smul.u32 %s37, 36
          %s592 = sadd.s32 %s589, %s591
          %s593 = smul.addr %s592, 4
          %s594 = scalar_lea.hbm %s0, %s593
          %s595 = smul.u32 %s583, 20
          %s596 = smul.addr %s595, 4
          %s597 = scalar_lea.vmem [#allocation2], %s596
          %s598 = scalar_lea.sflag [#allocation3], %s583
          // Predicated region
          $region105: #{tpu_custom_call.1} parent=103 // pred_check
            _
          $region106: #{tpu_custom_call.1} parent=103 // pred_check_branch
            %600 = sbr.rel target = $region108
          $region107: #{tpu_custom_call.1} parent=103 // pred_region
            %601 = sst [smem:[#allocation16]] [#allocation15]
            %602 = sst [smem:[#allocation17]] [#allocation14]
          $region108: #{tpu_custom_call.1} parent=103 // pred_fallthru
            _
          %604 = shalt.err (0)
          %s606 = sshll.u32 %s594, 4
          %s607 = int_to_ptr.hbm [resolvable:$true] %s606
          %s608 = sshll.u32 %s597, 4
          %s609 = int_to_ptr.vmem [resolvable:$true] %s608
          %611 = dma.hbm_to_vmem [thread:$0]  %s607, 1280, %s609, %s598
        $region104: #{tpu_custom_call.1} parent=79 // pred_fallthru
          _
        %s612 = sadd.s32 %s38, 1
        %p613 = scmp.lt.s32.totalorder %s612, 2
        // Predicated region
        $region109: #{tpu_custom_call.1} parent=79 // pred_check
          %p614 = pneg %p613
        $region110: #{tpu_custom_call.1} parent=79 // pred_check_branch
          %616 = sbr.rel (%p614) target = $region112
        $region111: #{tpu_custom_call.1} parent=79 // pred_region
          %s617 = ssub.s32 1, %s583
          %s618 = smul.u32 %s612, 128
          %s619 = sshra.s32 %s618, 3
          %s620 = sand.u32 %s618, 7
          %s621 = smul.u32 %s37, 36
          %s622 = sadd.s32 %s619, %s621
          %s623 = smul.addr %s622, 4
          %s624 = scalar_lea.hbm %s0, %s623
          %s625 = smul.u32 %s617, 20
          %s626 = smul.addr %s625, 4
          %s627 = scalar_lea.vmem [#allocation2], %s626
          %s628 = scalar_lea.sflag [#allocation3], %s617
          // Predicated region
          $region113: #{tpu_custom_call.1} parent=111 // pred_check
            _
          $region114: #{tpu_custom_call.1} parent=111 // pred_check_branch
            %630 = sbr.rel target = $region116
          $region115: #{tpu_custom_call.1} parent=111 // pred_region
            %631 = sst [smem:[#allocation16]] [#allocation19]
            %632 = sst [smem:[#allocation17]] [#allocation18]
          $region116: #{tpu_custom_call.1} parent=111 // pred_fallthru
            _
          %634 = shalt.err (0)
          %s636 = sshll.u32 %s624, 4
          %s637 = int_to_ptr.hbm [resolvable:$true] %s636
          %s638 = sshll.u32 %s627, 4
          %s639 = int_to_ptr.vmem [resolvable:$true] %s638
          %641 = dma.hbm_to_vmem [thread:$0]  %s637, 1280, %s639, %s628
        $region112: #{tpu_custom_call.1} parent=79 // pred_fallthru
          _
        %s642 = smul.u32 %s583, 20
        %s643 = smul.addr %s642, 4
        %s644 = scalar_lea.vmem [#allocation2], %s643
        %s645 = scalar_lea.sflag [#allocation3], %s583
        %s646 = smul.u32 4, 20
        %s647 = smul.u32 %s646, 1
        %s648 = sshll.u32 %s647, 4
        %649 = dma.done %s645, %s648
        %v650 = vld [vmem:[%s644] sm:$0xf]
        %v651 = vld [vmem:[%s644 + $0x4] sm:$0xf]
        %v652 = vld [vmem:[%s644 + $0x8] sm:$0xf]
        %v653 = vld [vmem:[%s644 + $0xc] sm:$0xf]
        %v654 = vld [vmem:[%s644 + $0x10] sm:$0xf]
        %v655 = vld [vmem:[%s644 + $0x14] sm:$0xf]
        %v656 = vld [vmem:[%s644 + $0x18] sm:$0xf]
        %v657 = vld [vmem:[%s644 + $0x1c] sm:$0xf]
        %v658 = vld [vmem:[%s644 + $0x20] sm:$0xf]
        %v659 = vld [vmem:[%s644 + $0x24] sm:$0xf]
        %v660 = vld [vmem:[%s644 + $0x28] sm:$0xf]
        %v661 = vld [vmem:[%s644 + $0x2c] sm:$0xf]
        %v662 = vld [vmem:[%s644 + $0x30] sm:$0xf]
        %v663 = vld [vmem:[%s644 + $0x34] sm:$0xf]
        %v664 = vld [vmem:[%s644 + $0x38] sm:$0xf]
        %v665 = vld [vmem:[%s644 + $0x3c] sm:$0xf]
        %v666 = vld [vmem:[%s644 + $0x40] sm:$0xf]
        %v667 = vld [vmem:[%s644 + $0x44] sm:$0xf]
        %v668 = vld [vmem:[%s644 + $0x48] sm:$0xf]
        %v669 = vld [vmem:[%s644 + $0x4c] sm:$0xf]
        %v670 = vunpack.c.l.bf16 %v652
        %v671 = vunpack.c.l.bf16 %v653
        %v672 = vunpack.c.l.bf16 %v654
        %v673 = vunpack.c.l.bf16 %v655
        %v674 = vunpack.c.l.bf16 %v656
        %v675 = vunpack.c.l.bf16 %v657
        %v676 = vunpack.c.l.bf16 %v658
        %v677 = vunpack.c.l.bf16 %v659
        %v678 = vunpack.c.l.bf16 %v660
        %v679 = vunpack.c.l.bf16 %v661
        %v680 = vunpack.c.l.bf16 %v662
        %v681 = vunpack.c.l.bf16 %v663
        %v682 = vunpack.c.l.bf16 %v664
        %v683 = vunpack.c.l.bf16 %v665
        %v684 = vunpack.c.l.bf16 %v666
        %v685 = vunpack.c.l.bf16 %v667
        %v686 = vlaneseq
        %v687 = vshrl.u32 %v686, 7
        %v688 = vadd.s32 %v687, 8
        %v689 = vadd.s32 %v687, 16
        %v690 = vadd.s32 %v687, 24
        %v691 = vadd.s32 %v687, 32
        %v692 = vadd.s32 %v687, 40
        %v693 = vadd.s32 %v687, 48
        %v694 = vadd.s32 %v687, 56
        %v695 = vadd.s32 %v687, 64
        %v696 = vadd.s32 %v687, 72
        %v697 = vadd.s32 %v687, 80
        %v698 = vadd.s32 %v687, 88
        %v699 = vadd.s32 %v687, 96
        %v700 = vadd.s32 %v687, 104
        %v701 = vadd.s32 %v687, 112
        %v702 = vadd.s32 %v687, 120
        %v703 = vadd.s32 %v687, 128
        %v704 = vadd.s32 %v687, 136
        %v705 = vadd.s32 %v687, 144
        %v706 = vadd.s32 %v687, 152
        %s707 = smul.u32 %s38, 128
        %v708 = vstv %s707
        %v709 = vadd.s32 %v708, %v687
        %v710 = vadd.s32 %v708, %v688
        %v711 = vadd.s32 %v708, %v689
        %v712 = vadd.s32 %v708, %v690
        %v713 = vadd.s32 %v708, %v691
        %v714 = vadd.s32 %v708, %v692
        %v715 = vadd.s32 %v708, %v693
        %v716 = vadd.s32 %v708, %v694
        %v717 = vadd.s32 %v708, %v695
        %v718 = vadd.s32 %v708, %v696
        %v719 = vadd.s32 %v708, %v697
        %v720 = vadd.s32 %v708, %v698
        %v721 = vadd.s32 %v708, %v699
        %v722 = vadd.s32 %v708, %v700
        %v723 = vadd.s32 %v708, %v701
        %v724 = vadd.s32 %v708, %v702
        %v725 = vadd.s32 %v708, %v703
        %v726 = vadd.s32 %v708, %v704
        %v727 = vadd.s32 %v708, %v705
        %v728 = vadd.s32 %v708, %v706
        %v729 = vsub.s32 %v709, 16
        %v730 = vsub.s32 %v710, 16
        %v731 = vsub.s32 %v711, 16
        %v732 = vsub.s32 %v712, 16
        %v733 = vsub.s32 %v713, 16
        %v734 = vsub.s32 %v714, 16
        %v735 = vsub.s32 %v715, 16
        %v736 = vsub.s32 %v716, 16
        %v737 = vsub.s32 %v717, 16
        %v738 = vsub.s32 %v718, 16
        %v739 = vsub.s32 %v719, 16
        %v740 = vsub.s32 %v720, 16
        %v741 = vsub.s32 %v721, 16
        %v742 = vsub.s32 %v722, 16
        %v743 = vsub.s32 %v723, 16
        %v744 = vsub.s32 %v724, 16
        %v745 = vsub.s32 %v725, 16
        %v746 = vsub.s32 %v726, 16
        %v747 = vsub.s32 %v727, 16
        %v748 = vsub.s32 %v728, 16
        %vm749 = vcmp.ge.s32.totalorder %v729, 0
        %vm750 = vcmp.ge.s32.totalorder %v730, 0
        %vm751 = vcmp.ge.s32.totalorder %v731, 0
        %vm752 = vcmp.ge.s32.totalorder %v732, 0
        %vm753 = vcmp.ge.s32.totalorder %v733, 0
        %vm754 = vcmp.ge.s32.totalorder %v734, 0
        %vm755 = vcmp.ge.s32.totalorder %v735, 0
        %vm756 = vcmp.ge.s32.totalorder %v736, 0
        %vm757 = vcmp.ge.s32.totalorder %v737, 0
        %vm758 = vcmp.ge.s32.totalorder %v738, 0
        %vm759 = vcmp.ge.s32.totalorder %v739, 0
        %vm760 = vcmp.ge.s32.totalorder %v740, 0
        %vm761 = vcmp.ge.s32.totalorder %v741, 0
        %vm762 = vcmp.ge.s32.totalorder %v742, 0
        %vm763 = vcmp.ge.s32.totalorder %v743, 0
        %vm764 = vcmp.ge.s32.totalorder %v744, 0
        %vm765 = vcmp.ge.s32.totalorder %v745, 0
        %vm766 = vcmp.ge.s32.totalorder %v746, 0
        %vm767 = vcmp.ge.s32.totalorder %v747, 0
        %vm768 = vcmp.ge.s32.totalorder %v748, 0
        %vm769 = vcmp.lt.s32.totalorder %v729, 200
        %vm770 = vcmp.lt.s32.totalorder %v730, 200
        %vm771 = vcmp.lt.s32.totalorder %v731, 200
        %vm772 = vcmp.lt.s32.totalorder %v732, 200
        %vm773 = vcmp.lt.s32.totalorder %v733, 200
        %vm774 = vcmp.lt.s32.totalorder %v734, 200
        %vm775 = vcmp.lt.s32.totalorder %v735, 200
        %vm776 = vcmp.lt.s32.totalorder %v736, 200
        %vm777 = vcmp.lt.s32.totalorder %v737, 200
        %vm778 = vcmp.lt.s32.totalorder %v738, 200
        %vm779 = vcmp.lt.s32.totalorder %v739, 200
        %vm780 = vcmp.lt.s32.totalorder %v740, 200
        %vm781 = vcmp.lt.s32.totalorder %v741, 200
        %vm782 = vcmp.lt.s32.totalorder %v742, 200
        %vm783 = vcmp.lt.s32.totalorder %v743, 200
        %vm784 = vcmp.lt.s32.totalorder %v744, 200
        %vm785 = vcmp.lt.s32.totalorder %v745, 200
        %vm786 = vcmp.lt.s32.totalorder %v746, 200
        %vm787 = vcmp.lt.s32.totalorder %v747, 200
        %vm788 = vcmp.lt.s32.totalorder %v748, 200
        %vm789 = vmand %vm749, %vm769
        %vm790 = vmand %vm750, %vm770
        %vm791 = vmand %vm751, %vm771
        %vm792 = vmand %vm752, %vm772
        %vm793 = vmand %vm753, %vm773
        %vm794 = vmand %vm754, %vm774
        %vm795 = vmand %vm755, %vm775
        %vm796 = vmand %vm756, %vm776
        %vm797 = vmand %vm757, %vm777
        %vm798 = vmand %vm758, %vm778
        %vm799 = vmand %vm759, %vm779
        %vm800 = vmand %vm760, %vm780
        %vm801 = vmand %vm761, %vm781
        %vm802 = vmand %vm762, %vm782
        %vm803 = vmand %vm763, %vm783
        %vm804 = vmand %vm764, %vm784
        %vm805 = vmand %vm765, %vm785
        %vm806 = vmand %vm766, %vm786
        %vm807 = vmand %vm767, %vm787
        %vm808 = vmand %vm768, %vm788
        %v809 = vld [vmem:[#allocation4] sm:$0xf]
        %v810 = vld [vmem:[#allocation4 + $0x4] sm:$0xf]
        %v811 = vld [vmem:[#allocation4 + $0x8] sm:$0xf]
        %v812 = vld [vmem:[#allocation4 + $0xc] sm:$0xf]
        %v813 = vld [vmem:[#allocation4 + $0x10] sm:$0xf]
        %v814 = vld [vmem:[#allocation4 + $0x14] sm:$0xf]
        %v815 = vld [vmem:[#allocation4 + $0x18] sm:$0xf]
        %v816 = vld [vmem:[#allocation4 + $0x1c] sm:$0xf]
        %v817 = vld [vmem:[#allocation4 + $0x20] sm:$0xf]
        %v818 = vld [vmem:[#allocation4 + $0x24] sm:$0xf]
        %v819 = vld [vmem:[#allocation4 + $0x28] sm:$0xf]
        %v820 = vld [vmem:[#allocation4 + $0x2c] sm:$0xf]
        %v821 = vld [vmem:[#allocation4 + $0x30] sm:$0xf]
        %v822 = vld [vmem:[#allocation4 + $0x34] sm:$0xf]
        %v823 = vld [vmem:[#allocation4 + $0x38] sm:$0xf]
        %v824 = vld [vmem:[#allocation4 + $0x3c] sm:$0xf]
        %s825 = scalar_lea.vmem [#allocation4], 64
        %v826 = vld [vmem:[%s825] sm:$0xf]
        %v827 = vld [vmem:[%s825 + $0x4] sm:$0xf]
        %v828 = vld [vmem:[%s825 + $0x8] sm:$0xf]
        %v829 = vld [vmem:[%s825 + $0xc] sm:$0xf]
        %v830 = vld [vmem:[%s825 + $0x10] sm:$0xf]
        %v831 = vld [vmem:[%s825 + $0x14] sm:$0xf]
        %v832 = vld [vmem:[%s825 + $0x18] sm:$0xf]
        %v833 = vld [vmem:[%s825 + $0x1c] sm:$0xf]
        %v834 = vld [vmem:[%s825 + $0x20] sm:$0xf]
        %v835 = vld [vmem:[%s825 + $0x24] sm:$0xf]
        %v836 = vld [vmem:[%s825 + $0x28] sm:$0xf]
        %v837 = vld [vmem:[%s825 + $0x2c] sm:$0xf]
        %v838 = vld [vmem:[%s825 + $0x30] sm:$0xf]
        %v839 = vld [vmem:[%s825 + $0x34] sm:$0xf]
        %v840 = vld [vmem:[%s825 + $0x38] sm:$0xf]
        %v841 = vld [vmem:[%s825 + $0x3c] sm:$0xf]
        %v862 = vunpack.c.l.b16 %v650
        %v863 = vunpack.c.l.b16 %v651
        %v864 = vunpack.c.l.b16 %v652
        %v865 = vunpack.c.l.b16 %v653
        %v866 = vunpack.c.l.b16 %v654
        %v867 = vunpack.c.l.b16 %v655
        %v868 = vunpack.c.l.b16 %v656
        %v869 = vunpack.c.l.b16 %v657
        %v870 = vunpack.c.l.b16 %v658
        %v871 = vunpack.c.l.b16 %v659
        %v872 = vunpack.c.l.b16 %v660
        %v873 = vunpack.c.l.b16 %v661
        %v874 = vunpack.c.l.b16 %v662
        %v875 = vunpack.c.l.b16 %v663
        %v876 = vunpack.c.l.b16 %v664
        %v877 = vunpack.c.l.b16 %v665
        %v878 = vunpack.c.l.b16 %v666
        %v879 = vunpack.c.l.b16 %v667
        %v880 = vunpack.c.l.b16 %v668
        %v881 = vunpack.c.l.b16 %v669
        %v882 = vpack.c.b16 %v863, %v862
        %v883 = vpack.c.b16 %v865, %v864
        %v884 = vpack.c.b16 %v867, %v866
        %v885 = vpack.c.b16 %v869, %v868
        %v886 = vpack.c.b16 %v871, %v870
        %v887 = vpack.c.b16 %v873, %v872
        %v888 = vpack.c.b16 %v875, %v874
        %v889 = vpack.c.b16 %v877, %v876
        %v890 = vpack.c.b16 %v879, %v878
        %v891 = vpack.c.b16 %v881, %v880
        %vm892 = vsmask.f32 7424
        %v894 = vshrl.u32 %v882, 16
        %v896 = vshll.u32 %v882, 16
        %v898 = vrot.slane %v896, 1
        %v899 = vor.u32 %v894, %v898
        %v901 = vshll.u32 %v883, 16
        %v903 = vrot.slane %v901, 1
        %v904 = vsel %vm892, %v899, %v903
        %v905 = vshrl.u32 %v883, 16
        %v907 = vor.u32 %v905, %v903
        %v909 = vshll.u32 %v884, 16
        %v911 = vrot.slane %v909, 1
        %v912 = vsel %vm892, %v907, %v911
        %v913 = vshrl.u32 %v884, 16
        %v915 = vor.u32 %v913, %v911
        %v917 = vshll.u32 %v885, 16
        %v919 = vrot.slane %v917, 1
        %v920 = vsel %vm892, %v915, %v919
        %v921 = vshrl.u32 %v885, 16
        %v923 = vor.u32 %v921, %v919
        %v925 = vshll.u32 %v886, 16
        %v927 = vrot.slane %v925, 1
        %v928 = vsel %vm892, %v923, %v927
        %v929 = vshrl.u32 %v886, 16
        %v931 = vor.u32 %v929, %v927
        %v933 = vshll.u32 %v887, 16
        %v935 = vrot.slane %v933, 1
        %v936 = vsel %vm892, %v931, %v935
        %v937 = vshrl.u32 %v887, 16
        %v939 = vor.u32 %v937, %v935
        %v941 = vshll.u32 %v888, 16
        %v943 = vrot.slane %v941, 1
        %v944 = vsel %vm892, %v939, %v943
        %v945 = vshrl.u32 %v888, 16
        %v947 = vor.u32 %v945, %v943
        %v949 = vshll.u32 %v889, 16
        %v951 = vrot.slane %v949, 1
        %v952 = vsel %vm892, %v947, %v951
        %v953 = vshrl.u32 %v889, 16
        %v955 = vor.u32 %v953, %v951
        %v957 = vshll.u32 %v890, 16
        %v959 = vrot.slane %v957, 1
        %v960 = vsel %vm892, %v955, %v959
        %v961 = vshrl.u32 %v890, 16
        %v963 = vor.u32 %v961, %v959
        %v965 = vshll.u32 %v891, 16
        %v967 = vrot.slane %v965, 1
        %v968 = vsel %vm892, %v963, %v967
        %v969 = vshrl.u32 %v891, 16
        %v971 = vor.u32 %v969, %v967
        %v998 = vunpack.c.l.b16 %v826
        %v999 = vunpack.c.l.b16 %v827
        %v1000 = vunpack.c.l.b16 %v828
        %v1001 = vunpack.c.l.b16 %v829
        %v1002 = vunpack.c.l.b16 %v830
        %v1003 = vunpack.c.l.b16 %v831
        %v1004 = vunpack.c.l.b16 %v832
        %v1005 = vunpack.c.l.b16 %v833
        %v1006 = vunpack.c.l.b16 %v834
        %v1007 = vunpack.c.l.b16 %v835
        %v1008 = vunpack.c.l.b16 %v836
        %v1009 = vunpack.c.l.b16 %v837
        %v1010 = vunpack.c.l.b16 %v838
        %v1011 = vunpack.c.l.b16 %v839
        %v1012 = vunpack.c.l.b16 %v840
        %v1013 = vunpack.c.l.b16 %v841
        %v1014 = vpack.c.b16 %v999, %v998
        %v1015 = vpack.c.b16 %v1001, %v1000
        %v1016 = vpack.c.b16 %v1003, %v1002
        %v1017 = vpack.c.b16 %v1005, %v1004
        %v1018 = vpack.c.b16 %v1007, %v1006
        %v1019 = vpack.c.b16 %v1009, %v1008
        %v1020 = vpack.c.b16 %v1011, %v1010
        %v1021 = vpack.c.b16 %v1013, %v1012
        %1030 = vmatpush.bf16.msra.mxu0 %v1021
        %1031 = vmatpush.bf16.msra.mxu0 %v1020
        %1032 = vmatpush.bf16.msra.mxu0 %v1019
        %1033 = vmatpush.bf16.msra.mxu0 %v1018
        %1034 = vmatpush.bf16.msra.mxu0 %v1017
        %1035 = vmatpush.bf16.msra.mxu0 %v1016
        %1036 = vmatpush.bf16.msra.mxu0 %v1015
        %1037 = vmatpush.bf16.msra.mxu0 %v1014
        %1038 = vmatmul.bf16.gmra.mxu0 %v904
        %v1039 = vpop.f32.mrf.mxu0
        %v1040 = vadd.f32 0.0, %v1039
        %v1041 = vpop.f32.mrf.mxu0
        %v1042 = vadd.f32 0.0, %v1041
        %1043 = vmatmul.bf16.gmra.mxu0 %v912
        %v1044 = vpop.f32.mrf.mxu0
        %v1045 = vadd.f32 0.0, %v1044
        %v1046 = vpop.f32.mrf.mxu0
        %v1047 = vadd.f32 0.0, %v1046
        %1048 = vmatmul.bf16.gmra.mxu0 %v920
        %v1049 = vpop.f32.mrf.mxu0
        %v1050 = vadd.f32 0.0, %v1049
        %v1051 = vpop.f32.mrf.mxu0
        %v1052 = vadd.f32 0.0, %v1051
        %1053 = vmatmul.bf16.gmra.mxu0 %v928
        %v1054 = vpop.f32.mrf.mxu0
        %v1055 = vadd.f32 0.0, %v1054
        %v1056 = vpop.f32.mrf.mxu0
        %v1057 = vadd.f32 0.0, %v1056
        %1058 = vmatmul.bf16.gmra.mxu0 %v936
        %v1059 = vpop.f32.mrf.mxu0
        %v1060 = vadd.f32 0.0, %v1059
        %v1061 = vpop.f32.mrf.mxu0
        %v1062 = vadd.f32 0.0, %v1061
        %1063 = vmatmul.bf16.gmra.mxu0 %v944
        %v1064 = vpop.f32.mrf.mxu0
        %v1065 = vadd.f32 0.0, %v1064
        %v1066 = vpop.f32.mrf.mxu0
        %v1067 = vadd.f32 0.0, %v1066
        %1068 = vmatmul.bf16.gmra.mxu0 %v952
        %v1069 = vpop.f32.mrf.mxu0
        %v1070 = vadd.f32 0.0, %v1069
        %v1071 = vpop.f32.mrf.mxu0
        %v1072 = vadd.f32 0.0, %v1071
        %1073 = vmatmul.bf16.gmra.mxu0 %v960
        %v1074 = vpop.f32.mrf.mxu0
        %v1075 = vadd.f32 0.0, %v1074
        %v1076 = vpop.f32.mrf.mxu0
        %v1077 = vadd.f32 0.0, %v1076
        %1078 = vmatmul.bf16.gmra.mxu0 %v968
        %v1079 = vpop.f32.mrf.mxu0
        %v1080 = vadd.f32 0.0, %v1079
        %v1081 = vpop.f32.mrf.mxu0
        %v1082 = vadd.f32 0.0, %v1081
        %1083 = vmatmul.bf16.gmra.mxu0 %v971
        %v1084 = vpop.f32.mrf.mxu0
        %v1085 = vadd.f32 0.0, %v1084
        %v1086 = vpop.f32.mrf.mxu0
        %v1087 = vadd.f32 0.0, %v1086
        %1088 = vdwg.mxu0
        %v1115 = vunpack.c.l.b16 %v809
        %v1116 = vunpack.c.l.b16 %v810
        %v1117 = vunpack.c.l.b16 %v811
        %v1118 = vunpack.c.l.b16 %v812
        %v1119 = vunpack.c.l.b16 %v813
        %v1120 = vunpack.c.l.b16 %v814
        %v1121 = vunpack.c.l.b16 %v815
        %v1122 = vunpack.c.l.b16 %v816
        %v1123 = vunpack.c.l.b16 %v817
        %v1124 = vunpack.c.l.b16 %v818
        %v1125 = vunpack.c.l.b16 %v819
        %v1126 = vunpack.c.l.b16 %v820
        %v1127 = vunpack.c.l.b16 %v821
        %v1128 = vunpack.c.l.b16 %v822
        %v1129 = vunpack.c.l.b16 %v823
        %v1130 = vunpack.c.l.b16 %v824
        %v1131 = vpack.c.b16 %v1116, %v1115
        %v1132 = vpack.c.b16 %v1118, %v1117
        %v1133 = vpack.c.b16 %v1120, %v1119
        %v1134 = vpack.c.b16 %v1122, %v1121
        %v1135 = vpack.c.b16 %v1124, %v1123
        %v1136 = vpack.c.b16 %v1126, %v1125
        %v1137 = vpack.c.b16 %v1128, %v1127
        %v1138 = vpack.c.b16 %v1130, %v1129
        %1147 = vmatpush.bf16.msra.mxu0 %v1138
        %1148 = vmatpush.bf16.msra.mxu0 %v1137
        %1149 = vmatpush.bf16.msra.mxu0 %v1136
        %1150 = vmatpush.bf16.msra.mxu0 %v1135
        %1151 = vmatpush.bf16.msra.mxu0 %v1134
        %1152 = vmatpush.bf16.msra.mxu0 %v1133
        %1153 = vmatpush.bf16.msra.mxu0 %v1132
        %1154 = vmatpush.bf16.msra.mxu0 %v1131
        %1155 = vmatmul.bf16.gmra.mxu0 %v882
        %v1156 = vpop.f32.mrf.mxu0
        %v1157 = vadd.f32 %v1040, %v1156
        %v1158 = vpop.f32.mrf.mxu0
        %v1159 = vadd.f32 %v1042, %v1158
        %1160 = vmatmul.bf16.gmra.mxu0 %v883
        %v1161 = vpop.f32.mrf.mxu0
        %v1162 = vadd.f32 %v1045, %v1161
        %v1163 = vpop.f32.mrf.mxu0
        %v1164 = vadd.f32 %v1047, %v1163
        %1165 = vmatmul.bf16.gmra.mxu0 %v884
        %v1166 = vpop.f32.mrf.mxu0
        %v1167 = vadd.f32 %v1050, %v1166
        %v1168 = vpop.f32.mrf.mxu0
        %v1169 = vadd.f32 %v1052, %v1168
        %1170 = vmatmul.bf16.gmra.mxu0 %v885
        %v1171 = vpop.f32.mrf.mxu0
        %v1172 = vadd.f32 %v1055, %v1171
        %v1173 = vpop.f32.mrf.mxu0
        %v1174 = vadd.f32 %v1057, %v1173
        %1175 = vmatmul.bf16.gmra.mxu0 %v886
        %v1176 = vpop.f32.mrf.mxu0
        %v1177 = vadd.f32 %v1060, %v1176
        %v1178 = vpop.f32.mrf.mxu0
        %v1179 = vadd.f32 %v1062, %v1178
        %1180 = vmatmul.bf16.gmra.mxu0 %v887
        %v1181 = vpop.f32.mrf.mxu0
        %v1182 = vadd.f32 %v1065, %v1181
        %v1183 = vpop.f32.mrf.mxu0
        %v1184 = vadd.f32 %v1067, %v1183
        %1185 = vmatmul.bf16.gmra.mxu0 %v888
        %v1186 = vpop.f32.mrf.mxu0
        %v1187 = vadd.f32 %v1070, %v1186
        %v1188 = vpop.f32.mrf.mxu0
        %v1189 = vadd.f32 %v1072, %v1188
        %1190 = vmatmul.bf16.gmra.mxu0 %v889
        %v1191 = vpop.f32.mrf.mxu0
        %v1192 = vadd.f32 %v1075, %v1191
        %v1193 = vpop.f32.mrf.mxu0
        %v1194 = vadd.f32 %v1077, %v1193
        %1195 = vmatmul.bf16.gmra.mxu0 %v890
        %v1196 = vpop.f32.mrf.mxu0
        %v1197 = vadd.f32 %v1080, %v1196
        %v1198 = vpop.f32.mrf.mxu0
        %v1199 = vadd.f32 %v1082, %v1198
        %1200 = vmatmul.bf16.gmra.mxu0 %v891
        %v1201 = vpop.f32.mrf.mxu0
        %v1202 = vadd.f32 %v1085, %v1201
        %v1203 = vpop.f32.mrf.mxu0
        %v1204 = vadd.f32 %v1087, %v1203
        %1205 = vdwg.mxu0
        %s1206 = scalar_lea.vmem [#allocation4], 128
        %v1207 = vld [vmem:[%s1206] sm:$0xf]
        %v1208 = vld [vmem:[%s1206 + $0x4] sm:$0xf]
        %v1209 = vld [vmem:[%s1206 + $0x8] sm:$0xf]
        %v1210 = vld [vmem:[%s1206 + $0xc] sm:$0xf]
        %v1211 = vld [vmem:[%s1206 + $0x10] sm:$0xf]
        %v1212 = vld [vmem:[%s1206 + $0x14] sm:$0xf]
        %v1213 = vld [vmem:[%s1206 + $0x18] sm:$0xf]
        %v1214 = vld [vmem:[%s1206 + $0x1c] sm:$0xf]
        %v1215 = vld [vmem:[%s1206 + $0x20] sm:$0xf]
        %v1216 = vld [vmem:[%s1206 + $0x24] sm:$0xf]
        %v1217 = vld [vmem:[%s1206 + $0x28] sm:$0xf]
        %v1218 = vld [vmem:[%s1206 + $0x2c] sm:$0xf]
        %v1219 = vld [vmem:[%s1206 + $0x30] sm:$0xf]
        %v1220 = vld [vmem:[%s1206 + $0x34] sm:$0xf]
        %v1221 = vld [vmem:[%s1206 + $0x38] sm:$0xf]
        %v1222 = vld [vmem:[%s1206 + $0x3c] sm:$0xf]
        %vm1223 = vcmask 1046528
        %v1224 = vrot.slane %v882, 1
        %v1225 = vrot.slane %v883, 1
        %v1226 = vsel %vm1223, %v1224, %v1225
        %v1227 = vrot.slane %v884, 1
        %v1228 = vsel %vm1223, %v1225, %v1227
        %v1229 = vrot.slane %v885, 1
        %v1230 = vsel %vm1223, %v1227, %v1229
        %v1231 = vrot.slane %v886, 1
        %v1232 = vsel %vm1223, %v1229, %v1231
        %v1233 = vrot.slane %v887, 1
        %v1234 = vsel %vm1223, %v1231, %v1233
        %v1235 = vrot.slane %v888, 1
        %v1236 = vsel %vm1223, %v1233, %v1235
        %v1237 = vrot.slane %v889, 1
        %v1238 = vsel %vm1223, %v1235, %v1237
        %v1239 = vrot.slane %v890, 1
        %v1240 = vsel %vm1223, %v1237, %v1239
        %v1241 = vrot.slane %v891, 1
        %v1242 = vsel %vm1223, %v1239, %v1241
        %v1269 = vunpack.c.l.b16 %v1207
        %v1270 = vunpack.c.l.b16 %v1208
        %v1271 = vunpack.c.l.b16 %v1209
        %v1272 = vunpack.c.l.b16 %v1210
        %v1273 = vunpack.c.l.b16 %v1211
        %v1274 = vunpack.c.l.b16 %v1212
        %v1275 = vunpack.c.l.b16 %v1213
        %v1276 = vunpack.c.l.b16 %v1214
        %v1277 = vunpack.c.l.b16 %v1215
        %v1278 = vunpack.c.l.b16 %v1216
        %v1279 = vunpack.c.l.b16 %v1217
        %v1280 = vunpack.c.l.b16 %v1218
        %v1281 = vunpack.c.l.b16 %v1219
        %v1282 = vunpack.c.l.b16 %v1220
        %v1283 = vunpack.c.l.b16 %v1221
        %v1284 = vunpack.c.l.b16 %v1222
        %v1285 = vpack.c.b16 %v1270, %v1269
        %v1286 = vpack.c.b16 %v1272, %v1271
        %v1287 = vpack.c.b16 %v1274, %v1273
        %v1288 = vpack.c.b16 %v1276, %v1275
        %v1289 = vpack.c.b16 %v1278, %v1277
        %v1290 = vpack.c.b16 %v1280, %v1279
        %v1291 = vpack.c.b16 %v1282, %v1281
        %v1292 = vpack.c.b16 %v1284, %v1283
        %1301 = vmatpush.bf16.msra.mxu0 %v1292
        %1302 = vmatpush.bf16.msra.mxu0 %v1291
        %1303 = vmatpush.bf16.msra.mxu0 %v1290
        %1304 = vmatpush.bf16.msra.mxu0 %v1289
        %1305 = vmatpush.bf16.msra.mxu0 %v1288
        %1306 = vmatpush.bf16.msra.mxu0 %v1287
        %1307 = vmatpush.bf16.msra.mxu0 %v1286
        %1308 = vmatpush.bf16.msra.mxu0 %v1285
        %1309 = vmatmul.bf16.gmra.mxu0 %v1226
        %v1310 = vpop.f32.mrf.mxu0
        %v1311 = vadd.f32 0.0, %v1310
        %v1312 = vpop.f32.mrf.mxu0
        %v1313 = vadd.f32 0.0, %v1312
        %1314 = vmatmul.bf16.gmra.mxu0 %v1228
        %v1315 = vpop.f32.mrf.mxu0
        %v1316 = vadd.f32 0.0, %v1315
        %v1317 = vpop.f32.mrf.mxu0
        %v1318 = vadd.f32 0.0, %v1317
        %1319 = vmatmul.bf16.gmra.mxu0 %v1230
        %v1320 = vpop.f32.mrf.mxu0
        %v1321 = vadd.f32 0.0, %v1320
        %v1322 = vpop.f32.mrf.mxu0
        %v1323 = vadd.f32 0.0, %v1322
        %1324 = vmatmul.bf16.gmra.mxu0 %v1232
        %v1325 = vpop.f32.mrf.mxu0
        %v1326 = vadd.f32 0.0, %v1325
        %v1327 = vpop.f32.mrf.mxu0
        %v1328 = vadd.f32 0.0, %v1327
        %1329 = vmatmul.bf16.gmra.mxu0 %v1234
        %v1330 = vpop.f32.mrf.mxu0
        %v1331 = vadd.f32 0.0, %v1330
        %v1332 = vpop.f32.mrf.mxu0
        %v1333 = vadd.f32 0.0, %v1332
        %1334 = vmatmul.bf16.gmra.mxu0 %v1236
        %v1335 = vpop.f32.mrf.mxu0
        %v1336 = vadd.f32 0.0, %v1335
        %v1337 = vpop.f32.mrf.mxu0
        %v1338 = vadd.f32 0.0, %v1337
        %1339 = vmatmul.bf16.gmra.mxu0 %v1238
        %v1340 = vpop.f32.mrf.mxu0
        %v1341 = vadd.f32 0.0, %v1340
        %v1342 = vpop.f32.mrf.mxu0
        %v1343 = vadd.f32 0.0, %v1342
        %1344 = vmatmul.bf16.gmra.mxu0 %v1240
        %v1345 = vpop.f32.mrf.mxu0
        %v1346 = vadd.f32 0.0, %v1345
        %v1347 = vpop.f32.mrf.mxu0
        %v1348 = vadd.f32 0.0, %v1347
        %1349 = vmatmul.bf16.gmra.mxu0 %v1242
        %v1350 = vpop.f32.mrf.mxu0
        %v1351 = vadd.f32 0.0, %v1350
        %v1352 = vpop.f32.mrf.mxu0
        %v1353 = vadd.f32 0.0, %v1352
        %1354 = vmatmul.bf16.gmra.mxu0 %v1241
        %v1355 = vpop.f32.mrf.mxu0
        %v1356 = vadd.f32 0.0, %v1355
        %v1357 = vpop.f32.mrf.mxu0
        %v1358 = vadd.f32 0.0, %v1357
        %1359 = vdwg.mxu0
        %v1360 = vadd.f32 %v1157, %v1311
        %v1361 = vadd.f32 %v1159, %v1313
        %v1362 = vadd.f32 %v1162, %v1316
        %v1363 = vadd.f32 %v1164, %v1318
        %v1364 = vadd.f32 %v1167, %v1321
        %v1365 = vadd.f32 %v1169, %v1323
        %v1366 = vadd.f32 %v1172, %v1326
        %v1367 = vadd.f32 %v1174, %v1328
        %v1368 = vadd.f32 %v1177, %v1331
        %v1369 = vadd.f32 %v1179, %v1333
        %v1370 = vadd.f32 %v1182, %v1336
        %v1371 = vadd.f32 %v1184, %v1338
        %v1372 = vadd.f32 %v1187, %v1341
        %v1373 = vadd.f32 %v1189, %v1343
        %v1374 = vadd.f32 %v1192, %v1346
        %v1375 = vadd.f32 %v1194, %v1348
        %v1376 = vadd.f32 %v1197, %v1351
        %v1377 = vadd.f32 %v1199, %v1353
        %v1378 = vadd.f32 %v1202, %v1356
        %v1379 = vadd.f32 %v1204, %v1358
        %s1380 = scalar_lea.vmem [#allocation4], 192
        %v1381 = vld [vmem:[%s1380] sm:$0xf]
        %v1382 = vld [vmem:[%s1380 + $0x4] sm:$0xf]
        %v1383 = vld [vmem:[%s1380 + $0x8] sm:$0xf]
        %v1384 = vld [vmem:[%s1380 + $0xc] sm:$0xf]
        %v1385 = vld [vmem:[%s1380 + $0x10] sm:$0xf]
        %v1386 = vld [vmem:[%s1380 + $0x14] sm:$0xf]
        %v1387 = vld [vmem:[%s1380 + $0x18] sm:$0xf]
        %v1388 = vld [vmem:[%s1380 + $0x1c] sm:$0xf]
        %v1389 = vld [vmem:[%s1380 + $0x20] sm:$0xf]
        %v1390 = vld [vmem:[%s1380 + $0x24] sm:$0xf]
        %v1391 = vld [vmem:[%s1380 + $0x28] sm:$0xf]
        %v1392 = vld [vmem:[%s1380 + $0x2c] sm:$0xf]
        %v1393 = vld [vmem:[%s1380 + $0x30] sm:$0xf]
        %v1394 = vld [vmem:[%s1380 + $0x34] sm:$0xf]
        %v1395 = vld [vmem:[%s1380 + $0x38] sm:$0xf]
        %v1396 = vld [vmem:[%s1380 + $0x3c] sm:$0xf]
        %vm1397 = vsmask.f32 6400
        %v1398 = vrot.slane %v894, 1
        %v1399 = vrot.slane %v896, 2
        %v1400 = vor.u32 %v1398, %v1399
        %v1401 = vrot.slane %v905, 1
        %v1402 = vrot.slane %v901, 2
        %v1403 = vor.u32 %v1401, %v1402
        %v1404 = vsel %vm1397, %v1400, %v1403
        %v1405 = vrot.slane %v913, 1
        %v1406 = vrot.slane %v909, 2
        %v1407 = vor.u32 %v1405, %v1406
        %v1408 = vsel %vm1397, %v1403, %v1407
        %v1409 = vrot.slane %v921, 1
        %v1410 = vrot.slane %v917, 2
        %v1411 = vor.u32 %v1409, %v1410
        %v1412 = vsel %vm1397, %v1407, %v1411
        %v1413 = vrot.slane %v929, 1
        %v1414 = vrot.slane %v925, 2
        %v1415 = vor.u32 %v1413, %v1414
        %v1416 = vsel %vm1397, %v1411, %v1415
        %v1417 = vrot.slane %v937, 1
        %v1418 = vrot.slane %v933, 2
        %v1419 = vor.u32 %v1417, %v1418
        %v1420 = vsel %vm1397, %v1415, %v1419
        %v1421 = vrot.slane %v945, 1
        %v1422 = vrot.slane %v941, 2
        %v1423 = vor.u32 %v1421, %v1422
        %v1424 = vsel %vm1397, %v1419, %v1423
        %v1425 = vrot.slane %v953, 1
        %v1426 = vrot.slane %v949, 2
        %v1427 = vor.u32 %v1425, %v1426
        %v1428 = vsel %vm1397, %v1423, %v1427
        %v1429 = vrot.slane %v961, 1
        %v1430 = vrot.slane %v957, 2
        %v1431 = vor.u32 %v1429, %v1430
        %v1432 = vsel %vm1397, %v1427, %v1431
        %v1433 = vrot.slane %v969, 1
        %v1434 = vrot.slane %v965, 2
        %v1435 = vor.u32 %v1433, %v1434
        %v1436 = vsel %vm1397, %v1431, %v1435
        %v1463 = vunpack.c.l.b16 %v1381
        %v1464 = vunpack.c.l.b16 %v1382
        %v1465 = vunpack.c.l.b16 %v1383
        %v1466 = vunpack.c.l.b16 %v1384
        %v1467 = vunpack.c.l.b16 %v1385
        %v1468 = vunpack.c.l.b16 %v1386
        %v1469 = vunpack.c.l.b16 %v1387
        %v1470 = vunpack.c.l.b16 %v1388
        %v1471 = vunpack.c.l.b16 %v1389
        %v1472 = vunpack.c.l.b16 %v1390
        %v1473 = vunpack.c.l.b16 %v1391
        %v1474 = vunpack.c.l.b16 %v1392
        %v1475 = vunpack.c.l.b16 %v1393
        %v1476 = vunpack.c.l.b16 %v1394
        %v1477 = vunpack.c.l.b16 %v1395
        %v1478 = vunpack.c.l.b16 %v1396
        %v1479 = vpack.c.b16 %v1464, %v1463
        %v1480 = vpack.c.b16 %v1466, %v1465
        %v1481 = vpack.c.b16 %v1468, %v1467
        %v1482 = vpack.c.b16 %v1470, %v1469
        %v1483 = vpack.c.b16 %v1472, %v1471
        %v1484 = vpack.c.b16 %v1474, %v1473
        %v1485 = vpack.c.b16 %v1476, %v1475
        %v1486 = vpack.c.b16 %v1478, %v1477
        %1495 = vmatpush.bf16.msra.mxu0 %v1486
        %1496 = vmatpush.bf16.msra.mxu0 %v1485
        %1497 = vmatpush.bf16.msra.mxu0 %v1484
        %1498 = vmatpush.bf16.msra.mxu0 %v1483
        %1499 = vmatpush.bf16.msra.mxu0 %v1482
        %1500 = vmatpush.bf16.msra.mxu0 %v1481
        %1501 = vmatpush.bf16.msra.mxu0 %v1480
        %1502 = vmatpush.bf16.msra.mxu0 %v1479
        %1503 = vmatmul.bf16.gmra.mxu0 %v1404
        %v1504 = vpop.f32.mrf.mxu0
        %v1505 = vadd.f32 0.0, %v1504
        %v1506 = vpop.f32.mrf.mxu0
        %v1507 = vadd.f32 0.0, %v1506
        %1508 = vmatmul.bf16.gmra.mxu0 %v1408
        %v1509 = vpop.f32.mrf.mxu0
        %v1510 = vadd.f32 0.0, %v1509
        %v1511 = vpop.f32.mrf.mxu0
        %v1512 = vadd.f32 0.0, %v1511
        %1513 = vmatmul.bf16.gmra.mxu0 %v1412
        %v1514 = vpop.f32.mrf.mxu0
        %v1515 = vadd.f32 0.0, %v1514
        %v1516 = vpop.f32.mrf.mxu0
        %v1517 = vadd.f32 0.0, %v1516
        %1518 = vmatmul.bf16.gmra.mxu0 %v1416
        %v1519 = vpop.f32.mrf.mxu0
        %v1520 = vadd.f32 0.0, %v1519
        %v1521 = vpop.f32.mrf.mxu0
        %v1522 = vadd.f32 0.0, %v1521
        %1523 = vmatmul.bf16.gmra.mxu0 %v1420
        %v1524 = vpop.f32.mrf.mxu0
        %v1525 = vadd.f32 0.0, %v1524
        %v1526 = vpop.f32.mrf.mxu0
        %v1527 = vadd.f32 0.0, %v1526
        %1528 = vmatmul.bf16.gmra.mxu0 %v1424
        %v1529 = vpop.f32.mrf.mxu0
        %v1530 = vadd.f32 0.0, %v1529
        %v1531 = vpop.f32.mrf.mxu0
        %v1532 = vadd.f32 0.0, %v1531
        %1533 = vmatmul.bf16.gmra.mxu0 %v1428
        %v1534 = vpop.f32.mrf.mxu0
        %v1535 = vadd.f32 0.0, %v1534
        %v1536 = vpop.f32.mrf.mxu0
        %v1537 = vadd.f32 0.0, %v1536
        %1538 = vmatmul.bf16.gmra.mxu0 %v1432
        %v1539 = vpop.f32.mrf.mxu0
        %v1540 = vadd.f32 0.0, %v1539
        %v1541 = vpop.f32.mrf.mxu0
        %v1542 = vadd.f32 0.0, %v1541
        %1543 = vmatmul.bf16.gmra.mxu0 %v1436
        %v1544 = vpop.f32.mrf.mxu0
        %v1545 = vadd.f32 0.0, %v1544
        %v1546 = vpop.f32.mrf.mxu0
        %v1547 = vadd.f32 0.0, %v1546
        %1548 = vmatmul.bf16.gmra.mxu0 %v1435
        %v1549 = vpop.f32.mrf.mxu0
        %v1550 = vadd.f32 0.0, %v1549
        %v1551 = vpop.f32.mrf.mxu0
        %v1552 = vadd.f32 0.0, %v1551
        %1553 = vdwg.mxu0
        %v1554 = vadd.f32 %v1360, %v1505
        %v1555 = vadd.f32 %v1361, %v1507
        %v1556 = vadd.f32 %v1362, %v1510
        %v1557 = vadd.f32 %v1363, %v1512
        %v1558 = vadd.f32 %v1364, %v1515
        %v1559 = vadd.f32 %v1365, %v1517
        %v1560 = vadd.f32 %v1366, %v1520
        %v1561 = vadd.f32 %v1367, %v1522
        %v1562 = vadd.f32 %v1368, %v1525
        %v1563 = vadd.f32 %v1369, %v1527
        %v1564 = vadd.f32 %v1370, %v1530
        %v1565 = vadd.f32 %v1371, %v1532
        %v1566 = vadd.f32 %v1372, %v1535
        %v1567 = vadd.f32 %v1373, %v1537
        %v1568 = vadd.f32 %v1374, %v1540
        %v1569 = vadd.f32 %v1375, %v1542
        %v1570 = vadd.f32 %v1376, %v1545
        %v1571 = vadd.f32 %v1377, %v1547
        %v1572 = vadd.f32 %v1378, %v1550
        %v1573 = vadd.f32 %v1379, %v1552
        %s1574 = scalar_lea.vmem [#allocation4], 256
        %v1575 = vld [vmem:[%s1574] sm:$0xf]
        %v1576 = vld [vmem:[%s1574 + $0x4] sm:$0xf]
        %v1577 = vld [vmem:[%s1574 + $0x8] sm:$0xf]
        %v1578 = vld [vmem:[%s1574 + $0xc] sm:$0xf]
        %v1579 = vld [vmem:[%s1574 + $0x10] sm:$0xf]
        %v1580 = vld [vmem:[%s1574 + $0x14] sm:$0xf]
        %v1581 = vld [vmem:[%s1574 + $0x18] sm:$0xf]
        %v1582 = vld [vmem:[%s1574 + $0x1c] sm:$0xf]
        %v1583 = vld [vmem:[%s1574 + $0x20] sm:$0xf]
        %v1584 = vld [vmem:[%s1574 + $0x24] sm:$0xf]
        %v1585 = vld [vmem:[%s1574 + $0x28] sm:$0xf]
        %v1586 = vld [vmem:[%s1574 + $0x2c] sm:$0xf]
        %v1587 = vld [vmem:[%s1574 + $0x30] sm:$0xf]
        %v1588 = vld [vmem:[%s1574 + $0x34] sm:$0xf]
        %v1589 = vld [vmem:[%s1574 + $0x38] sm:$0xf]
        %v1590 = vld [vmem:[%s1574 + $0x3c] sm:$0xf]
        %vm1591 = vcmask 1045504
        %v1592 = vrot.slane %v882, 2
        %v1593 = vrot.slane %v883, 2
        %v1594 = vsel %vm1591, %v1592, %v1593
        %v1595 = vrot.slane %v884, 2
        %v1596 = vsel %vm1591, %v1593, %v1595
        %v1597 = vrot.slane %v885, 2
        %v1598 = vsel %vm1591, %v1595, %v1597
        %v1599 = vrot.slane %v886, 2
        %v1600 = vsel %vm1591, %v1597, %v1599
        %v1601 = vrot.slane %v887, 2
        %v1602 = vsel %vm1591, %v1599, %v1601
        %v1603 = vrot.slane %v888, 2
        %v1604 = vsel %vm1591, %v1601, %v1603
        %v1605 = vrot.slane %v889, 2
        %v1606 = vsel %vm1591, %v1603, %v1605
        %v1607 = vrot.slane %v890, 2
        %v1608 = vsel %vm1591, %v1605, %v1607
        %v1609 = vrot.slane %v891, 2
        %v1610 = vsel %vm1591, %v1607, %v1609
        %v1637 = vunpack.c.l.b16 %v1575
        %v1638 = vunpack.c.l.b16 %v1576
        %v1639 = vunpack.c.l.b16 %v1577
        %v1640 = vunpack.c.l.b16 %v1578
        %v1641 = vunpack.c.l.b16 %v1579
        %v1642 = vunpack.c.l.b16 %v1580
        %v1643 = vunpack.c.l.b16 %v1581
        %v1644 = vunpack.c.l.b16 %v1582
        %v1645 = vunpack.c.l.b16 %v1583
        %v1646 = vunpack.c.l.b16 %v1584
        %v1647 = vunpack.c.l.b16 %v1585
        %v1648 = vunpack.c.l.b16 %v1586
        %v1649 = vunpack.c.l.b16 %v1587
        %v1650 = vunpack.c.l.b16 %v1588
        %v1651 = vunpack.c.l.b16 %v1589
        %v1652 = vunpack.c.l.b16 %v1590
        %v1653 = vpack.c.b16 %v1638, %v1637
        %v1654 = vpack.c.b16 %v1640, %v1639
        %v1655 = vpack.c.b16 %v1642, %v1641
        %v1656 = vpack.c.b16 %v1644, %v1643
        %v1657 = vpack.c.b16 %v1646, %v1645
        %v1658 = vpack.c.b16 %v1648, %v1647
        %v1659 = vpack.c.b16 %v1650, %v1649
        %v1660 = vpack.c.b16 %v1652, %v1651
        %1669 = vmatpush.bf16.msra.mxu0 %v1660
        %1670 = vmatpush.bf16.msra.mxu0 %v1659
        %1671 = vmatpush.bf16.msra.mxu0 %v1658
        %1672 = vmatpush.bf16.msra.mxu0 %v1657
        %1673 = vmatpush.bf16.msra.mxu0 %v1656
        %1674 = vmatpush.bf16.msra.mxu0 %v1655
        %1675 = vmatpush.bf16.msra.mxu0 %v1654
        %1676 = vmatpush.bf16.msra.mxu0 %v1653
        %1677 = vmatmul.bf16.gmra.mxu0 %v1594
        %v1678 = vpop.f32.mrf.mxu0
        %v1679 = vadd.f32 0.0, %v1678
        %v1680 = vpop.f32.mrf.mxu0
        %v1681 = vadd.f32 0.0, %v1680
        %1682 = vmatmul.bf16.gmra.mxu0 %v1596
        %v1683 = vpop.f32.mrf.mxu0
        %v1684 = vadd.f32 0.0, %v1683
        %v1685 = vpop.f32.mrf.mxu0
        %v1686 = vadd.f32 0.0, %v1685
        %1687 = vmatmul.bf16.gmra.mxu0 %v1598
        %v1688 = vpop.f32.mrf.mxu0
        %v1689 = vadd.f32 0.0, %v1688
        %v1690 = vpop.f32.mrf.mxu0
        %v1691 = vadd.f32 0.0, %v1690
        %1692 = vmatmul.bf16.gmra.mxu0 %v1600
        %v1693 = vpop.f32.mrf.mxu0
        %v1694 = vadd.f32 0.0, %v1693
        %v1695 = vpop.f32.mrf.mxu0
        %v1696 = vadd.f32 0.0, %v1695
        %1697 = vmatmul.bf16.gmra.mxu0 %v1602
        %v1698 = vpop.f32.mrf.mxu0
        %v1699 = vadd.f32 0.0, %v1698
        %v1700 = vpop.f32.mrf.mxu0
        %v1701 = vadd.f32 0.0, %v1700
        %1702 = vmatmul.bf16.gmra.mxu0 %v1604
        %v1703 = vpop.f32.mrf.mxu0
        %v1704 = vadd.f32 0.0, %v1703
        %v1705 = vpop.f32.mrf.mxu0
        %v1706 = vadd.f32 0.0, %v1705
        %1707 = vmatmul.bf16.gmra.mxu0 %v1606
        %v1708 = vpop.f32.mrf.mxu0
        %v1709 = vadd.f32 0.0, %v1708
        %v1710 = vpop.f32.mrf.mxu0
        %v1711 = vadd.f32 0.0, %v1710
        %1712 = vmatmul.bf16.gmra.mxu0 %v1608
        %v1713 = vpop.f32.mrf.mxu0
        %v1714 = vadd.f32 0.0, %v1713
        %v1715 = vpop.f32.mrf.mxu0
        %v1716 = vadd.f32 0.0, %v1715
        %1717 = vmatmul.bf16.gmra.mxu0 %v1610
        %v1718 = vpop.f32.mrf.mxu0
        %v1719 = vadd.f32 0.0, %v1718
        %v1720 = vpop.f32.mrf.mxu0
        %v1721 = vadd.f32 0.0, %v1720
        %1722 = vmatmul.bf16.gmra.mxu0 %v1609
        %v1723 = vpop.f32.mrf.mxu0
        %v1724 = vadd.f32 0.0, %v1723
        %v1725 = vpop.f32.mrf.mxu0
        %v1726 = vadd.f32 0.0, %v1725
        %1727 = vdwg.mxu0
        %v1728 = vadd.f32 %v1554, %v1679
        %v1729 = vadd.f32 %v1555, %v1681
        %v1730 = vadd.f32 %v1556, %v1684
        %v1731 = vadd.f32 %v1557, %v1686
        %v1732 = vadd.f32 %v1558, %v1689
        %v1733 = vadd.f32 %v1559, %v1691
        %v1734 = vadd.f32 %v1560, %v1694
        %v1735 = vadd.f32 %v1561, %v1696
        %v1736 = vadd.f32 %v1562, %v1699
        %v1737 = vadd.f32 %v1563, %v1701
        %v1738 = vadd.f32 %v1564, %v1704
        %v1739 = vadd.f32 %v1565, %v1706
        %v1740 = vadd.f32 %v1566, %v1709
        %v1741 = vadd.f32 %v1567, %v1711
        %v1742 = vadd.f32 %v1568, %v1714
        %v1743 = vadd.f32 %v1569, %v1716
        %v1744 = vadd.f32 %v1570, %v1719
        %v1745 = vadd.f32 %v1571, %v1721
        %v1746 = vadd.f32 %v1572, %v1724
        %v1747 = vadd.f32 %v1573, %v1726
        %v1748 = vld [vmem:[%s2] sm:$0x1]
        %v1750 = vperm.slane %v1748, 0
        %v1752 = vmul.f32 %v1728, %v1750
        %v1753 = vmul.f32 %v1729, %v1750
        %v1754 = vmul.f32 %v1730, %v1750
        %v1755 = vmul.f32 %v1731, %v1750
        %v1756 = vmul.f32 %v1732, %v1750
        %v1757 = vmul.f32 %v1733, %v1750
        %v1758 = vmul.f32 %v1734, %v1750
        %v1759 = vmul.f32 %v1735, %v1750
        %v1760 = vmul.f32 %v1736, %v1750
        %v1761 = vmul.f32 %v1737, %v1750
        %v1762 = vmul.f32 %v1738, %v1750
        %v1763 = vmul.f32 %v1739, %v1750
        %v1764 = vmul.f32 %v1740, %v1750
        %v1765 = vmul.f32 %v1741, %v1750
        %v1766 = vmul.f32 %v1742, %v1750
        %v1767 = vmul.f32 %v1743, %v1750
        %v1768 = vmul.f32 %v1744, %v1750
        %v1769 = vmul.f32 %v1745, %v1750
        %v1770 = vmul.f32 %v1746, %v1750
        %v1771 = vmul.f32 %v1747, %v1750
        %v1772 = vld [vmem:[%s3] sm:$0x1]
        %v1774 = vperm.slane %v1772, 0
        %v1776 = vadd.f32 %v1752, %v1774
        %v1777 = vadd.f32 %v1753, %v1774
        %v1778 = vadd.f32 %v1754, %v1774
        %v1779 = vadd.f32 %v1755, %v1774
        %v1780 = vadd.f32 %v1756, %v1774
        %v1781 = vadd.f32 %v1757, %v1774
        %v1782 = vadd.f32 %v1758, %v1774
        %v1783 = vadd.f32 %v1759, %v1774
        %v1784 = vadd.f32 %v1760, %v1774
        %v1785 = vadd.f32 %v1761, %v1774
        %v1786 = vadd.f32 %v1762, %v1774
        %v1787 = vadd.f32 %v1763, %v1774
        %v1788 = vadd.f32 %v1764, %v1774
        %v1789 = vadd.f32 %v1765, %v1774
        %v1790 = vadd.f32 %v1766, %v1774
        %v1791 = vadd.f32 %v1767, %v1774
        %v1792 = vadd.f32 %v1768, %v1774
        %v1793 = vadd.f32 %v1769, %v1774
        %v1794 = vadd.f32 %v1770, %v1774
        %v1795 = vadd.f32 %v1771, %v1774
        %v1796 = vtanh.pop %v1776
        %v1797 = vtanh.pop %v1777
        %v1798 = vtanh.pop %v1778
        %v1799 = vtanh.pop %v1779
        %v1800 = vtanh.pop %v1780
        %v1801 = vtanh.pop %v1781
        %v1802 = vtanh.pop %v1782
        %v1803 = vtanh.pop %v1783
        %v1804 = vtanh.pop %v1784
        %v1805 = vtanh.pop %v1785
        %v1806 = vtanh.pop %v1786
        %v1807 = vtanh.pop %v1787
        %v1808 = vtanh.pop %v1788
        %v1809 = vtanh.pop %v1789
        %v1810 = vtanh.pop %v1790
        %v1811 = vtanh.pop %v1791
        %v1812 = vtanh.pop %v1792
        %v1813 = vtanh.pop %v1793
        %v1814 = vtanh.pop %v1794
        %v1815 = vtanh.pop %v1795
        %v1816 = vsel %vm789, 1, 0
        %v1817 = vsel %vm790, 1, 0
        %v1818 = vsel %vm791, 1, 0
        %v1819 = vsel %vm792, 1, 0
        %v1820 = vsel %vm793, 1, 0
        %v1821 = vsel %vm794, 1, 0
        %v1822 = vsel %vm795, 1, 0
        %v1823 = vsel %vm796, 1, 0
        %v1824 = vsel %vm797, 1, 0
        %v1825 = vsel %vm798, 1, 0
        %v1826 = vsel %vm799, 1, 0
        %v1827 = vsel %vm800, 1, 0
        %v1828 = vsel %vm801, 1, 0
        %v1829 = vsel %vm802, 1, 0
        %v1830 = vsel %vm803, 1, 0
        %v1831 = vsel %vm804, 1, 0
        %v1832 = vsel %vm805, 1, 0
        %v1833 = vsel %vm806, 1, 0
        %v1834 = vsel %vm807, 1, 0
        %v1835 = vsel %vm808, 1, 0
        %vm1836 = vcmp.eq.s32.totalorder %v1816, 1
        %vm1837 = vcmp.eq.s32.totalorder %v1817, 1
        %vm1838 = vcmp.eq.s32.totalorder %v1818, 1
        %vm1839 = vcmp.eq.s32.totalorder %v1819, 1
        %vm1840 = vcmp.eq.s32.totalorder %v1820, 1
        %vm1841 = vcmp.eq.s32.totalorder %v1821, 1
        %vm1842 = vcmp.eq.s32.totalorder %v1822, 1
        %vm1843 = vcmp.eq.s32.totalorder %v1823, 1
        %vm1844 = vcmp.eq.s32.totalorder %v1824, 1
        %vm1845 = vcmp.eq.s32.totalorder %v1825, 1
        %vm1846 = vcmp.eq.s32.totalorder %v1826, 1
        %vm1847 = vcmp.eq.s32.totalorder %v1827, 1
        %vm1848 = vcmp.eq.s32.totalorder %v1828, 1
        %vm1849 = vcmp.eq.s32.totalorder %v1829, 1
        %vm1850 = vcmp.eq.s32.totalorder %v1830, 1
        %vm1851 = vcmp.eq.s32.totalorder %v1831, 1
        %vm1852 = vcmp.eq.s32.totalorder %v1832, 1
        %vm1853 = vcmp.eq.s32.totalorder %v1833, 1
        %vm1854 = vcmp.eq.s32.totalorder %v1834, 1
        %vm1855 = vcmp.eq.s32.totalorder %v1835, 1
        %vm1876 = vcmask 1041408
        %v1877 = vrot.slane %v1796, 6
        %v1878 = vrot.slane %v1797, 6
        %v1879 = vsel %vm1876, %v1877, %v1878
        %v1880 = vrot.slane %v1798, 6
        %v1881 = vsel %vm1876, %v1878, %v1880
        %v1882 = vrot.slane %v1799, 6
        %v1883 = vsel %vm1876, %v1880, %v1882
        %v1884 = vrot.slane %v1800, 6
        %v1885 = vsel %vm1876, %v1882, %v1884
        %v1886 = vrot.slane %v1801, 6
        %v1887 = vsel %vm1876, %v1884, %v1886
        %v1888 = vrot.slane %v1802, 6
        %v1889 = vsel %vm1876, %v1886, %v1888
        %v1890 = vrot.slane %v1803, 6
        %v1891 = vsel %vm1876, %v1888, %v1890
        %v1892 = vrot.slane %v1804, 6
        %v1893 = vsel %vm1876, %v1890, %v1892
        %v1894 = vrot.slane %v1805, 6
        %v1895 = vsel %vm1876, %v1892, %v1894
        %v1896 = vrot.slane %v1806, 6
        %v1897 = vsel %vm1876, %v1894, %v1896
        %v1898 = vrot.slane %v1807, 6
        %v1899 = vsel %vm1876, %v1896, %v1898
        %v1900 = vrot.slane %v1808, 6
        %v1901 = vsel %vm1876, %v1898, %v1900
        %v1902 = vrot.slane %v1809, 6
        %v1903 = vsel %vm1876, %v1900, %v1902
        %v1904 = vrot.slane %v1810, 6
        %v1905 = vsel %vm1876, %v1902, %v1904
        %v1906 = vrot.slane %v1811, 6
        %v1907 = vsel %vm1876, %v1904, %v1906
        %v1908 = vrot.slane %v1812, 6
        %v1909 = vsel %vm1876, %v1906, %v1908
        %v1910 = vrot.slane %v1813, 6
        %v1911 = vsel %vm1876, %v1908, %v1910
        %v1912 = vrot.slane %v1814, 6
        %v1913 = vsel %vm1876, %v1910, %v1912
        %v1914 = vrot.slane %v1815, 6
        %v1915 = vsel %vm1876, %v1912, %v1914
        %v1936 = vsel %vm1836, %v1877, 0.0
        %v1937 = vsel %vm1837, %v1879, 0.0
        %v1938 = vsel %vm1838, %v1881, 0.0
        %v1939 = vsel %vm1839, %v1883, 0.0
        %v1940 = vsel %vm1840, %v1885, 0.0
        %v1941 = vsel %vm1841, %v1887, 0.0
        %v1942 = vsel %vm1842, %v1889, 0.0
        %v1943 = vsel %vm1843, %v1891, 0.0
        %v1944 = vsel %vm1844, %v1893, 0.0
        %v1945 = vsel %vm1845, %v1895, 0.0
        %v1946 = vsel %vm1846, %v1897, 0.0
        %v1947 = vsel %vm1847, %v1899, 0.0
        %v1948 = vsel %vm1848, %v1901, 0.0
        %v1949 = vsel %vm1849, %v1903, 0.0
        %v1950 = vsel %vm1850, %v1905, 0.0
        %v1951 = vsel %vm1851, %v1907, 0.0
        %v1952 = vsel %vm1852, %v1909, 0.0
        %v1953 = vsel %vm1853, %v1911, 0.0
        %v1954 = vsel %vm1854, %v1913, 0.0
        %v1955 = vsel %vm1855, %v1915, 0.0
        %v1956 = vpack.c.bf16 %v1936, %v1936
        %v1957 = vpack.c.bf16 %v1937, %v1937
        %v1958 = vpack.c.bf16 %v1938, %v1938
        %v1959 = vpack.c.bf16 %v1939, %v1939
        %v1960 = vpack.c.bf16 %v1940, %v1940
        %v1961 = vpack.c.bf16 %v1941, %v1941
        %v1962 = vpack.c.bf16 %v1942, %v1942
        %v1963 = vpack.c.bf16 %v1943, %v1943
        %v1964 = vpack.c.bf16 %v1944, %v1944
        %v1965 = vpack.c.bf16 %v1945, %v1945
        %v1966 = vpack.c.bf16 %v1946, %v1946
        %v1967 = vpack.c.bf16 %v1947, %v1947
        %v1968 = vpack.c.bf16 %v1948, %v1948
        %v1969 = vpack.c.bf16 %v1949, %v1949
        %v1970 = vpack.c.bf16 %v1950, %v1950
        %v1971 = vpack.c.bf16 %v1951, %v1951
        %v1972 = vpack.c.bf16 %v1952, %v1952
        %v1973 = vpack.c.bf16 %v1953, %v1953
        %v1974 = vpack.c.bf16 %v1954, %v1954
        %v1975 = vpack.c.bf16 %v1955, %v1955
        %v1976 = vld [vmem:[#allocation7] sm:$0xf]
        %v1977 = vld [vmem:[#allocation7 + $0x4] sm:$0xf]
        %v1978 = vld [vmem:[#allocation7 + $0x8] sm:$0xf]
        %v1979 = vld [vmem:[#allocation7 + $0xc] sm:$0xf]
        %v1980 = vld [vmem:[#allocation7 + $0x10] sm:$0xf]
        %v1981 = vld [vmem:[#allocation7 + $0x14] sm:$0xf]
        %v1982 = vld [vmem:[#allocation7 + $0x18] sm:$0xf]
        %v1983 = vld [vmem:[#allocation7 + $0x1c] sm:$0xf]
        %v1984 = vld [vmem:[#allocation7 + $0x20] sm:$0xf]
        %v1985 = vld [vmem:[#allocation7 + $0x24] sm:$0xf]
        %v1986 = vld [vmem:[#allocation7 + $0x28] sm:$0xf]
        %v1987 = vld [vmem:[#allocation7 + $0x2c] sm:$0xf]
        %v1988 = vld [vmem:[#allocation7 + $0x30] sm:$0xf]
        %v1989 = vld [vmem:[#allocation7 + $0x34] sm:$0xf]
        %v1990 = vld [vmem:[#allocation7 + $0x38] sm:$0xf]
        %v1991 = vld [vmem:[#allocation7 + $0x3c] sm:$0xf]
        %s1992 = scalar_lea.vmem [#allocation7], 64
        %v1993 = vld [vmem:[%s1992] sm:$0xf]
        %v1994 = vld [vmem:[%s1992 + $0x4] sm:$0xf]
        %v1995 = vld [vmem:[%s1992 + $0x8] sm:$0xf]
        %v1996 = vld [vmem:[%s1992 + $0xc] sm:$0xf]
        %v1997 = vld [vmem:[%s1992 + $0x10] sm:$0xf]
        %v1998 = vld [vmem:[%s1992 + $0x14] sm:$0xf]
        %v1999 = vld [vmem:[%s1992 + $0x18] sm:$0xf]
        %v2000 = vld [vmem:[%s1992 + $0x1c] sm:$0xf]
        %v2001 = vld [vmem:[%s1992 + $0x20] sm:$0xf]
        %v2002 = vld [vmem:[%s1992 + $0x24] sm:$0xf]
        %v2003 = vld [vmem:[%s1992 + $0x28] sm:$0xf]
        %v2004 = vld [vmem:[%s1992 + $0x2c] sm:$0xf]
        %v2005 = vld [vmem:[%s1992 + $0x30] sm:$0xf]
        %v2006 = vld [vmem:[%s1992 + $0x34] sm:$0xf]
        %v2007 = vld [vmem:[%s1992 + $0x38] sm:$0xf]
        %v2008 = vld [vmem:[%s1992 + $0x3c] sm:$0xf]
        %v2029 = vunpack.c.l.b16 %v1956
        %v2030 = vunpack.c.l.b16 %v1957
        %v2031 = vunpack.c.l.b16 %v1958
        %v2032 = vunpack.c.l.b16 %v1959
        %v2033 = vunpack.c.l.b16 %v1960
        %v2034 = vunpack.c.l.b16 %v1961
        %v2035 = vunpack.c.l.b16 %v1962
        %v2036 = vunpack.c.l.b16 %v1963
        %v2037 = vunpack.c.l.b16 %v1964
        %v2038 = vunpack.c.l.b16 %v1965
        %v2039 = vunpack.c.l.b16 %v1966
        %v2040 = vunpack.c.l.b16 %v1967
        %v2041 = vunpack.c.l.b16 %v1968
        %v2042 = vunpack.c.l.b16 %v1969
        %v2043 = vunpack.c.l.b16 %v1970
        %v2044 = vunpack.c.l.b16 %v1971
        %v2045 = vunpack.c.l.b16 %v1972
        %v2046 = vunpack.c.l.b16 %v1973
        %v2047 = vunpack.c.l.b16 %v1974
        %v2048 = vunpack.c.l.b16 %v1975
        %v2049 = vpack.c.b16 %v2030, %v2029
        %v2050 = vpack.c.b16 %v2032, %v2031
        %v2051 = vpack.c.b16 %v2034, %v2033
        %v2052 = vpack.c.b16 %v2036, %v2035
        %v2053 = vpack.c.b16 %v2038, %v2037
        %v2054 = vpack.c.b16 %v2040, %v2039
        %v2055 = vpack.c.b16 %v2042, %v2041
        %v2056 = vpack.c.b16 %v2044, %v2043
        %v2057 = vpack.c.b16 %v2046, %v2045
        %v2058 = vpack.c.b16 %v2048, %v2047
        %v2060 = vshrl.u32 %v2049, 16
        %v2062 = vrot.slane %v2060, 1
        %v2063 = vshll.u32 %v2049, 16
        %v2065 = vrot.slane %v2063, 2
        %v2066 = vor.u32 %v2062, %v2065
        %v2068 = vshrl.u32 %v2050, 16
        %v2070 = vrot.slane %v2068, 1
        %v2071 = vshll.u32 %v2050, 16
        %v2073 = vrot.slane %v2071, 2
        %v2074 = vor.u32 %v2070, %v2073
        %v2075 = vsel %vm1397, %v2066, %v2074
        %v2077 = vshrl.u32 %v2051, 16
        %v2079 = vrot.slane %v2077, 1
        %v2080 = vshll.u32 %v2051, 16
        %v2082 = vrot.slane %v2080, 2
        %v2083 = vor.u32 %v2079, %v2082
        %v2084 = vsel %vm1397, %v2074, %v2083
        %v2086 = vshrl.u32 %v2052, 16
        %v2088 = vrot.slane %v2086, 1
        %v2089 = vshll.u32 %v2052, 16
        %v2091 = vrot.slane %v2089, 2
        %v2092 = vor.u32 %v2088, %v2091
        %v2093 = vsel %vm1397, %v2083, %v2092
        %v2095 = vshrl.u32 %v2053, 16
        %v2097 = vrot.slane %v2095, 1
        %v2098 = vshll.u32 %v2053, 16
        %v2100 = vrot.slane %v2098, 2
        %v2101 = vor.u32 %v2097, %v2100
        %v2102 = vsel %vm1397, %v2092, %v2101
        %v2104 = vshrl.u32 %v2054, 16
        %v2106 = vrot.slane %v2104, 1
        %v2107 = vshll.u32 %v2054, 16
        %v2109 = vrot.slane %v2107, 2
        %v2110 = vor.u32 %v2106, %v2109
        %v2111 = vsel %vm1397, %v2101, %v2110
        %v2113 = vshrl.u32 %v2055, 16
        %v2115 = vrot.slane %v2113, 1
        %v2116 = vshll.u32 %v2055, 16
        %v2118 = vrot.slane %v2116, 2
        %v2119 = vor.u32 %v2115, %v2118
        %v2120 = vsel %vm1397, %v2110, %v2119
        %v2122 = vshrl.u32 %v2056, 16
        %v2124 = vrot.slane %v2122, 1
        %v2125 = vshll.u32 %v2056, 16
        %v2127 = vrot.slane %v2125, 2
        %v2128 = vor.u32 %v2124, %v2127
        %v2129 = vsel %vm1397, %v2119, %v2128
        %v2131 = vshrl.u32 %v2057, 16
        %v2133 = vrot.slane %v2131, 1
        %v2134 = vshll.u32 %v2057, 16
        %v2136 = vrot.slane %v2134, 2
        %v2137 = vor.u32 %v2133, %v2136
        %v2138 = vsel %vm1397, %v2128, %v2137
        %v2140 = vshrl.u32 %v2058, 16
        %v2142 = vrot.slane %v2140, 1
        %v2143 = vshll.u32 %v2058, 16
        %v2145 = vrot.slane %v2143, 2
        %v2146 = vor.u32 %v2142, %v2145
        %v2147 = vsel %vm1397, %v2137, %v2146
        %v2174 = vunpack.c.l.b16 %v1993
        %v2175 = vunpack.c.l.b16 %v1994
        %v2176 = vunpack.c.l.b16 %v1995
        %v2177 = vunpack.c.l.b16 %v1996
        %v2178 = vunpack.c.l.b16 %v1997
        %v2179 = vunpack.c.l.b16 %v1998
        %v2180 = vunpack.c.l.b16 %v1999
        %v2181 = vunpack.c.l.b16 %v2000
        %v2182 = vunpack.c.l.b16 %v2001
        %v2183 = vunpack.c.l.b16 %v2002
        %v2184 = vunpack.c.l.b16 %v2003
        %v2185 = vunpack.c.l.b16 %v2004
        %v2186 = vunpack.c.l.b16 %v2005
        %v2187 = vunpack.c.l.b16 %v2006
        %v2188 = vunpack.c.l.b16 %v2007
        %v2189 = vunpack.c.l.b16 %v2008
        %v2190 = vpack.c.b16 %v2175, %v2174
        %v2191 = vpack.c.b16 %v2177, %v2176
        %v2192 = vpack.c.b16 %v2179, %v2178
        %v2193 = vpack.c.b16 %v2181, %v2180
        %v2194 = vpack.c.b16 %v2183, %v2182
        %v2195 = vpack.c.b16 %v2185, %v2184
        %v2196 = vpack.c.b16 %v2187, %v2186
        %v2197 = vpack.c.b16 %v2189, %v2188
        %2206 = vmatpush.bf16.msra.mxu0 %v2197
        %2207 = vmatpush.bf16.msra.mxu0 %v2196
        %2208 = vmatpush.bf16.msra.mxu0 %v2195
        %2209 = vmatpush.bf16.msra.mxu0 %v2194
        %2210 = vmatpush.bf16.msra.mxu0 %v2193
        %2211 = vmatpush.bf16.msra.mxu0 %v2192
        %2212 = vmatpush.bf16.msra.mxu0 %v2191
        %2213 = vmatpush.bf16.msra.mxu0 %v2190
        %2214 = vmatmul.bf16.gmra.mxu0 %v2075
        %v2215 = vpop.f32.mrf.mxu0
        %v2216 = vadd.f32 0.0, %v2215
        %v2217 = vpop.f32.mrf.mxu0
        %v2218 = vadd.f32 0.0, %v2217
        %2219 = vmatmul.bf16.gmra.mxu0 %v2084
        %v2220 = vpop.f32.mrf.mxu0
        %v2221 = vadd.f32 0.0, %v2220
        %v2222 = vpop.f32.mrf.mxu0
        %v2223 = vadd.f32 0.0, %v2222
        %2224 = vmatmul.bf16.gmra.mxu0 %v2093
        %v2225 = vpop.f32.mrf.mxu0
        %v2226 = vadd.f32 0.0, %v2225
        %v2227 = vpop.f32.mrf.mxu0
        %v2228 = vadd.f32 0.0, %v2227
        %2229 = vmatmul.bf16.gmra.mxu0 %v2102
        %v2230 = vpop.f32.mrf.mxu0
        %v2231 = vadd.f32 0.0, %v2230
        %v2232 = vpop.f32.mrf.mxu0
        %v2233 = vadd.f32 0.0, %v2232
        %2234 = vmatmul.bf16.gmra.mxu0 %v2111
        %v2235 = vpop.f32.mrf.mxu0
        %v2236 = vadd.f32 0.0, %v2235
        %v2237 = vpop.f32.mrf.mxu0
        %v2238 = vadd.f32 0.0, %v2237
        %2239 = vmatmul.bf16.gmra.mxu0 %v2120
        %v2240 = vpop.f32.mrf.mxu0
        %v2241 = vadd.f32 0.0, %v2240
        %v2242 = vpop.f32.mrf.mxu0
        %v2243 = vadd.f32 0.0, %v2242
        %2244 = vmatmul.bf16.gmra.mxu0 %v2129
        %v2245 = vpop.f32.mrf.mxu0
        %v2246 = vadd.f32 0.0, %v2245
        %v2247 = vpop.f32.mrf.mxu0
        %v2248 = vadd.f32 0.0, %v2247
        %2249 = vmatmul.bf16.gmra.mxu0 %v2138
        %v2250 = vpop.f32.mrf.mxu0
        %v2251 = vadd.f32 0.0, %v2250
        %v2252 = vpop.f32.mrf.mxu0
        %v2253 = vadd.f32 0.0, %v2252
        %2254 = vmatmul.bf16.gmra.mxu0 %v2147
        %v2255 = vpop.f32.mrf.mxu0
        %v2256 = vadd.f32 0.0, %v2255
        %v2257 = vpop.f32.mrf.mxu0
        %v2258 = vadd.f32 0.0, %v2257
        %2259 = vmatmul.bf16.gmra.mxu0 %v2146
        %v2260 = vpop.f32.mrf.mxu0
        %v2261 = vadd.f32 0.0, %v2260
        %v2262 = vpop.f32.mrf.mxu0
        %2263 = vdwg.mxu0
        %v2264 = vrot.slane %v2049, 1
        %v2265 = vrot.slane %v2050, 1
        %v2266 = vsel %vm1223, %v2264, %v2265
        %v2267 = vrot.slane %v2051, 1
        %v2268 = vsel %vm1223, %v2265, %v2267
        %v2269 = vrot.slane %v2052, 1
        %v2270 = vsel %vm1223, %v2267, %v2269
        %v2271 = vrot.slane %v2053, 1
        %v2272 = vsel %vm1223, %v2269, %v2271
        %v2273 = vrot.slane %v2054, 1
        %v2274 = vsel %vm1223, %v2271, %v2273
        %v2275 = vrot.slane %v2055, 1
        %v2276 = vsel %vm1223, %v2273, %v2275
        %v2277 = vrot.slane %v2056, 1
        %v2278 = vsel %vm1223, %v2275, %v2277
        %v2279 = vrot.slane %v2057, 1
        %v2280 = vsel %vm1223, %v2277, %v2279
        %v2281 = vrot.slane %v2058, 1
        %v2282 = vsel %vm1223, %v2279, %v2281
        %v2309 = vunpack.c.l.b16 %v1976
        %v2310 = vunpack.c.l.b16 %v1977
        %v2311 = vunpack.c.l.b16 %v1978
        %v2312 = vunpack.c.l.b16 %v1979
        %v2313 = vunpack.c.l.b16 %v1980
        %v2314 = vunpack.c.l.b16 %v1981
        %v2315 = vunpack.c.l.b16 %v1982
        %v2316 = vunpack.c.l.b16 %v1983
        %v2317 = vunpack.c.l.b16 %v1984
        %v2318 = vunpack.c.l.b16 %v1985
        %v2319 = vunpack.c.l.b16 %v1986
        %v2320 = vunpack.c.l.b16 %v1987
        %v2321 = vunpack.c.l.b16 %v1988
        %v2322 = vunpack.c.l.b16 %v1989
        %v2323 = vunpack.c.l.b16 %v1990
        %v2324 = vunpack.c.l.b16 %v1991
        %v2325 = vpack.c.b16 %v2310, %v2309
        %v2326 = vpack.c.b16 %v2312, %v2311
        %v2327 = vpack.c.b16 %v2314, %v2313
        %v2328 = vpack.c.b16 %v2316, %v2315
        %v2329 = vpack.c.b16 %v2318, %v2317
        %v2330 = vpack.c.b16 %v2320, %v2319
        %v2331 = vpack.c.b16 %v2322, %v2321
        %v2332 = vpack.c.b16 %v2324, %v2323
        %2341 = vmatpush.bf16.msra.mxu0 %v2332
        %2342 = vmatpush.bf16.msra.mxu0 %v2331
        %2343 = vmatpush.bf16.msra.mxu0 %v2330
        %2344 = vmatpush.bf16.msra.mxu0 %v2329
        %2345 = vmatpush.bf16.msra.mxu0 %v2328
        %2346 = vmatpush.bf16.msra.mxu0 %v2327
        %2347 = vmatpush.bf16.msra.mxu0 %v2326
        %2348 = vmatpush.bf16.msra.mxu0 %v2325
        %2349 = vmatmul.bf16.gmra.mxu0 %v2266
        %v2350 = vpop.f32.mrf.mxu0
        %v2351 = vadd.f32 %v2216, %v2350
        %v2352 = vpop.f32.mrf.mxu0
        %v2353 = vadd.f32 %v2218, %v2352
        %2354 = vmatmul.bf16.gmra.mxu0 %v2268
        %v2355 = vpop.f32.mrf.mxu0
        %v2356 = vadd.f32 %v2221, %v2355
        %v2357 = vpop.f32.mrf.mxu0
        %v2358 = vadd.f32 %v2223, %v2357
        %2359 = vmatmul.bf16.gmra.mxu0 %v2270
        %v2360 = vpop.f32.mrf.mxu0
        %v2361 = vadd.f32 %v2226, %v2360
        %v2362 = vpop.f32.mrf.mxu0
        %v2363 = vadd.f32 %v2228, %v2362
        %2364 = vmatmul.bf16.gmra.mxu0 %v2272
        %v2365 = vpop.f32.mrf.mxu0
        %v2366 = vadd.f32 %v2231, %v2365
        %v2367 = vpop.f32.mrf.mxu0
        %v2368 = vadd.f32 %v2233, %v2367
        %2369 = vmatmul.bf16.gmra.mxu0 %v2274
        %v2370 = vpop.f32.mrf.mxu0
        %v2371 = vadd.f32 %v2236, %v2370
        %v2372 = vpop.f32.mrf.mxu0
        %v2373 = vadd.f32 %v2238, %v2372
        %2374 = vmatmul.bf16.gmra.mxu0 %v2276
        %v2375 = vpop.f32.mrf.mxu0
        %v2376 = vadd.f32 %v2241, %v2375
        %v2377 = vpop.f32.mrf.mxu0
        %v2378 = vadd.f32 %v2243, %v2377
        %2379 = vmatmul.bf16.gmra.mxu0 %v2278
        %v2380 = vpop.f32.mrf.mxu0
        %v2381 = vadd.f32 %v2246, %v2380
        %v2382 = vpop.f32.mrf.mxu0
        %v2383 = vadd.f32 %v2248, %v2382
        %2384 = vmatmul.bf16.gmra.mxu0 %v2280
        %v2385 = vpop.f32.mrf.mxu0
        %v2386 = vadd.f32 %v2251, %v2385
        %v2387 = vpop.f32.mrf.mxu0
        %v2388 = vadd.f32 %v2253, %v2387
        %2389 = vmatmul.bf16.gmra.mxu0 %v2282
        %v2390 = vpop.f32.mrf.mxu0
        %v2391 = vadd.f32 %v2256, %v2390
        %v2392 = vpop.f32.mrf.mxu0
        %v2393 = vadd.f32 %v2258, %v2392
        %2394 = vmatmul.bf16.gmra.mxu0 %v2281
        %v2395 = vpop.f32.mrf.mxu0
        %v2396 = vadd.f32 %v2261, %v2395
        %v2397 = vpop.f32.mrf.mxu0
        %2398 = vdwg.mxu0
        %s2399 = scalar_lea.vmem [#allocation7], 128
        %v2400 = vld [vmem:[%s2399] sm:$0xf]
        %v2401 = vld [vmem:[%s2399 + $0x4] sm:$0xf]
        %v2402 = vld [vmem:[%s2399 + $0x8] sm:$0xf]
        %v2403 = vld [vmem:[%s2399 + $0xc] sm:$0xf]
        %v2404 = vld [vmem:[%s2399 + $0x10] sm:$0xf]
        %v2405 = vld [vmem:[%s2399 + $0x14] sm:$0xf]
        %v2406 = vld [vmem:[%s2399 + $0x18] sm:$0xf]
        %v2407 = vld [vmem:[%s2399 + $0x1c] sm:$0xf]
        %v2408 = vld [vmem:[%s2399 + $0x20] sm:$0xf]
        %v2409 = vld [vmem:[%s2399 + $0x24] sm:$0xf]
        %v2410 = vld [vmem:[%s2399 + $0x28] sm:$0xf]
        %v2411 = vld [vmem:[%s2399 + $0x2c] sm:$0xf]
        %v2412 = vld [vmem:[%s2399 + $0x30] sm:$0xf]
        %v2413 = vld [vmem:[%s2399 + $0x34] sm:$0xf]
        %v2414 = vld [vmem:[%s2399 + $0x38] sm:$0xf]
        %v2415 = vld [vmem:[%s2399 + $0x3c] sm:$0xf]
        %v2416 = vrot.slane %v2049, 2
        %v2417 = vrot.slane %v2050, 2
        %v2418 = vsel %vm1591, %v2416, %v2417
        %v2419 = vrot.slane %v2051, 2
        %v2420 = vsel %vm1591, %v2417, %v2419
        %v2421 = vrot.slane %v2052, 2
        %v2422 = vsel %vm1591, %v2419, %v2421
        %v2423 = vrot.slane %v2053, 2
        %v2424 = vsel %vm1591, %v2421, %v2423
        %v2425 = vrot.slane %v2054, 2
        %v2426 = vsel %vm1591, %v2423, %v2425
        %v2427 = vrot.slane %v2055, 2
        %v2428 = vsel %vm1591, %v2425, %v2427
        %v2429 = vrot.slane %v2056, 2
        %v2430 = vsel %vm1591, %v2427, %v2429
        %v2431 = vrot.slane %v2057, 2
        %v2432 = vsel %vm1591, %v2429, %v2431
        %v2433 = vrot.slane %v2058, 2
        %v2434 = vsel %vm1591, %v2431, %v2433
        %v2461 = vunpack.c.l.b16 %v2400
        %v2462 = vunpack.c.l.b16 %v2401
        %v2463 = vunpack.c.l.b16 %v2402
        %v2464 = vunpack.c.l.b16 %v2403
        %v2465 = vunpack.c.l.b16 %v2404
        %v2466 = vunpack.c.l.b16 %v2405
        %v2467 = vunpack.c.l.b16 %v2406
        %v2468 = vunpack.c.l.b16 %v2407
        %v2469 = vunpack.c.l.b16 %v2408
        %v2470 = vunpack.c.l.b16 %v2409
        %v2471 = vunpack.c.l.b16 %v2410
        %v2472 = vunpack.c.l.b16 %v2411
        %v2473 = vunpack.c.l.b16 %v2412
        %v2474 = vunpack.c.l.b16 %v2413
        %v2475 = vunpack.c.l.b16 %v2414
        %v2476 = vunpack.c.l.b16 %v2415
        %v2477 = vpack.c.b16 %v2462, %v2461
        %v2478 = vpack.c.b16 %v2464, %v2463
        %v2479 = vpack.c.b16 %v2466, %v2465
        %v2480 = vpack.c.b16 %v2468, %v2467
        %v2481 = vpack.c.b16 %v2470, %v2469
        %v2482 = vpack.c.b16 %v2472, %v2471
        %v2483 = vpack.c.b16 %v2474, %v2473
        %v2484 = vpack.c.b16 %v2476, %v2475
        %2493 = vmatpush.bf16.msra.mxu0 %v2484
        %2494 = vmatpush.bf16.msra.mxu0 %v2483
        %2495 = vmatpush.bf16.msra.mxu0 %v2482
        %2496 = vmatpush.bf16.msra.mxu0 %v2481
        %2497 = vmatpush.bf16.msra.mxu0 %v2480
        %2498 = vmatpush.bf16.msra.mxu0 %v2479
        %2499 = vmatpush.bf16.msra.mxu0 %v2478
        %2500 = vmatpush.bf16.msra.mxu0 %v2477
        %2501 = vmatmul.bf16.gmra.mxu0 %v2418
        %v2502 = vpop.f32.mrf.mxu0
        %v2503 = vadd.f32 0.0, %v2502
        %v2504 = vpop.f32.mrf.mxu0
        %v2505 = vadd.f32 0.0, %v2504
        %2506 = vmatmul.bf16.gmra.mxu0 %v2420
        %v2507 = vpop.f32.mrf.mxu0
        %v2508 = vadd.f32 0.0, %v2507
        %v2509 = vpop.f32.mrf.mxu0
        %v2510 = vadd.f32 0.0, %v2509
        %2511 = vmatmul.bf16.gmra.mxu0 %v2422
        %v2512 = vpop.f32.mrf.mxu0
        %v2513 = vadd.f32 0.0, %v2512
        %v2514 = vpop.f32.mrf.mxu0
        %v2515 = vadd.f32 0.0, %v2514
        %2516 = vmatmul.bf16.gmra.mxu0 %v2424
        %v2517 = vpop.f32.mrf.mxu0
        %v2518 = vadd.f32 0.0, %v2517
        %v2519 = vpop.f32.mrf.mxu0
        %v2520 = vadd.f32 0.0, %v2519
        %2521 = vmatmul.bf16.gmra.mxu0 %v2426
        %v2522 = vpop.f32.mrf.mxu0
        %v2523 = vadd.f32 0.0, %v2522
        %v2524 = vpop.f32.mrf.mxu0
        %v2525 = vadd.f32 0.0, %v2524
        %2526 = vmatmul.bf16.gmra.mxu0 %v2428
        %v2527 = vpop.f32.mrf.mxu0
        %v2528 = vadd.f32 0.0, %v2527
        %v2529 = vpop.f32.mrf.mxu0
        %v2530 = vadd.f32 0.0, %v2529
        %2531 = vmatmul.bf16.gmra.mxu0 %v2430
        %v2532 = vpop.f32.mrf.mxu0
        %v2533 = vadd.f32 0.0, %v2532
        %v2534 = vpop.f32.mrf.mxu0
        %v2535 = vadd.f32 0.0, %v2534
        %2536 = vmatmul.bf16.gmra.mxu0 %v2432
        %v2537 = vpop.f32.mrf.mxu0
        %v2538 = vadd.f32 0.0, %v2537
        %v2539 = vpop.f32.mrf.mxu0
        %v2540 = vadd.f32 0.0, %v2539
        %2541 = vmatmul.bf16.gmra.mxu0 %v2434
        %v2542 = vpop.f32.mrf.mxu0
        %v2543 = vadd.f32 0.0, %v2542
        %v2544 = vpop.f32.mrf.mxu0
        %v2545 = vadd.f32 0.0, %v2544
        %2546 = vmatmul.bf16.gmra.mxu0 %v2433
        %v2547 = vpop.f32.mrf.mxu0
        %v2548 = vadd.f32 0.0, %v2547
        %v2549 = vpop.f32.mrf.mxu0
        %2550 = vdwg.mxu0
        %v2551 = vadd.f32 %v2351, %v2503
        %v2552 = vadd.f32 %v2353, %v2505
        %v2553 = vadd.f32 %v2356, %v2508
        %v2554 = vadd.f32 %v2358, %v2510
        %v2555 = vadd.f32 %v2361, %v2513
        %v2556 = vadd.f32 %v2363, %v2515
        %v2557 = vadd.f32 %v2366, %v2518
        %v2558 = vadd.f32 %v2368, %v2520
        %v2559 = vadd.f32 %v2371, %v2523
        %v2560 = vadd.f32 %v2373, %v2525
        %v2561 = vadd.f32 %v2376, %v2528
        %v2562 = vadd.f32 %v2378, %v2530
        %v2563 = vadd.f32 %v2381, %v2533
        %v2564 = vadd.f32 %v2383, %v2535
        %v2565 = vadd.f32 %v2386, %v2538
        %v2566 = vadd.f32 %v2388, %v2540
        %v2567 = vadd.f32 %v2391, %v2543
        %v2568 = vadd.f32 %v2393, %v2545
        %v2569 = vadd.f32 %v2396, %v2548
        %s2570 = scalar_lea.vmem [#allocation7], 192
        %v2571 = vld [vmem:[%s2570] sm:$0xf]
        %v2572 = vld [vmem:[%s2570 + $0x4] sm:$0xf]
        %v2573 = vld [vmem:[%s2570 + $0x8] sm:$0xf]
        %v2574 = vld [vmem:[%s2570 + $0xc] sm:$0xf]
        %v2575 = vld [vmem:[%s2570 + $0x10] sm:$0xf]
        %v2576 = vld [vmem:[%s2570 + $0x14] sm:$0xf]
        %v2577 = vld [vmem:[%s2570 + $0x18] sm:$0xf]
        %v2578 = vld [vmem:[%s2570 + $0x1c] sm:$0xf]
        %v2579 = vld [vmem:[%s2570 + $0x20] sm:$0xf]
        %v2580 = vld [vmem:[%s2570 + $0x24] sm:$0xf]
        %v2581 = vld [vmem:[%s2570 + $0x28] sm:$0xf]
        %v2582 = vld [vmem:[%s2570 + $0x2c] sm:$0xf]
        %v2583 = vld [vmem:[%s2570 + $0x30] sm:$0xf]
        %v2584 = vld [vmem:[%s2570 + $0x34] sm:$0xf]
        %v2585 = vld [vmem:[%s2570 + $0x38] sm:$0xf]
        %v2586 = vld [vmem:[%s2570 + $0x3c] sm:$0xf]
        %vm2587 = vsmask.f32 5376
        %v2588 = vrot.slane %v2060, 2
        %v2589 = vrot.slane %v2063, 3
        %v2590 = vor.u32 %v2588, %v2589
        %v2591 = vrot.slane %v2068, 2
        %v2592 = vrot.slane %v2071, 3
        %v2593 = vor.u32 %v2591, %v2592
        %v2594 = vsel %vm2587, %v2590, %v2593
        %v2595 = vrot.slane %v2077, 2
        %v2596 = vrot.slane %v2080, 3
        %v2597 = vor.u32 %v2595, %v2596
        %v2598 = vsel %vm2587, %v2593, %v2597
        %v2599 = vrot.slane %v2086, 2
        %v2600 = vrot.slane %v2089, 3
        %v2601 = vor.u32 %v2599, %v2600
        %v2602 = vsel %vm2587, %v2597, %v2601
        %v2603 = vrot.slane %v2095, 2
        %v2604 = vrot.slane %v2098, 3
        %v2605 = vor.u32 %v2603, %v2604
        %v2606 = vsel %vm2587, %v2601, %v2605
        %v2607 = vrot.slane %v2104, 2
        %v2608 = vrot.slane %v2107, 3
        %v2609 = vor.u32 %v2607, %v2608
        %v2610 = vsel %vm2587, %v2605, %v2609
        %v2611 = vrot.slane %v2113, 2
        %v2612 = vrot.slane %v2116, 3
        %v2613 = vor.u32 %v2611, %v2612
        %v2614 = vsel %vm2587, %v2609, %v2613
        %v2615 = vrot.slane %v2122, 2
        %v2616 = vrot.slane %v2125, 3
        %v2617 = vor.u32 %v2615, %v2616
        %v2618 = vsel %vm2587, %v2613, %v2617
        %v2619 = vrot.slane %v2131, 2
        %v2620 = vrot.slane %v2134, 3
        %v2621 = vor.u32 %v2619, %v2620
        %v2622 = vsel %vm2587, %v2617, %v2621
        %v2623 = vrot.slane %v2140, 2
        %v2624 = vrot.slane %v2143, 3
        %v2625 = vor.u32 %v2623, %v2624
        %v2626 = vsel %vm2587, %v2621, %v2625
        %v2653 = vunpack.c.l.b16 %v2571
        %v2654 = vunpack.c.l.b16 %v2572
        %v2655 = vunpack.c.l.b16 %v2573
        %v2656 = vunpack.c.l.b16 %v2574
        %v2657 = vunpack.c.l.b16 %v2575
        %v2658 = vunpack.c.l.b16 %v2576
        %v2659 = vunpack.c.l.b16 %v2577
        %v2660 = vunpack.c.l.b16 %v2578
        %v2661 = vunpack.c.l.b16 %v2579
        %v2662 = vunpack.c.l.b16 %v2580
        %v2663 = vunpack.c.l.b16 %v2581
        %v2664 = vunpack.c.l.b16 %v2582
        %v2665 = vunpack.c.l.b16 %v2583
        %v2666 = vunpack.c.l.b16 %v2584
        %v2667 = vunpack.c.l.b16 %v2585
        %v2668 = vunpack.c.l.b16 %v2586
        %v2669 = vpack.c.b16 %v2654, %v2653
        %v2670 = vpack.c.b16 %v2656, %v2655
        %v2671 = vpack.c.b16 %v2658, %v2657
        %v2672 = vpack.c.b16 %v2660, %v2659
        %v2673 = vpack.c.b16 %v2662, %v2661
        %v2674 = vpack.c.b16 %v2664, %v2663
        %v2675 = vpack.c.b16 %v2666, %v2665
        %v2676 = vpack.c.b16 %v2668, %v2667
        %2685 = vmatpush.bf16.msra.mxu0 %v2676
        %2686 = vmatpush.bf16.msra.mxu0 %v2675
        %2687 = vmatpush.bf16.msra.mxu0 %v2674
        %2688 = vmatpush.bf16.msra.mxu0 %v2673
        %2689 = vmatpush.bf16.msra.mxu0 %v2672
        %2690 = vmatpush.bf16.msra.mxu0 %v2671
        %2691 = vmatpush.bf16.msra.mxu0 %v2670
        %2692 = vmatpush.bf16.msra.mxu0 %v2669
        %2693 = vmatmul.bf16.gmra.mxu0 %v2594
        %v2694 = vpop.f32.mrf.mxu0
        %v2695 = vadd.f32 0.0, %v2694
        %v2696 = vpop.f32.mrf.mxu0
        %v2697 = vadd.f32 0.0, %v2696
        %2698 = vmatmul.bf16.gmra.mxu0 %v2598
        %v2699 = vpop.f32.mrf.mxu0
        %v2700 = vadd.f32 0.0, %v2699
        %v2701 = vpop.f32.mrf.mxu0
        %v2702 = vadd.f32 0.0, %v2701
        %2703 = vmatmul.bf16.gmra.mxu0 %v2602
        %v2704 = vpop.f32.mrf.mxu0
        %v2705 = vadd.f32 0.0, %v2704
        %v2706 = vpop.f32.mrf.mxu0
        %v2707 = vadd.f32 0.0, %v2706
        %2708 = vmatmul.bf16.gmra.mxu0 %v2606
        %v2709 = vpop.f32.mrf.mxu0
        %v2710 = vadd.f32 0.0, %v2709
        %v2711 = vpop.f32.mrf.mxu0
        %v2712 = vadd.f32 0.0, %v2711
        %2713 = vmatmul.bf16.gmra.mxu0 %v2610
        %v2714 = vpop.f32.mrf.mxu0
        %v2715 = vadd.f32 0.0, %v2714
        %v2716 = vpop.f32.mrf.mxu0
        %v2717 = vadd.f32 0.0, %v2716
        %2718 = vmatmul.bf16.gmra.mxu0 %v2614
        %v2719 = vpop.f32.mrf.mxu0
        %v2720 = vadd.f32 0.0, %v2719
        %v2721 = vpop.f32.mrf.mxu0
        %v2722 = vadd.f32 0.0, %v2721
        %2723 = vmatmul.bf16.gmra.mxu0 %v2618
        %v2724 = vpop.f32.mrf.mxu0
        %v2725 = vadd.f32 0.0, %v2724
        %v2726 = vpop.f32.mrf.mxu0
        %v2727 = vadd.f32 0.0, %v2726
        %2728 = vmatmul.bf16.gmra.mxu0 %v2622
        %v2729 = vpop.f32.mrf.mxu0
        %v2730 = vadd.f32 0.0, %v2729
        %v2731 = vpop.f32.mrf.mxu0
        %v2732 = vadd.f32 0.0, %v2731
        %2733 = vmatmul.bf16.gmra.mxu0 %v2626
        %v2734 = vpop.f32.mrf.mxu0
        %v2735 = vadd.f32 0.0, %v2734
        %v2736 = vpop.f32.mrf.mxu0
        %v2737 = vadd.f32 0.0, %v2736
        %2738 = vmatmul.bf16.gmra.mxu0 %v2625
        %v2739 = vpop.f32.mrf.mxu0
        %v2740 = vadd.f32 0.0, %v2739
        %v2741 = vpop.f32.mrf.mxu0
        %2742 = vdwg.mxu0
        %v2743 = vadd.f32 %v2551, %v2695
        %v2744 = vadd.f32 %v2552, %v2697
        %v2745 = vadd.f32 %v2553, %v2700
        %v2746 = vadd.f32 %v2554, %v2702
        %v2747 = vadd.f32 %v2555, %v2705
        %v2748 = vadd.f32 %v2556, %v2707
        %v2749 = vadd.f32 %v2557, %v2710
        %v2750 = vadd.f32 %v2558, %v2712
        %v2751 = vadd.f32 %v2559, %v2715
        %v2752 = vadd.f32 %v2560, %v2717
        %v2753 = vadd.f32 %v2561, %v2720
        %v2754 = vadd.f32 %v2562, %v2722
        %v2755 = vadd.f32 %v2563, %v2725
        %v2756 = vadd.f32 %v2564, %v2727
        %v2757 = vadd.f32 %v2565, %v2730
        %v2758 = vadd.f32 %v2566, %v2732
        %v2759 = vadd.f32 %v2567, %v2735
        %v2760 = vadd.f32 %v2568, %v2737
        %v2761 = vadd.f32 %v2569, %v2740
        %s2762 = scalar_lea.vmem [#allocation7], 256
        %v2763 = vld [vmem:[%s2762] sm:$0xf]
        %v2764 = vld [vmem:[%s2762 + $0x4] sm:$0xf]
        %v2765 = vld [vmem:[%s2762 + $0x8] sm:$0xf]
        %v2766 = vld [vmem:[%s2762 + $0xc] sm:$0xf]
        %v2767 = vld [vmem:[%s2762 + $0x10] sm:$0xf]
        %v2768 = vld [vmem:[%s2762 + $0x14] sm:$0xf]
        %v2769 = vld [vmem:[%s2762 + $0x18] sm:$0xf]
        %v2770 = vld [vmem:[%s2762 + $0x1c] sm:$0xf]
        %v2771 = vld [vmem:[%s2762 + $0x20] sm:$0xf]
        %v2772 = vld [vmem:[%s2762 + $0x24] sm:$0xf]
        %v2773 = vld [vmem:[%s2762 + $0x28] sm:$0xf]
        %v2774 = vld [vmem:[%s2762 + $0x2c] sm:$0xf]
        %v2775 = vld [vmem:[%s2762 + $0x30] sm:$0xf]
        %v2776 = vld [vmem:[%s2762 + $0x34] sm:$0xf]
        %v2777 = vld [vmem:[%s2762 + $0x38] sm:$0xf]
        %v2778 = vld [vmem:[%s2762 + $0x3c] sm:$0xf]
        %vm2779 = vcmask 1044480
        %v2780 = vrot.slane %v2049, 3
        %v2781 = vrot.slane %v2050, 3
        %v2782 = vsel %vm2779, %v2780, %v2781
        %v2783 = vrot.slane %v2051, 3
        %v2784 = vsel %vm2779, %v2781, %v2783
        %v2785 = vrot.slane %v2052, 3
        %v2786 = vsel %vm2779, %v2783, %v2785
        %v2787 = vrot.slane %v2053, 3
        %v2788 = vsel %vm2779, %v2785, %v2787
        %v2789 = vrot.slane %v2054, 3
        %v2790 = vsel %vm2779, %v2787, %v2789
        %v2791 = vrot.slane %v2055, 3
        %v2792 = vsel %vm2779, %v2789, %v2791
        %v2793 = vrot.slane %v2056, 3
        %v2794 = vsel %vm2779, %v2791, %v2793
        %v2795 = vrot.slane %v2057, 3
        %v2796 = vsel %vm2779, %v2793, %v2795
        %v2797 = vrot.slane %v2058, 3
        %v2798 = vsel %vm2779, %v2795, %v2797
        %v2825 = vunpack.c.l.b16 %v2763
        %v2826 = vunpack.c.l.b16 %v2764
        %v2827 = vunpack.c.l.b16 %v2765
        %v2828 = vunpack.c.l.b16 %v2766
        %v2829 = vunpack.c.l.b16 %v2767
        %v2830 = vunpack.c.l.b16 %v2768
        %v2831 = vunpack.c.l.b16 %v2769
        %v2832 = vunpack.c.l.b16 %v2770
        %v2833 = vunpack.c.l.b16 %v2771
        %v2834 = vunpack.c.l.b16 %v2772
        %v2835 = vunpack.c.l.b16 %v2773
        %v2836 = vunpack.c.l.b16 %v2774
        %v2837 = vunpack.c.l.b16 %v2775
        %v2838 = vunpack.c.l.b16 %v2776
        %v2839 = vunpack.c.l.b16 %v2777
        %v2840 = vunpack.c.l.b16 %v2778
        %v2841 = vpack.c.b16 %v2826, %v2825
        %v2842 = vpack.c.b16 %v2828, %v2827
        %v2843 = vpack.c.b16 %v2830, %v2829
        %v2844 = vpack.c.b16 %v2832, %v2831
        %v2845 = vpack.c.b16 %v2834, %v2833
        %v2846 = vpack.c.b16 %v2836, %v2835
        %v2847 = vpack.c.b16 %v2838, %v2837
        %v2848 = vpack.c.b16 %v2840, %v2839
        %2857 = vmatpush.bf16.msra.mxu0 %v2848
        %2858 = vmatpush.bf16.msra.mxu0 %v2847
        %2859 = vmatpush.bf16.msra.mxu0 %v2846
        %2860 = vmatpush.bf16.msra.mxu0 %v2845
        %2861 = vmatpush.bf16.msra.mxu0 %v2844
        %2862 = vmatpush.bf16.msra.mxu0 %v2843
        %2863 = vmatpush.bf16.msra.mxu0 %v2842
        %2864 = vmatpush.bf16.msra.mxu0 %v2841
        %2865 = vmatmul.bf16.gmra.mxu0 %v2782
        %v2866 = vpop.f32.mrf.mxu0
        %v2867 = vadd.f32 0.0, %v2866
        %v2868 = vpop.f32.mrf.mxu0
        %v2869 = vadd.f32 0.0, %v2868
        %2870 = vmatmul.bf16.gmra.mxu0 %v2784
        %v2871 = vpop.f32.mrf.mxu0
        %v2872 = vadd.f32 0.0, %v2871
        %v2873 = vpop.f32.mrf.mxu0
        %v2874 = vadd.f32 0.0, %v2873
        %2875 = vmatmul.bf16.gmra.mxu0 %v2786
        %v2876 = vpop.f32.mrf.mxu0
        %v2877 = vadd.f32 0.0, %v2876
        %v2878 = vpop.f32.mrf.mxu0
        %v2879 = vadd.f32 0.0, %v2878
        %2880 = vmatmul.bf16.gmra.mxu0 %v2788
        %v2881 = vpop.f32.mrf.mxu0
        %v2882 = vadd.f32 0.0, %v2881
        %v2883 = vpop.f32.mrf.mxu0
        %v2884 = vadd.f32 0.0, %v2883
        %2885 = vmatmul.bf16.gmra.mxu0 %v2790
        %v2886 = vpop.f32.mrf.mxu0
        %v2887 = vadd.f32 0.0, %v2886
        %v2888 = vpop.f32.mrf.mxu0
        %v2889 = vadd.f32 0.0, %v2888
        %2890 = vmatmul.bf16.gmra.mxu0 %v2792
        %v2891 = vpop.f32.mrf.mxu0
        %v2892 = vadd.f32 0.0, %v2891
        %v2893 = vpop.f32.mrf.mxu0
        %v2894 = vadd.f32 0.0, %v2893
        %2895 = vmatmul.bf16.gmra.mxu0 %v2794
        %v2896 = vpop.f32.mrf.mxu0
        %v2897 = vadd.f32 0.0, %v2896
        %v2898 = vpop.f32.mrf.mxu0
        %v2899 = vadd.f32 0.0, %v2898
        %2900 = vmatmul.bf16.gmra.mxu0 %v2796
        %v2901 = vpop.f32.mrf.mxu0
        %v2902 = vadd.f32 0.0, %v2901
        %v2903 = vpop.f32.mrf.mxu0
        %v2904 = vadd.f32 0.0, %v2903
        %2905 = vmatmul.bf16.gmra.mxu0 %v2798
        %v2906 = vpop.f32.mrf.mxu0
        %v2907 = vadd.f32 0.0, %v2906
        %v2908 = vpop.f32.mrf.mxu0
        %v2909 = vadd.f32 0.0, %v2908
        %2910 = vmatmul.bf16.gmra.mxu0 %v2797
        %v2911 = vpop.f32.mrf.mxu0
        %v2912 = vadd.f32 0.0, %v2911
        %v2913 = vpop.f32.mrf.mxu0
        %2914 = vdwg.mxu0
        %v2915 = vadd.f32 %v2743, %v2867
        %v2916 = vadd.f32 %v2744, %v2869
        %v2917 = vadd.f32 %v2745, %v2872
        %v2918 = vadd.f32 %v2746, %v2874
        %v2919 = vadd.f32 %v2747, %v2877
        %v2920 = vadd.f32 %v2748, %v2879
        %v2921 = vadd.f32 %v2749, %v2882
        %v2922 = vadd.f32 %v2750, %v2884
        %v2923 = vadd.f32 %v2751, %v2887
        %v2924 = vadd.f32 %v2752, %v2889
        %v2925 = vadd.f32 %v2753, %v2892
        %v2926 = vadd.f32 %v2754, %v2894
        %v2927 = vadd.f32 %v2755, %v2897
        %v2928 = vadd.f32 %v2756, %v2899
        %v2929 = vadd.f32 %v2757, %v2902
        %v2930 = vadd.f32 %v2758, %v2904
        %v2931 = vadd.f32 %v2759, %v2907
        %v2932 = vadd.f32 %v2760, %v2909
        %v2933 = vadd.f32 %v2761, %v2912
        %v2934 = vld [vmem:[%s5] sm:$0x1]
        %v2936 = vperm.slane %v2934, 0
        %v2938 = vmul.f32 %v2915, %v2936
        %v2939 = vmul.f32 %v2916, %v2936
        %v2940 = vmul.f32 %v2917, %v2936
        %v2941 = vmul.f32 %v2918, %v2936
        %v2942 = vmul.f32 %v2919, %v2936
        %v2943 = vmul.f32 %v2920, %v2936
        %v2944 = vmul.f32 %v2921, %v2936
        %v2945 = vmul.f32 %v2922, %v2936
        %v2946 = vmul.f32 %v2923, %v2936
        %v2947 = vmul.f32 %v2924, %v2936
        %v2948 = vmul.f32 %v2925, %v2936
        %v2949 = vmul.f32 %v2926, %v2936
        %v2950 = vmul.f32 %v2927, %v2936
        %v2951 = vmul.f32 %v2928, %v2936
        %v2952 = vmul.f32 %v2929, %v2936
        %v2953 = vmul.f32 %v2930, %v2936
        %v2954 = vmul.f32 %v2931, %v2936
        %v2955 = vmul.f32 %v2932, %v2936
        %v2956 = vmul.f32 %v2933, %v2936
        %v2957 = vld [vmem:[%s6] sm:$0x1]
        %v2959 = vperm.slane %v2957, 0
        %v2961 = vadd.f32 %v2938, %v2959
        %v2962 = vadd.f32 %v2939, %v2959
        %v2963 = vadd.f32 %v2940, %v2959
        %v2964 = vadd.f32 %v2941, %v2959
        %v2965 = vadd.f32 %v2942, %v2959
        %v2966 = vadd.f32 %v2943, %v2959
        %v2967 = vadd.f32 %v2944, %v2959
        %v2968 = vadd.f32 %v2945, %v2959
        %v2969 = vadd.f32 %v2946, %v2959
        %v2970 = vadd.f32 %v2947, %v2959
        %v2971 = vadd.f32 %v2948, %v2959
        %v2972 = vadd.f32 %v2949, %v2959
        %v2973 = vadd.f32 %v2950, %v2959
        %v2974 = vadd.f32 %v2951, %v2959
        %v2975 = vadd.f32 %v2952, %v2959
        %v2976 = vadd.f32 %v2953, %v2959
        %v2977 = vadd.f32 %v2954, %v2959
        %v2978 = vadd.f32 %v2955, %v2959
        %v2979 = vadd.f32 %v2956, %v2959
        %v2980 = vtanh.pop %v2961
        %v2981 = vtanh.pop %v2962
        %v2982 = vtanh.pop %v2963
        %v2983 = vtanh.pop %v2964
        %v2984 = vtanh.pop %v2965
        %v2985 = vtanh.pop %v2966
        %v2986 = vtanh.pop %v2967
        %v2987 = vtanh.pop %v2968
        %v2988 = vtanh.pop %v2969
        %v2989 = vtanh.pop %v2970
        %v2990 = vtanh.pop %v2971
        %v2991 = vtanh.pop %v2972
        %v2992 = vtanh.pop %v2973
        %v2993 = vtanh.pop %v2974
        %v2994 = vtanh.pop %v2975
        %v2995 = vtanh.pop %v2976
        %v2996 = vtanh.pop %v2977
        %v2997 = vtanh.pop %v2978
        %v2998 = vtanh.pop %v2979
        %vm3018 = vcmask 1043456
        %v3019 = vrot.slane %v2980, 4
        %v3020 = vrot.slane %v2981, 4
        %v3021 = vsel %vm3018, %v3019, %v3020
        %v3022 = vrot.slane %v2982, 4
        %v3023 = vsel %vm3018, %v3020, %v3022
        %v3024 = vrot.slane %v2983, 4
        %v3025 = vsel %vm3018, %v3022, %v3024
        %v3026 = vrot.slane %v2984, 4
        %v3027 = vsel %vm3018, %v3024, %v3026
        %v3028 = vrot.slane %v2985, 4
        %v3029 = vsel %vm3018, %v3026, %v3028
        %v3030 = vrot.slane %v2986, 4
        %v3031 = vsel %vm3018, %v3028, %v3030
        %v3032 = vrot.slane %v2987, 4
        %v3033 = vsel %vm3018, %v3030, %v3032
        %v3034 = vrot.slane %v2988, 4
        %v3035 = vsel %vm3018, %v3032, %v3034
        %v3036 = vrot.slane %v2989, 4
        %v3037 = vsel %vm3018, %v3034, %v3036
        %v3038 = vrot.slane %v2990, 4
        %v3039 = vsel %vm3018, %v3036, %v3038
        %v3040 = vrot.slane %v2991, 4
        %v3041 = vsel %vm3018, %v3038, %v3040
        %v3042 = vrot.slane %v2992, 4
        %v3043 = vsel %vm3018, %v3040, %v3042
        %v3044 = vrot.slane %v2993, 4
        %v3045 = vsel %vm3018, %v3042, %v3044
        %v3046 = vrot.slane %v2994, 4
        %v3047 = vsel %vm3018, %v3044, %v3046
        %v3048 = vrot.slane %v2995, 4
        %v3049 = vsel %vm3018, %v3046, %v3048
        %v3050 = vrot.slane %v2996, 4
        %v3051 = vsel %vm3018, %v3048, %v3050
        %v3052 = vrot.slane %v2997, 4
        %v3053 = vsel %vm3018, %v3050, %v3052
        %v3054 = vrot.slane %v2998, 4
        %v3055 = vsel %vm3018, %v3052, %v3054
        %v3076 = vsel %vm1836, %v3019, 0.0
        %v3077 = vsel %vm1837, %v3021, 0.0
        %v3078 = vsel %vm1838, %v3023, 0.0
        %v3079 = vsel %vm1839, %v3025, 0.0
        %v3080 = vsel %vm1840, %v3027, 0.0
        %v3081 = vsel %vm1841, %v3029, 0.0
        %v3082 = vsel %vm1842, %v3031, 0.0
        %v3083 = vsel %vm1843, %v3033, 0.0
        %v3084 = vsel %vm1844, %v3035, 0.0
        %v3085 = vsel %vm1845, %v3037, 0.0
        %v3086 = vsel %vm1846, %v3039, 0.0
        %v3087 = vsel %vm1847, %v3041, 0.0
        %v3088 = vsel %vm1848, %v3043, 0.0
        %v3089 = vsel %vm1849, %v3045, 0.0
        %v3090 = vsel %vm1850, %v3047, 0.0
        %v3091 = vsel %vm1851, %v3049, 0.0
        %v3092 = vsel %vm1852, %v3051, 0.0
        %v3093 = vsel %vm1853, %v3053, 0.0
        %v3094 = vsel %vm1854, %v3055, 0.0
        %v3095 = vsel %vm1855, %v3054, 0.0
        %v3096 = vpack.c.bf16 %v3076, %v3076
        %v3097 = vpack.c.bf16 %v3077, %v3077
        %v3098 = vpack.c.bf16 %v3078, %v3078
        %v3099 = vpack.c.bf16 %v3079, %v3079
        %v3100 = vpack.c.bf16 %v3080, %v3080
        %v3101 = vpack.c.bf16 %v3081, %v3081
        %v3102 = vpack.c.bf16 %v3082, %v3082
        %v3103 = vpack.c.bf16 %v3083, %v3083
        %v3104 = vpack.c.bf16 %v3084, %v3084
        %v3105 = vpack.c.bf16 %v3085, %v3085
        %v3106 = vpack.c.bf16 %v3086, %v3086
        %v3107 = vpack.c.bf16 %v3087, %v3087
        %v3108 = vpack.c.bf16 %v3088, %v3088
        %v3109 = vpack.c.bf16 %v3089, %v3089
        %v3110 = vpack.c.bf16 %v3090, %v3090
        %v3111 = vpack.c.bf16 %v3091, %v3091
        %v3112 = vpack.c.bf16 %v3092, %v3092
        %v3113 = vpack.c.bf16 %v3093, %v3093
        %v3114 = vpack.c.bf16 %v3094, %v3094
        %v3115 = vpack.c.bf16 %v3095, %v3095
        %v3116 = vld [vmem:[#allocation9] sm:$0xf]
        %v3117 = vld [vmem:[#allocation9 + $0x4] sm:$0xf]
        %v3118 = vld [vmem:[#allocation9 + $0x8] sm:$0xf]
        %v3119 = vld [vmem:[#allocation9 + $0xc] sm:$0xf]
        %v3120 = vld [vmem:[#allocation9 + $0x10] sm:$0xf]
        %v3121 = vld [vmem:[#allocation9 + $0x14] sm:$0xf]
        %v3122 = vld [vmem:[#allocation9 + $0x18] sm:$0xf]
        %v3123 = vld [vmem:[#allocation9 + $0x1c] sm:$0xf]
        %v3124 = vld [vmem:[#allocation9 + $0x20] sm:$0xf]
        %v3125 = vld [vmem:[#allocation9 + $0x24] sm:$0xf]
        %v3126 = vld [vmem:[#allocation9 + $0x28] sm:$0xf]
        %v3127 = vld [vmem:[#allocation9 + $0x2c] sm:$0xf]
        %v3128 = vld [vmem:[#allocation9 + $0x30] sm:$0xf]
        %v3129 = vld [vmem:[#allocation9 + $0x34] sm:$0xf]
        %v3130 = vld [vmem:[#allocation9 + $0x38] sm:$0xf]
        %v3131 = vld [vmem:[#allocation9 + $0x3c] sm:$0xf]
        %s3132 = scalar_lea.vmem [#allocation9], 64
        %v3133 = vld [vmem:[%s3132] sm:$0xf]
        %v3134 = vld [vmem:[%s3132 + $0x4] sm:$0xf]
        %v3135 = vld [vmem:[%s3132 + $0x8] sm:$0xf]
        %v3136 = vld [vmem:[%s3132 + $0xc] sm:$0xf]
        %v3137 = vld [vmem:[%s3132 + $0x10] sm:$0xf]
        %v3138 = vld [vmem:[%s3132 + $0x14] sm:$0xf]
        %v3139 = vld [vmem:[%s3132 + $0x18] sm:$0xf]
        %v3140 = vld [vmem:[%s3132 + $0x1c] sm:$0xf]
        %v3141 = vld [vmem:[%s3132 + $0x20] sm:$0xf]
        %v3142 = vld [vmem:[%s3132 + $0x24] sm:$0xf]
        %v3143 = vld [vmem:[%s3132 + $0x28] sm:$0xf]
        %v3144 = vld [vmem:[%s3132 + $0x2c] sm:$0xf]
        %v3145 = vld [vmem:[%s3132 + $0x30] sm:$0xf]
        %v3146 = vld [vmem:[%s3132 + $0x34] sm:$0xf]
        %v3147 = vld [vmem:[%s3132 + $0x38] sm:$0xf]
        %v3148 = vld [vmem:[%s3132 + $0x3c] sm:$0xf]
        %v3169 = vunpack.c.l.b16 %v3096
        %v3170 = vunpack.c.l.b16 %v3097
        %v3171 = vunpack.c.l.b16 %v3098
        %v3172 = vunpack.c.l.b16 %v3099
        %v3173 = vunpack.c.l.b16 %v3100
        %v3174 = vunpack.c.l.b16 %v3101
        %v3175 = vunpack.c.l.b16 %v3102
        %v3176 = vunpack.c.l.b16 %v3103
        %v3177 = vunpack.c.l.b16 %v3104
        %v3178 = vunpack.c.l.b16 %v3105
        %v3179 = vunpack.c.l.b16 %v3106
        %v3180 = vunpack.c.l.b16 %v3107
        %v3181 = vunpack.c.l.b16 %v3108
        %v3182 = vunpack.c.l.b16 %v3109
        %v3183 = vunpack.c.l.b16 %v3110
        %v3184 = vunpack.c.l.b16 %v3111
        %v3185 = vunpack.c.l.b16 %v3112
        %v3186 = vunpack.c.l.b16 %v3113
        %v3187 = vunpack.c.l.b16 %v3114
        %v3188 = vunpack.c.l.b16 %v3115
        %v3189 = vpack.c.b16 %v3170, %v3169
        %v3190 = vpack.c.b16 %v3172, %v3171
        %v3191 = vpack.c.b16 %v3174, %v3173
        %v3192 = vpack.c.b16 %v3176, %v3175
        %v3193 = vpack.c.b16 %v3178, %v3177
        %v3194 = vpack.c.b16 %v3180, %v3179
        %v3195 = vpack.c.b16 %v3182, %v3181
        %v3196 = vpack.c.b16 %v3184, %v3183
        %v3197 = vpack.c.b16 %v3186, %v3185
        %v3198 = vpack.c.b16 %v3188, %v3187
        %v3200 = vshrl.u32 %v3189, 16
        %v3202 = vrot.slane %v3200, 2
        %v3203 = vshll.u32 %v3189, 16
        %v3205 = vrot.slane %v3203, 3
        %v3206 = vor.u32 %v3202, %v3205
        %v3208 = vshrl.u32 %v3190, 16
        %v3210 = vrot.slane %v3208, 2
        %v3211 = vshll.u32 %v3190, 16
        %v3213 = vrot.slane %v3211, 3
        %v3214 = vor.u32 %v3210, %v3213
        %v3215 = vsel %vm2587, %v3206, %v3214
        %v3217 = vshrl.u32 %v3191, 16
        %v3219 = vrot.slane %v3217, 2
        %v3220 = vshll.u32 %v3191, 16
        %v3222 = vrot.slane %v3220, 3
        %v3223 = vor.u32 %v3219, %v3222
        %v3224 = vsel %vm2587, %v3214, %v3223
        %v3226 = vshrl.u32 %v3192, 16
        %v3228 = vrot.slane %v3226, 2
        %v3229 = vshll.u32 %v3192, 16
        %v3231 = vrot.slane %v3229, 3
        %v3232 = vor.u32 %v3228, %v3231
        %v3233 = vsel %vm2587, %v3223, %v3232
        %v3235 = vshrl.u32 %v3193, 16
        %v3237 = vrot.slane %v3235, 2
        %v3238 = vshll.u32 %v3193, 16
        %v3240 = vrot.slane %v3238, 3
        %v3241 = vor.u32 %v3237, %v3240
        %v3242 = vsel %vm2587, %v3232, %v3241
        %v3244 = vshrl.u32 %v3194, 16
        %v3246 = vrot.slane %v3244, 2
        %v3247 = vshll.u32 %v3194, 16
        %v3249 = vrot.slane %v3247, 3
        %v3250 = vor.u32 %v3246, %v3249
        %v3251 = vsel %vm2587, %v3241, %v3250
        %v3253 = vshrl.u32 %v3195, 16
        %v3255 = vrot.slane %v3253, 2
        %v3256 = vshll.u32 %v3195, 16
        %v3258 = vrot.slane %v3256, 3
        %v3259 = vor.u32 %v3255, %v3258
        %v3260 = vsel %vm2587, %v3250, %v3259
        %v3262 = vshrl.u32 %v3196, 16
        %v3264 = vrot.slane %v3262, 2
        %v3265 = vshll.u32 %v3196, 16
        %v3267 = vrot.slane %v3265, 3
        %v3268 = vor.u32 %v3264, %v3267
        %v3269 = vsel %vm2587, %v3259, %v3268
        %v3271 = vshrl.u32 %v3197, 16
        %v3273 = vrot.slane %v3271, 2
        %v3274 = vshll.u32 %v3197, 16
        %v3276 = vrot.slane %v3274, 3
        %v3277 = vor.u32 %v3273, %v3276
        %v3278 = vsel %vm2587, %v3268, %v3277
        %v3280 = vshrl.u32 %v3198, 16
        %v3282 = vrot.slane %v3280, 2
        %v3283 = vshll.u32 %v3198, 16
        %v3285 = vrot.slane %v3283, 3
        %v3286 = vor.u32 %v3282, %v3285
        %v3287 = vsel %vm2587, %v3277, %v3286
        %v3314 = vunpack.c.l.b16 %v3133
        %v3315 = vunpack.c.l.b16 %v3134
        %v3316 = vunpack.c.l.b16 %v3135
        %v3317 = vunpack.c.l.b16 %v3136
        %v3318 = vunpack.c.l.b16 %v3137
        %v3319 = vunpack.c.l.b16 %v3138
        %v3320 = vunpack.c.l.b16 %v3139
        %v3321 = vunpack.c.l.b16 %v3140
        %v3322 = vunpack.c.l.b16 %v3141
        %v3323 = vunpack.c.l.b16 %v3142
        %v3324 = vunpack.c.l.b16 %v3143
        %v3325 = vunpack.c.l.b16 %v3144
        %v3326 = vunpack.c.l.b16 %v3145
        %v3327 = vunpack.c.l.b16 %v3146
        %v3328 = vunpack.c.l.b16 %v3147
        %v3329 = vunpack.c.l.b16 %v3148
        %v3330 = vpack.c.b16 %v3315, %v3314
        %v3331 = vpack.c.b16 %v3317, %v3316
        %v3332 = vpack.c.b16 %v3319, %v3318
        %v3333 = vpack.c.b16 %v3321, %v3320
        %v3334 = vpack.c.b16 %v3323, %v3322
        %v3335 = vpack.c.b16 %v3325, %v3324
        %v3336 = vpack.c.b16 %v3327, %v3326
        %v3337 = vpack.c.b16 %v3329, %v3328
        %3346 = vmatpush.bf16.msra.mxu0 %v3337
        %3347 = vmatpush.bf16.msra.mxu0 %v3336
        %3348 = vmatpush.bf16.msra.mxu0 %v3335
        %3349 = vmatpush.bf16.msra.mxu0 %v3334
        %3350 = vmatpush.bf16.msra.mxu0 %v3333
        %3351 = vmatpush.bf16.msra.mxu0 %v3332
        %3352 = vmatpush.bf16.msra.mxu0 %v3331
        %3353 = vmatpush.bf16.msra.mxu0 %v3330
        %3354 = vmatmul.bf16.gmra.mxu0 %v3215
        %v3355 = vpop.f32.mrf.mxu0
        %v3356 = vadd.f32 0.0, %v3355
        %v3357 = vpop.f32.mrf.mxu0
        %v3358 = vadd.f32 0.0, %v3357
        %3359 = vmatmul.bf16.gmra.mxu0 %v3224
        %v3360 = vpop.f32.mrf.mxu0
        %v3361 = vadd.f32 0.0, %v3360
        %v3362 = vpop.f32.mrf.mxu0
        %v3363 = vadd.f32 0.0, %v3362
        %3364 = vmatmul.bf16.gmra.mxu0 %v3233
        %v3365 = vpop.f32.mrf.mxu0
        %v3366 = vadd.f32 0.0, %v3365
        %v3367 = vpop.f32.mrf.mxu0
        %v3368 = vadd.f32 0.0, %v3367
        %3369 = vmatmul.bf16.gmra.mxu0 %v3242
        %v3370 = vpop.f32.mrf.mxu0
        %v3371 = vadd.f32 0.0, %v3370
        %v3372 = vpop.f32.mrf.mxu0
        %v3373 = vadd.f32 0.0, %v3372
        %3374 = vmatmul.bf16.gmra.mxu0 %v3251
        %v3375 = vpop.f32.mrf.mxu0
        %v3376 = vadd.f32 0.0, %v3375
        %v3377 = vpop.f32.mrf.mxu0
        %v3378 = vadd.f32 0.0, %v3377
        %3379 = vmatmul.bf16.gmra.mxu0 %v3260
        %v3380 = vpop.f32.mrf.mxu0
        %v3381 = vadd.f32 0.0, %v3380
        %v3382 = vpop.f32.mrf.mxu0
        %v3383 = vadd.f32 0.0, %v3382
        %3384 = vmatmul.bf16.gmra.mxu0 %v3269
        %v3385 = vpop.f32.mrf.mxu0
        %v3386 = vadd.f32 0.0, %v3385
        %v3387 = vpop.f32.mrf.mxu0
        %v3388 = vadd.f32 0.0, %v3387
        %3389 = vmatmul.bf16.gmra.mxu0 %v3278
        %v3390 = vpop.f32.mrf.mxu0
        %v3391 = vadd.f32 0.0, %v3390
        %v3392 = vpop.f32.mrf.mxu0
        %v3393 = vadd.f32 0.0, %v3392
        %3394 = vmatmul.bf16.gmra.mxu0 %v3287
        %v3395 = vpop.f32.mrf.mxu0
        %v3396 = vadd.f32 0.0, %v3395
        %v3397 = vpop.f32.mrf.mxu0
        %v3398 = vadd.f32 0.0, %v3397
        %3399 = vmatmul.bf16.gmra.mxu0 %v3286
        %v3400 = vpop.f32.mrf.mxu0
        %v3401 = vadd.f32 0.0, %v3400
        %v3402 = vpop.f32.mrf.mxu0
        %3403 = vdwg.mxu0
        %v3404 = vpack.c.b16 %v3187, %v3187
        %v3405 = vrot.slane %v3189, 2
        %v3406 = vrot.slane %v3190, 2
        %v3407 = vsel %vm1591, %v3405, %v3406
        %v3408 = vrot.slane %v3191, 2
        %v3409 = vsel %vm1591, %v3406, %v3408
        %v3410 = vrot.slane %v3192, 2
        %v3411 = vsel %vm1591, %v3408, %v3410
        %v3412 = vrot.slane %v3193, 2
        %v3413 = vsel %vm1591, %v3410, %v3412
        %v3414 = vrot.slane %v3194, 2
        %v3415 = vsel %vm1591, %v3412, %v3414
        %v3416 = vrot.slane %v3195, 2
        %v3417 = vsel %vm1591, %v3414, %v3416
        %v3418 = vrot.slane %v3196, 2
        %v3419 = vsel %vm1591, %v3416, %v3418
        %v3420 = vrot.slane %v3197, 2
        %v3421 = vsel %vm1591, %v3418, %v3420
        %v3422 = vrot.slane %v3404, 2
        %v3423 = vsel %vm1591, %v3420, %v3422
        %v3450 = vunpack.c.l.b16 %v3116
        %v3451 = vunpack.c.l.b16 %v3117
        %v3452 = vunpack.c.l.b16 %v3118
        %v3453 = vunpack.c.l.b16 %v3119
        %v3454 = vunpack.c.l.b16 %v3120
        %v3455 = vunpack.c.l.b16 %v3121
        %v3456 = vunpack.c.l.b16 %v3122
        %v3457 = vunpack.c.l.b16 %v3123
        %v3458 = vunpack.c.l.b16 %v3124
        %v3459 = vunpack.c.l.b16 %v3125
        %v3460 = vunpack.c.l.b16 %v3126
        %v3461 = vunpack.c.l.b16 %v3127
        %v3462 = vunpack.c.l.b16 %v3128
        %v3463 = vunpack.c.l.b16 %v3129
        %v3464 = vunpack.c.l.b16 %v3130
        %v3465 = vunpack.c.l.b16 %v3131
        %v3466 = vpack.c.b16 %v3451, %v3450
        %v3467 = vpack.c.b16 %v3453, %v3452
        %v3468 = vpack.c.b16 %v3455, %v3454
        %v3469 = vpack.c.b16 %v3457, %v3456
        %v3470 = vpack.c.b16 %v3459, %v3458
        %v3471 = vpack.c.b16 %v3461, %v3460
        %v3472 = vpack.c.b16 %v3463, %v3462
        %v3473 = vpack.c.b16 %v3465, %v3464
        %3482 = vmatpush.bf16.msra.mxu0 %v3473
        %3483 = vmatpush.bf16.msra.mxu0 %v3472
        %3484 = vmatpush.bf16.msra.mxu0 %v3471
        %3485 = vmatpush.bf16.msra.mxu0 %v3470
        %3486 = vmatpush.bf16.msra.mxu0 %v3469
        %3487 = vmatpush.bf16.msra.mxu0 %v3468
        %3488 = vmatpush.bf16.msra.mxu0 %v3467
        %3489 = vmatpush.bf16.msra.mxu0 %v3466
        %3490 = vmatmul.bf16.gmra.mxu0 %v3407
        %v3491 = vpop.f32.mrf.mxu0
        %v3492 = vadd.f32 %v3356, %v3491
        %v3493 = vpop.f32.mrf.mxu0
        %v3494 = vadd.f32 %v3358, %v3493
        %3495 = vmatmul.bf16.gmra.mxu0 %v3409
        %v3496 = vpop.f32.mrf.mxu0
        %v3497 = vadd.f32 %v3361, %v3496
        %v3498 = vpop.f32.mrf.mxu0
        %v3499 = vadd.f32 %v3363, %v3498
        %3500 = vmatmul.bf16.gmra.mxu0 %v3411
        %v3501 = vpop.f32.mrf.mxu0
        %v3502 = vadd.f32 %v3366, %v3501
        %v3503 = vpop.f32.mrf.mxu0
        %v3504 = vadd.f32 %v3368, %v3503
        %3505 = vmatmul.bf16.gmra.mxu0 %v3413
        %v3506 = vpop.f32.mrf.mxu0
        %v3507 = vadd.f32 %v3371, %v3506
        %v3508 = vpop.f32.mrf.mxu0
        %v3509 = vadd.f32 %v3373, %v3508
        %3510 = vmatmul.bf16.gmra.mxu0 %v3415
        %v3511 = vpop.f32.mrf.mxu0
        %v3512 = vadd.f32 %v3376, %v3511
        %v3513 = vpop.f32.mrf.mxu0
        %v3514 = vadd.f32 %v3378, %v3513
        %3515 = vmatmul.bf16.gmra.mxu0 %v3417
        %v3516 = vpop.f32.mrf.mxu0
        %v3517 = vadd.f32 %v3381, %v3516
        %v3518 = vpop.f32.mrf.mxu0
        %v3519 = vadd.f32 %v3383, %v3518
        %3520 = vmatmul.bf16.gmra.mxu0 %v3419
        %v3521 = vpop.f32.mrf.mxu0
        %v3522 = vadd.f32 %v3386, %v3521
        %v3523 = vpop.f32.mrf.mxu0
        %v3524 = vadd.f32 %v3388, %v3523
        %3525 = vmatmul.bf16.gmra.mxu0 %v3421
        %v3526 = vpop.f32.mrf.mxu0
        %v3527 = vadd.f32 %v3391, %v3526
        %v3528 = vpop.f32.mrf.mxu0
        %v3529 = vadd.f32 %v3393, %v3528
        %3530 = vmatmul.bf16.gmra.mxu0 %v3423
        %v3531 = vpop.f32.mrf.mxu0
        %v3532 = vadd.f32 %v3396, %v3531
        %v3533 = vpop.f32.mrf.mxu0
        %v3534 = vadd.f32 %v3398, %v3533
        %3535 = vmatmul.bf16.gmra.mxu0 %v3422
        %v3536 = vpop.f32.mrf.mxu0
        %v3537 = vadd.f32 %v3401, %v3536
        %v3538 = vpop.f32.mrf.mxu0
        %3539 = vdwg.mxu0
        %s3540 = scalar_lea.vmem [#allocation9], 128
        %v3541 = vld [vmem:[%s3540] sm:$0xf]
        %v3542 = vld [vmem:[%s3540 + $0x4] sm:$0xf]
        %v3543 = vld [vmem:[%s3540 + $0x8] sm:$0xf]
        %v3544 = vld [vmem:[%s3540 + $0xc] sm:$0xf]
        %v3545 = vld [vmem:[%s3540 + $0x10] sm:$0xf]
        %v3546 = vld [vmem:[%s3540 + $0x14] sm:$0xf]
        %v3547 = vld [vmem:[%s3540 + $0x18] sm:$0xf]
        %v3548 = vld [vmem:[%s3540 + $0x1c] sm:$0xf]
        %v3549 = vld [vmem:[%s3540 + $0x20] sm:$0xf]
        %v3550 = vld [vmem:[%s3540 + $0x24] sm:$0xf]
        %v3551 = vld [vmem:[%s3540 + $0x28] sm:$0xf]
        %v3552 = vld [vmem:[%s3540 + $0x2c] sm:$0xf]
        %v3553 = vld [vmem:[%s3540 + $0x30] sm:$0xf]
        %v3554 = vld [vmem:[%s3540 + $0x34] sm:$0xf]
        %v3555 = vld [vmem:[%s3540 + $0x38] sm:$0xf]
        %v3556 = vld [vmem:[%s3540 + $0x3c] sm:$0xf]
        %v3557 = vrot.slane %v3189, 3
        %v3558 = vrot.slane %v3190, 3
        %v3559 = vsel %vm2779, %v3557, %v3558
        %v3560 = vrot.slane %v3191, 3
        %v3561 = vsel %vm2779, %v3558, %v3560
        %v3562 = vrot.slane %v3192, 3
        %v3563 = vsel %vm2779, %v3560, %v3562
        %v3564 = vrot.slane %v3193, 3
        %v3565 = vsel %vm2779, %v3562, %v3564
        %v3566 = vrot.slane %v3194, 3
        %v3567 = vsel %vm2779, %v3564, %v3566
        %v3568 = vrot.slane %v3195, 3
        %v3569 = vsel %vm2779, %v3566, %v3568
        %v3570 = vrot.slane %v3196, 3
        %v3571 = vsel %vm2779, %v3568, %v3570
        %v3572 = vrot.slane %v3197, 3
        %v3573 = vsel %vm2779, %v3570, %v3572
        %v3574 = vrot.slane %v3198, 3
        %v3575 = vsel %vm2779, %v3572, %v3574
        %v3602 = vunpack.c.l.b16 %v3541
        %v3603 = vunpack.c.l.b16 %v3542
        %v3604 = vunpack.c.l.b16 %v3543
        %v3605 = vunpack.c.l.b16 %v3544
        %v3606 = vunpack.c.l.b16 %v3545
        %v3607 = vunpack.c.l.b16 %v3546
        %v3608 = vunpack.c.l.b16 %v3547
        %v3609 = vunpack.c.l.b16 %v3548
        %v3610 = vunpack.c.l.b16 %v3549
        %v3611 = vunpack.c.l.b16 %v3550
        %v3612 = vunpack.c.l.b16 %v3551
        %v3613 = vunpack.c.l.b16 %v3552
        %v3614 = vunpack.c.l.b16 %v3553
        %v3615 = vunpack.c.l.b16 %v3554
        %v3616 = vunpack.c.l.b16 %v3555
        %v3617 = vunpack.c.l.b16 %v3556
        %v3618 = vpack.c.b16 %v3603, %v3602
        %v3619 = vpack.c.b16 %v3605, %v3604
        %v3620 = vpack.c.b16 %v3607, %v3606
        %v3621 = vpack.c.b16 %v3609, %v3608
        %v3622 = vpack.c.b16 %v3611, %v3610
        %v3623 = vpack.c.b16 %v3613, %v3612
        %v3624 = vpack.c.b16 %v3615, %v3614
        %v3625 = vpack.c.b16 %v3617, %v3616
        %3634 = vmatpush.bf16.msra.mxu0 %v3625
        %3635 = vmatpush.bf16.msra.mxu0 %v3624
        %3636 = vmatpush.bf16.msra.mxu0 %v3623
        %3637 = vmatpush.bf16.msra.mxu0 %v3622
        %3638 = vmatpush.bf16.msra.mxu0 %v3621
        %3639 = vmatpush.bf16.msra.mxu0 %v3620
        %3640 = vmatpush.bf16.msra.mxu0 %v3619
        %3641 = vmatpush.bf16.msra.mxu0 %v3618
        %3642 = vmatmul.bf16.gmra.mxu0 %v3559
        %v3643 = vpop.f32.mrf.mxu0
        %v3644 = vadd.f32 0.0, %v3643
        %v3645 = vpop.f32.mrf.mxu0
        %v3646 = vadd.f32 0.0, %v3645
        %3647 = vmatmul.bf16.gmra.mxu0 %v3561
        %v3648 = vpop.f32.mrf.mxu0
        %v3649 = vadd.f32 0.0, %v3648
        %v3650 = vpop.f32.mrf.mxu0
        %v3651 = vadd.f32 0.0, %v3650
        %3652 = vmatmul.bf16.gmra.mxu0 %v3563
        %v3653 = vpop.f32.mrf.mxu0
        %v3654 = vadd.f32 0.0, %v3653
        %v3655 = vpop.f32.mrf.mxu0
        %v3656 = vadd.f32 0.0, %v3655
        %3657 = vmatmul.bf16.gmra.mxu0 %v3565
        %v3658 = vpop.f32.mrf.mxu0
        %v3659 = vadd.f32 0.0, %v3658
        %v3660 = vpop.f32.mrf.mxu0
        %v3661 = vadd.f32 0.0, %v3660
        %3662 = vmatmul.bf16.gmra.mxu0 %v3567
        %v3663 = vpop.f32.mrf.mxu0
        %v3664 = vadd.f32 0.0, %v3663
        %v3665 = vpop.f32.mrf.mxu0
        %v3666 = vadd.f32 0.0, %v3665
        %3667 = vmatmul.bf16.gmra.mxu0 %v3569
        %v3668 = vpop.f32.mrf.mxu0
        %v3669 = vadd.f32 0.0, %v3668
        %v3670 = vpop.f32.mrf.mxu0
        %v3671 = vadd.f32 0.0, %v3670
        %3672 = vmatmul.bf16.gmra.mxu0 %v3571
        %v3673 = vpop.f32.mrf.mxu0
        %v3674 = vadd.f32 0.0, %v3673
        %v3675 = vpop.f32.mrf.mxu0
        %v3676 = vadd.f32 0.0, %v3675
        %3677 = vmatmul.bf16.gmra.mxu0 %v3573
        %v3678 = vpop.f32.mrf.mxu0
        %v3679 = vadd.f32 0.0, %v3678
        %v3680 = vpop.f32.mrf.mxu0
        %v3681 = vadd.f32 0.0, %v3680
        %3682 = vmatmul.bf16.gmra.mxu0 %v3575
        %v3683 = vpop.f32.mrf.mxu0
        %v3684 = vadd.f32 0.0, %v3683
        %v3685 = vpop.f32.mrf.mxu0
        %v3686 = vadd.f32 0.0, %v3685
        %3687 = vmatmul.bf16.gmra.mxu0 %v3574
        %v3688 = vpop.f32.mrf.mxu0
        %v3689 = vadd.f32 0.0, %v3688
        %v3690 = vpop.f32.mrf.mxu0
        %3691 = vdwg.mxu0
        %v3692 = vadd.f32 %v3492, %v3644
        %v3693 = vadd.f32 %v3494, %v3646
        %v3694 = vadd.f32 %v3497, %v3649
        %v3695 = vadd.f32 %v3499, %v3651
        %v3696 = vadd.f32 %v3502, %v3654
        %v3697 = vadd.f32 %v3504, %v3656
        %v3698 = vadd.f32 %v3507, %v3659
        %v3699 = vadd.f32 %v3509, %v3661
        %v3700 = vadd.f32 %v3512, %v3664
        %v3701 = vadd.f32 %v3514, %v3666
        %v3702 = vadd.f32 %v3517, %v3669
        %v3703 = vadd.f32 %v3519, %v3671
        %v3704 = vadd.f32 %v3522, %v3674
        %v3705 = vadd.f32 %v3524, %v3676
        %v3706 = vadd.f32 %v3527, %v3679
        %v3707 = vadd.f32 %v3529, %v3681
        %v3708 = vadd.f32 %v3532, %v3684
        %v3709 = vadd.f32 %v3534, %v3686
        %v3710 = vadd.f32 %v3537, %v3689
        %s3711 = scalar_lea.vmem [#allocation9], 192
        %v3712 = vld [vmem:[%s3711] sm:$0xf]
        %v3713 = vld [vmem:[%s3711 + $0x4] sm:$0xf]
        %v3714 = vld [vmem:[%s3711 + $0x8] sm:$0xf]
        %v3715 = vld [vmem:[%s3711 + $0xc] sm:$0xf]
        %v3716 = vld [vmem:[%s3711 + $0x10] sm:$0xf]
        %v3717 = vld [vmem:[%s3711 + $0x14] sm:$0xf]
        %v3718 = vld [vmem:[%s3711 + $0x18] sm:$0xf]
        %v3719 = vld [vmem:[%s3711 + $0x1c] sm:$0xf]
        %v3720 = vld [vmem:[%s3711 + $0x20] sm:$0xf]
        %v3721 = vld [vmem:[%s3711 + $0x24] sm:$0xf]
        %v3722 = vld [vmem:[%s3711 + $0x28] sm:$0xf]
        %v3723 = vld [vmem:[%s3711 + $0x2c] sm:$0xf]
        %v3724 = vld [vmem:[%s3711 + $0x30] sm:$0xf]
        %v3725 = vld [vmem:[%s3711 + $0x34] sm:$0xf]
        %v3726 = vld [vmem:[%s3711 + $0x38] sm:$0xf]
        %v3727 = vld [vmem:[%s3711 + $0x3c] sm:$0xf]
        %vm3728 = vsmask.f32 4352
        %v3729 = vrot.slane %v3200, 3
        %v3730 = vrot.slane %v3203, 4
        %v3731 = vor.u32 %v3729, %v3730
        %v3732 = vrot.slane %v3208, 3
        %v3733 = vrot.slane %v3211, 4
        %v3734 = vor.u32 %v3732, %v3733
        %v3735 = vsel %vm3728, %v3731, %v3734
        %v3736 = vrot.slane %v3217, 3
        %v3737 = vrot.slane %v3220, 4
        %v3738 = vor.u32 %v3736, %v3737
        %v3739 = vsel %vm3728, %v3734, %v3738
        %v3740 = vrot.slane %v3226, 3
        %v3741 = vrot.slane %v3229, 4
        %v3742 = vor.u32 %v3740, %v3741
        %v3743 = vsel %vm3728, %v3738, %v3742
        %v3744 = vrot.slane %v3235, 3
        %v3745 = vrot.slane %v3238, 4
        %v3746 = vor.u32 %v3744, %v3745
        %v3747 = vsel %vm3728, %v3742, %v3746
        %v3748 = vrot.slane %v3244, 3
        %v3749 = vrot.slane %v3247, 4
        %v3750 = vor.u32 %v3748, %v3749
        %v3751 = vsel %vm3728, %v3746, %v3750
        %v3752 = vrot.slane %v3253, 3
        %v3753 = vrot.slane %v3256, 4
        %v3754 = vor.u32 %v3752, %v3753
        %v3755 = vsel %vm3728, %v3750, %v3754
        %v3756 = vrot.slane %v3262, 3
        %v3757 = vrot.slane %v3265, 4
        %v3758 = vor.u32 %v3756, %v3757
        %v3759 = vsel %vm3728, %v3754, %v3758
        %v3760 = vrot.slane %v3271, 3
        %v3761 = vrot.slane %v3274, 4
        %v3762 = vor.u32 %v3760, %v3761
        %v3763 = vsel %vm3728, %v3758, %v3762
        %v3764 = vrot.slane %v3280, 3
        %v3765 = vrot.slane %v3283, 4
        %v3766 = vor.u32 %v3764, %v3765
        %v3767 = vsel %vm3728, %v3762, %v3766
        %v3794 = vunpack.c.l.b16 %v3712
        %v3795 = vunpack.c.l.b16 %v3713
        %v3796 = vunpack.c.l.b16 %v3714
        %v3797 = vunpack.c.l.b16 %v3715
        %v3798 = vunpack.c.l.b16 %v3716
        %v3799 = vunpack.c.l.b16 %v3717
        %v3800 = vunpack.c.l.b16 %v3718
        %v3801 = vunpack.c.l.b16 %v3719
        %v3802 = vunpack.c.l.b16 %v3720
        %v3803 = vunpack.c.l.b16 %v3721
        %v3804 = vunpack.c.l.b16 %v3722
        %v3805 = vunpack.c.l.b16 %v3723
        %v3806 = vunpack.c.l.b16 %v3724
        %v3807 = vunpack.c.l.b16 %v3725
        %v3808 = vunpack.c.l.b16 %v3726
        %v3809 = vunpack.c.l.b16 %v3727
        %v3810 = vpack.c.b16 %v3795, %v3794
        %v3811 = vpack.c.b16 %v3797, %v3796
        %v3812 = vpack.c.b16 %v3799, %v3798
        %v3813 = vpack.c.b16 %v3801, %v3800
        %v3814 = vpack.c.b16 %v3803, %v3802
        %v3815 = vpack.c.b16 %v3805, %v3804
        %v3816 = vpack.c.b16 %v3807, %v3806
        %v3817 = vpack.c.b16 %v3809, %v3808
        %3826 = vmatpush.bf16.msra.mxu0 %v3817
        %3827 = vmatpush.bf16.msra.mxu0 %v3816
        %3828 = vmatpush.bf16.msra.mxu0 %v3815
        %3829 = vmatpush.bf16.msra.mxu0 %v3814
        %3830 = vmatpush.bf16.msra.mxu0 %v3813
        %3831 = vmatpush.bf16.msra.mxu0 %v3812
        %3832 = vmatpush.bf16.msra.mxu0 %v3811
        %3833 = vmatpush.bf16.msra.mxu0 %v3810
        %3834 = vmatmul.bf16.gmra.mxu0 %v3735
        %v3835 = vpop.f32.mrf.mxu0
        %v3836 = vadd.f32 0.0, %v3835
        %v3837 = vpop.f32.mrf.mxu0
        %v3838 = vadd.f32 0.0, %v3837
        %3839 = vmatmul.bf16.gmra.mxu0 %v3739
        %v3840 = vpop.f32.mrf.mxu0
        %v3841 = vadd.f32 0.0, %v3840
        %v3842 = vpop.f32.mrf.mxu0
        %v3843 = vadd.f32 0.0, %v3842
        %3844 = vmatmul.bf16.gmra.mxu0 %v3743
        %v3845 = vpop.f32.mrf.mxu0
        %v3846 = vadd.f32 0.0, %v3845
        %v3847 = vpop.f32.mrf.mxu0
        %v3848 = vadd.f32 0.0, %v3847
        %3849 = vmatmul.bf16.gmra.mxu0 %v3747
        %v3850 = vpop.f32.mrf.mxu0
        %v3851 = vadd.f32 0.0, %v3850
        %v3852 = vpop.f32.mrf.mxu0
        %v3853 = vadd.f32 0.0, %v3852
        %3854 = vmatmul.bf16.gmra.mxu0 %v3751
        %v3855 = vpop.f32.mrf.mxu0
        %v3856 = vadd.f32 0.0, %v3855
        %v3857 = vpop.f32.mrf.mxu0
        %v3858 = vadd.f32 0.0, %v3857
        %3859 = vmatmul.bf16.gmra.mxu0 %v3755
        %v3860 = vpop.f32.mrf.mxu0
        %v3861 = vadd.f32 0.0, %v3860
        %v3862 = vpop.f32.mrf.mxu0
        %v3863 = vadd.f32 0.0, %v3862
        %3864 = vmatmul.bf16.gmra.mxu0 %v3759
        %v3865 = vpop.f32.mrf.mxu0
        %v3866 = vadd.f32 0.0, %v3865
        %v3867 = vpop.f32.mrf.mxu0
        %v3868 = vadd.f32 0.0, %v3867
        %3869 = vmatmul.bf16.gmra.mxu0 %v3763
        %v3870 = vpop.f32.mrf.mxu0
        %v3871 = vadd.f32 0.0, %v3870
        %v3872 = vpop.f32.mrf.mxu0
        %v3873 = vadd.f32 0.0, %v3872
        %3874 = vmatmul.bf16.gmra.mxu0 %v3767
        %v3875 = vpop.f32.mrf.mxu0
        %v3876 = vadd.f32 0.0, %v3875
        %v3877 = vpop.f32.mrf.mxu0
        %v3878 = vadd.f32 0.0, %v3877
        %3879 = vmatmul.bf16.gmra.mxu0 %v3766
        %v3880 = vpop.f32.mrf.mxu0
        %v3881 = vadd.f32 0.0, %v3880
        %v3882 = vpop.f32.mrf.mxu0
        %3883 = vdwg.mxu0
        %v3884 = vadd.f32 %v3692, %v3836
        %v3885 = vadd.f32 %v3693, %v3838
        %v3886 = vadd.f32 %v3694, %v3841
        %v3887 = vadd.f32 %v3695, %v3843
        %v3888 = vadd.f32 %v3696, %v3846
        %v3889 = vadd.f32 %v3697, %v3848
        %v3890 = vadd.f32 %v3698, %v3851
        %v3891 = vadd.f32 %v3699, %v3853
        %v3892 = vadd.f32 %v3700, %v3856
        %v3893 = vadd.f32 %v3701, %v3858
        %v3894 = vadd.f32 %v3702, %v3861
        %v3895 = vadd.f32 %v3703, %v3863
        %v3896 = vadd.f32 %v3704, %v3866
        %v3897 = vadd.f32 %v3705, %v3868
        %v3898 = vadd.f32 %v3706, %v3871
        %v3899 = vadd.f32 %v3707, %v3873
        %v3900 = vadd.f32 %v3708, %v3876
        %v3901 = vadd.f32 %v3709, %v3878
        %v3902 = vadd.f32 %v3710, %v3881
        %s3903 = scalar_lea.vmem [#allocation9], 256
        %v3904 = vld [vmem:[%s3903] sm:$0xf]
        %v3905 = vld [vmem:[%s3903 + $0x4] sm:$0xf]
        %v3906 = vld [vmem:[%s3903 + $0x8] sm:$0xf]
        %v3907 = vld [vmem:[%s3903 + $0xc] sm:$0xf]
        %v3908 = vld [vmem:[%s3903 + $0x10] sm:$0xf]
        %v3909 = vld [vmem:[%s3903 + $0x14] sm:$0xf]
        %v3910 = vld [vmem:[%s3903 + $0x18] sm:$0xf]
        %v3911 = vld [vmem:[%s3903 + $0x1c] sm:$0xf]
        %v3912 = vld [vmem:[%s3903 + $0x20] sm:$0xf]
        %v3913 = vld [vmem:[%s3903 + $0x24] sm:$0xf]
        %v3914 = vld [vmem:[%s3903 + $0x28] sm:$0xf]
        %v3915 = vld [vmem:[%s3903 + $0x2c] sm:$0xf]
        %v3916 = vld [vmem:[%s3903 + $0x30] sm:$0xf]
        %v3917 = vld [vmem:[%s3903 + $0x34] sm:$0xf]
        %v3918 = vld [vmem:[%s3903 + $0x38] sm:$0xf]
        %v3919 = vld [vmem:[%s3903 + $0x3c] sm:$0xf]
        %v3920 = vpack.c.b16 %v3171, %v3170
        %v3921 = vpack.c.b16 %v3173, %v3172
        %v3922 = vpack.c.b16 %v3175, %v3174
        %v3923 = vpack.c.b16 %v3177, %v3176
        %v3924 = vpack.c.b16 %v3179, %v3178
        %v3925 = vpack.c.b16 %v3181, %v3180
        %v3926 = vpack.c.b16 %v3183, %v3182
        %v3927 = vpack.c.b16 %v3185, %v3184
        %v3928 = vpack.c.b16 %v3187, %v3186
        %v3929 = vpack.c.b16 %v3188, %v3188
        %v3956 = vunpack.c.l.b16 %v3904
        %v3957 = vunpack.c.l.b16 %v3905
        %v3958 = vunpack.c.l.b16 %v3906
        %v3959 = vunpack.c.l.b16 %v3907
        %v3960 = vunpack.c.l.b16 %v3908
        %v3961 = vunpack.c.l.b16 %v3909
        %v3962 = vunpack.c.l.b16 %v3910
        %v3963 = vunpack.c.l.b16 %v3911
        %v3964 = vunpack.c.l.b16 %v3912
        %v3965 = vunpack.c.l.b16 %v3913
        %v3966 = vunpack.c.l.b16 %v3914
        %v3967 = vunpack.c.l.b16 %v3915
        %v3968 = vunpack.c.l.b16 %v3916
        %v3969 = vunpack.c.l.b16 %v3917
        %v3970 = vunpack.c.l.b16 %v3918
        %v3971 = vunpack.c.l.b16 %v3919
        %v3972 = vpack.c.b16 %v3957, %v3956
        %v3973 = vpack.c.b16 %v3959, %v3958
        %v3974 = vpack.c.b16 %v3961, %v3960
        %v3975 = vpack.c.b16 %v3963, %v3962
        %v3976 = vpack.c.b16 %v3965, %v3964
        %v3977 = vpack.c.b16 %v3967, %v3966
        %v3978 = vpack.c.b16 %v3969, %v3968
        %v3979 = vpack.c.b16 %v3971, %v3970
        %3988 = vmatpush.bf16.msra.mxu0 %v3979
        %3989 = vmatpush.bf16.msra.mxu0 %v3978
        %3990 = vmatpush.bf16.msra.mxu0 %v3977
        %3991 = vmatpush.bf16.msra.mxu0 %v3976
        %3992 = vmatpush.bf16.msra.mxu0 %v3975
        %3993 = vmatpush.bf16.msra.mxu0 %v3974
        %3994 = vmatpush.bf16.msra.mxu0 %v3973
        %3995 = vmatpush.bf16.msra.mxu0 %v3972
        %3996 = vmatmul.bf16.gmra.mxu0 %v3920
        %v3997 = vpop.f32.mrf.mxu0
        %v3998 = vadd.f32 0.0, %v3997
        %v3999 = vpop.f32.mrf.mxu0
        %v4000 = vadd.f32 0.0, %v3999
        %4001 = vmatmul.bf16.gmra.mxu0 %v3921
        %v4002 = vpop.f32.mrf.mxu0
        %v4003 = vadd.f32 0.0, %v4002
        %v4004 = vpop.f32.mrf.mxu0
        %v4005 = vadd.f32 0.0, %v4004
        %4006 = vmatmul.bf16.gmra.mxu0 %v3922
        %v4007 = vpop.f32.mrf.mxu0
        %v4008 = vadd.f32 0.0, %v4007
        %v4009 = vpop.f32.mrf.mxu0
        %v4010 = vadd.f32 0.0, %v4009
        %4011 = vmatmul.bf16.gmra.mxu0 %v3923
        %v4012 = vpop.f32.mrf.mxu0
        %v4013 = vadd.f32 0.0, %v4012
        %v4014 = vpop.f32.mrf.mxu0
        %v4015 = vadd.f32 0.0, %v4014
        %4016 = vmatmul.bf16.gmra.mxu0 %v3924
        %v4017 = vpop.f32.mrf.mxu0
        %v4018 = vadd.f32 0.0, %v4017
        %v4019 = vpop.f32.mrf.mxu0
        %v4020 = vadd.f32 0.0, %v4019
        %4021 = vmatmul.bf16.gmra.mxu0 %v3925
        %v4022 = vpop.f32.mrf.mxu0
        %v4023 = vadd.f32 0.0, %v4022
        %v4024 = vpop.f32.mrf.mxu0
        %v4025 = vadd.f32 0.0, %v4024
        %4026 = vmatmul.bf16.gmra.mxu0 %v3926
        %v4027 = vpop.f32.mrf.mxu0
        %v4028 = vadd.f32 0.0, %v4027
        %v4029 = vpop.f32.mrf.mxu0
        %v4030 = vadd.f32 0.0, %v4029
        %4031 = vmatmul.bf16.gmra.mxu0 %v3927
        %v4032 = vpop.f32.mrf.mxu0
        %v4033 = vadd.f32 0.0, %v4032
        %v4034 = vpop.f32.mrf.mxu0
        %v4035 = vadd.f32 0.0, %v4034
        %4036 = vmatmul.bf16.gmra.mxu0 %v3928
        %v4037 = vpop.f32.mrf.mxu0
        %v4038 = vadd.f32 0.0, %v4037
        %v4039 = vpop.f32.mrf.mxu0
        %v4040 = vadd.f32 0.0, %v4039
        %4041 = vmatmul.bf16.gmra.mxu0 %v3929
        %v4042 = vpop.f32.mrf.mxu0
        %v4043 = vadd.f32 0.0, %v4042
        %v4044 = vpop.f32.mrf.mxu0
        %4045 = vdwg.mxu0
        %v4046 = vadd.f32 %v3884, %v3998
        %v4047 = vadd.f32 %v3885, %v4000
        %v4048 = vadd.f32 %v3886, %v4003
        %v4049 = vadd.f32 %v3887, %v4005
        %v4050 = vadd.f32 %v3888, %v4008
        %v4051 = vadd.f32 %v3889, %v4010
        %v4052 = vadd.f32 %v3890, %v4013
        %v4053 = vadd.f32 %v3891, %v4015
        %v4054 = vadd.f32 %v3892, %v4018
        %v4055 = vadd.f32 %v3893, %v4020
        %v4056 = vadd.f32 %v3894, %v4023
        %v4057 = vadd.f32 %v3895, %v4025
        %v4058 = vadd.f32 %v3896, %v4028
        %v4059 = vadd.f32 %v3897, %v4030
        %v4060 = vadd.f32 %v3898, %v4033
        %v4061 = vadd.f32 %v3899, %v4035
        %v4062 = vadd.f32 %v3900, %v4038
        %v4063 = vadd.f32 %v3901, %v4040
        %v4064 = vadd.f32 %v3902, %v4043
        %v4065 = vld [vmem:[%s8] sm:$0x1]
        %v4067 = vperm.slane %v4065, 0
        %v4069 = vmul.f32 %v4046, %v4067
        %v4070 = vmul.f32 %v4047, %v4067
        %v4071 = vmul.f32 %v4048, %v4067
        %v4072 = vmul.f32 %v4049, %v4067
        %v4073 = vmul.f32 %v4050, %v4067
        %v4074 = vmul.f32 %v4051, %v4067
        %v4075 = vmul.f32 %v4052, %v4067
        %v4076 = vmul.f32 %v4053, %v4067
        %v4077 = vmul.f32 %v4054, %v4067
        %v4078 = vmul.f32 %v4055, %v4067
        %v4079 = vmul.f32 %v4056, %v4067
        %v4080 = vmul.f32 %v4057, %v4067
        %v4081 = vmul.f32 %v4058, %v4067
        %v4082 = vmul.f32 %v4059, %v4067
        %v4083 = vmul.f32 %v4060, %v4067
        %v4084 = vmul.f32 %v4061, %v4067
        %v4085 = vmul.f32 %v4062, %v4067
        %v4086 = vmul.f32 %v4063, %v4067
        %v4087 = vmul.f32 %v4064, %v4067
        %v4088 = vld [vmem:[%s9] sm:$0x1]
        %v4090 = vperm.slane %v4088, 0
        %v4092 = vadd.f32 %v4069, %v4090
        %v4093 = vadd.f32 %v4070, %v4090
        %v4094 = vadd.f32 %v4071, %v4090
        %v4095 = vadd.f32 %v4072, %v4090
        %v4096 = vadd.f32 %v4073, %v4090
        %v4097 = vadd.f32 %v4074, %v4090
        %v4098 = vadd.f32 %v4075, %v4090
        %v4099 = vadd.f32 %v4076, %v4090
        %v4100 = vadd.f32 %v4077, %v4090
        %v4101 = vadd.f32 %v4078, %v4090
        %v4102 = vadd.f32 %v4079, %v4090
        %v4103 = vadd.f32 %v4080, %v4090
        %v4104 = vadd.f32 %v4081, %v4090
        %v4105 = vadd.f32 %v4082, %v4090
        %v4106 = vadd.f32 %v4083, %v4090
        %v4107 = vadd.f32 %v4084, %v4090
        %v4108 = vadd.f32 %v4085, %v4090
        %v4109 = vadd.f32 %v4086, %v4090
        %v4110 = vadd.f32 %v4087, %v4090
        %v4111 = vtanh.pop %v4092
        %v4112 = vtanh.pop %v4093
        %v4113 = vtanh.pop %v4094
        %v4114 = vtanh.pop %v4095
        %v4115 = vtanh.pop %v4096
        %v4116 = vtanh.pop %v4097
        %v4117 = vtanh.pop %v4098
        %v4118 = vtanh.pop %v4099
        %v4119 = vtanh.pop %v4100
        %v4120 = vtanh.pop %v4101
        %v4121 = vtanh.pop %v4102
        %v4122 = vtanh.pop %v4103
        %v4123 = vtanh.pop %v4104
        %v4124 = vtanh.pop %v4105
        %v4125 = vtanh.pop %v4106
        %v4126 = vtanh.pop %v4107
        %v4127 = vtanh.pop %v4108
        %v4128 = vtanh.pop %v4109
        %v4129 = vtanh.pop %v4110
        %vm4149 = vcmask 1045504
        %v4150 = vrot.slane %v4111, 2
        %v4151 = vrot.slane %v4112, 2
        %v4152 = vsel %vm4149, %v4150, %v4151
        %v4153 = vrot.slane %v4113, 2
        %v4154 = vsel %vm4149, %v4151, %v4153
        %v4155 = vrot.slane %v4114, 2
        %v4156 = vsel %vm4149, %v4153, %v4155
        %v4157 = vrot.slane %v4115, 2
        %v4158 = vsel %vm4149, %v4155, %v4157
        %v4159 = vrot.slane %v4116, 2
        %v4160 = vsel %vm4149, %v4157, %v4159
        %v4161 = vrot.slane %v4117, 2
        %v4162 = vsel %vm4149, %v4159, %v4161
        %v4163 = vrot.slane %v4118, 2
        %v4164 = vsel %vm4149, %v4161, %v4163
        %v4165 = vrot.slane %v4119, 2
        %v4166 = vsel %vm4149, %v4163, %v4165
        %v4167 = vrot.slane %v4120, 2
        %v4168 = vsel %vm4149, %v4165, %v4167
        %v4169 = vrot.slane %v4121, 2
        %v4170 = vsel %vm4149, %v4167, %v4169
        %v4171 = vrot.slane %v4122, 2
        %v4172 = vsel %vm4149, %v4169, %v4171
        %v4173 = vrot.slane %v4123, 2
        %v4174 = vsel %vm4149, %v4171, %v4173
        %v4175 = vrot.slane %v4124, 2
        %v4176 = vsel %vm4149, %v4173, %v4175
        %v4177 = vrot.slane %v4125, 2
        %v4178 = vsel %vm4149, %v4175, %v4177
        %v4179 = vrot.slane %v4126, 2
        %v4180 = vsel %vm4149, %v4177, %v4179
        %v4181 = vrot.slane %v4127, 2
        %v4182 = vsel %vm4149, %v4179, %v4181
        %v4183 = vrot.slane %v4128, 2
        %v4184 = vsel %vm4149, %v4181, %v4183
        %v4185 = vrot.slane %v4129, 2
        %v4186 = vsel %vm4149, %v4183, %v4185
        %v4207 = vsel %vm1836, %v4150, 0.0
        %v4208 = vsel %vm1837, %v4152, 0.0
        %v4209 = vsel %vm1838, %v4154, 0.0
        %v4210 = vsel %vm1839, %v4156, 0.0
        %v4211 = vsel %vm1840, %v4158, 0.0
        %v4212 = vsel %vm1841, %v4160, 0.0
        %v4213 = vsel %vm1842, %v4162, 0.0
        %v4214 = vsel %vm1843, %v4164, 0.0
        %v4215 = vsel %vm1844, %v4166, 0.0
        %v4216 = vsel %vm1845, %v4168, 0.0
        %v4217 = vsel %vm1846, %v4170, 0.0
        %v4218 = vsel %vm1847, %v4172, 0.0
        %v4219 = vsel %vm1848, %v4174, 0.0
        %v4220 = vsel %vm1849, %v4176, 0.0
        %v4221 = vsel %vm1850, %v4178, 0.0
        %v4222 = vsel %vm1851, %v4180, 0.0
        %v4223 = vsel %vm1852, %v4182, 0.0
        %v4224 = vsel %vm1853, %v4184, 0.0
        %v4225 = vsel %vm1854, %v4186, 0.0
        %v4226 = vsel %vm1855, %v4185, 0.0
        %v4227 = vpack.c.bf16 %v4207, %v4207
        %v4228 = vpack.c.bf16 %v4208, %v4208
        %v4229 = vpack.c.bf16 %v4209, %v4209
        %v4230 = vpack.c.bf16 %v4210, %v4210
        %v4231 = vpack.c.bf16 %v4211, %v4211
        %v4232 = vpack.c.bf16 %v4212, %v4212
        %v4233 = vpack.c.bf16 %v4213, %v4213
        %v4234 = vpack.c.bf16 %v4214, %v4214
        %v4235 = vpack.c.bf16 %v4215, %v4215
        %v4236 = vpack.c.bf16 %v4216, %v4216
        %v4237 = vpack.c.bf16 %v4217, %v4217
        %v4238 = vpack.c.bf16 %v4218, %v4218
        %v4239 = vpack.c.bf16 %v4219, %v4219
        %v4240 = vpack.c.bf16 %v4220, %v4220
        %v4241 = vpack.c.bf16 %v4221, %v4221
        %v4242 = vpack.c.bf16 %v4222, %v4222
        %v4243 = vpack.c.bf16 %v4223, %v4223
        %v4244 = vpack.c.bf16 %v4224, %v4224
        %v4245 = vpack.c.bf16 %v4225, %v4225
        %v4246 = vpack.c.bf16 %v4226, %v4226
        %v4247 = vld [vmem:[#allocation10] sm:$0xf]
        %v4248 = vld [vmem:[#allocation10 + $0x4] sm:$0xf]
        %v4249 = vld [vmem:[#allocation10 + $0x8] sm:$0xf]
        %v4250 = vld [vmem:[#allocation10 + $0xc] sm:$0xf]
        %v4251 = vld [vmem:[#allocation10 + $0x10] sm:$0xf]
        %v4252 = vld [vmem:[#allocation10 + $0x14] sm:$0xf]
        %v4253 = vld [vmem:[#allocation10 + $0x18] sm:$0xf]
        %v4254 = vld [vmem:[#allocation10 + $0x1c] sm:$0xf]
        %v4255 = vld [vmem:[#allocation10 + $0x20] sm:$0xf]
        %v4256 = vld [vmem:[#allocation10 + $0x24] sm:$0xf]
        %v4257 = vld [vmem:[#allocation10 + $0x28] sm:$0xf]
        %v4258 = vld [vmem:[#allocation10 + $0x2c] sm:$0xf]
        %v4259 = vld [vmem:[#allocation10 + $0x30] sm:$0xf]
        %v4260 = vld [vmem:[#allocation10 + $0x34] sm:$0xf]
        %v4261 = vld [vmem:[#allocation10 + $0x38] sm:$0xf]
        %v4262 = vld [vmem:[#allocation10 + $0x3c] sm:$0xf]
        %s4263 = scalar_lea.vmem [#allocation10], 64
        %v4264 = vld [vmem:[%s4263] sm:$0xf]
        %v4265 = vld [vmem:[%s4263 + $0x4] sm:$0xf]
        %v4266 = vld [vmem:[%s4263 + $0x8] sm:$0xf]
        %v4267 = vld [vmem:[%s4263 + $0xc] sm:$0xf]
        %v4268 = vld [vmem:[%s4263 + $0x10] sm:$0xf]
        %v4269 = vld [vmem:[%s4263 + $0x14] sm:$0xf]
        %v4270 = vld [vmem:[%s4263 + $0x18] sm:$0xf]
        %v4271 = vld [vmem:[%s4263 + $0x1c] sm:$0xf]
        %v4272 = vld [vmem:[%s4263 + $0x20] sm:$0xf]
        %v4273 = vld [vmem:[%s4263 + $0x24] sm:$0xf]
        %v4274 = vld [vmem:[%s4263 + $0x28] sm:$0xf]
        %v4275 = vld [vmem:[%s4263 + $0x2c] sm:$0xf]
        %v4276 = vld [vmem:[%s4263 + $0x30] sm:$0xf]
        %v4277 = vld [vmem:[%s4263 + $0x34] sm:$0xf]
        %v4278 = vld [vmem:[%s4263 + $0x38] sm:$0xf]
        %v4279 = vld [vmem:[%s4263 + $0x3c] sm:$0xf]
        %v4299 = vunpack.c.l.b16 %v4227
        %v4300 = vunpack.c.l.b16 %v4228
        %v4301 = vunpack.c.l.b16 %v4229
        %v4302 = vunpack.c.l.b16 %v4230
        %v4303 = vunpack.c.l.b16 %v4231
        %v4304 = vunpack.c.l.b16 %v4232
        %v4305 = vunpack.c.l.b16 %v4233
        %v4306 = vunpack.c.l.b16 %v4234
        %v4307 = vunpack.c.l.b16 %v4235
        %v4308 = vunpack.c.l.b16 %v4236
        %v4309 = vunpack.c.l.b16 %v4237
        %v4310 = vunpack.c.l.b16 %v4238
        %v4311 = vunpack.c.l.b16 %v4239
        %v4312 = vunpack.c.l.b16 %v4240
        %v4313 = vunpack.c.l.b16 %v4241
        %v4314 = vunpack.c.l.b16 %v4242
        %v4315 = vunpack.c.l.b16 %v4243
        %v4316 = vunpack.c.l.b16 %v4244
        %v4317 = vunpack.c.l.b16 %v4245
        %v4318 = vpack.c.b16 %v4300, %v4299
        %v4319 = vpack.c.b16 %v4302, %v4301
        %v4320 = vpack.c.b16 %v4304, %v4303
        %v4321 = vpack.c.b16 %v4306, %v4305
        %v4322 = vpack.c.b16 %v4308, %v4307
        %v4323 = vpack.c.b16 %v4310, %v4309
        %v4324 = vpack.c.b16 %v4312, %v4311
        %v4325 = vpack.c.b16 %v4314, %v4313
        %v4326 = vpack.c.b16 %v4316, %v4315
        %v4327 = vpack.c.b16 %v4317, %v4317
        %v4329 = vshrl.u32 %v4318, 16
        %v4331 = vrot.slane %v4329, 3
        %v4332 = vshll.u32 %v4318, 16
        %v4334 = vrot.slane %v4332, 4
        %v4335 = vor.u32 %v4331, %v4334
        %v4337 = vshrl.u32 %v4319, 16
        %v4339 = vrot.slane %v4337, 3
        %v4340 = vshll.u32 %v4319, 16
        %v4342 = vrot.slane %v4340, 4
        %v4343 = vor.u32 %v4339, %v4342
        %v4344 = vsel %vm3728, %v4335, %v4343
        %v4346 = vshrl.u32 %v4320, 16
        %v4348 = vrot.slane %v4346, 3
        %v4349 = vshll.u32 %v4320, 16
        %v4351 = vrot.slane %v4349, 4
        %v4352 = vor.u32 %v4348, %v4351
        %v4353 = vsel %vm3728, %v4343, %v4352
        %v4355 = vshrl.u32 %v4321, 16
        %v4357 = vrot.slane %v4355, 3
        %v4358 = vshll.u32 %v4321, 16
        %v4360 = vrot.slane %v4358, 4
        %v4361 = vor.u32 %v4357, %v4360
        %v4362 = vsel %vm3728, %v4352, %v4361
        %v4364 = vshrl.u32 %v4322, 16
        %v4366 = vrot.slane %v4364, 3
        %v4367 = vshll.u32 %v4322, 16
        %v4369 = vrot.slane %v4367, 4
        %v4370 = vor.u32 %v4366, %v4369
        %v4371 = vsel %vm3728, %v4361, %v4370
        %v4373 = vshrl.u32 %v4323, 16
        %v4375 = vrot.slane %v4373, 3
        %v4376 = vshll.u32 %v4323, 16
        %v4378 = vrot.slane %v4376, 4
        %v4379 = vor.u32 %v4375, %v4378
        %v4380 = vsel %vm3728, %v4370, %v4379
        %v4382 = vshrl.u32 %v4324, 16
        %v4384 = vrot.slane %v4382, 3
        %v4385 = vshll.u32 %v4324, 16
        %v4387 = vrot.slane %v4385, 4
        %v4388 = vor.u32 %v4384, %v4387
        %v4389 = vsel %vm3728, %v4379, %v4388
        %v4391 = vshrl.u32 %v4325, 16
        %v4393 = vrot.slane %v4391, 3
        %v4394 = vshll.u32 %v4325, 16
        %v4396 = vrot.slane %v4394, 4
        %v4397 = vor.u32 %v4393, %v4396
        %v4398 = vsel %vm3728, %v4388, %v4397
        %v4400 = vshrl.u32 %v4326, 16
        %v4402 = vrot.slane %v4400, 3
        %v4403 = vshll.u32 %v4326, 16
        %v4405 = vrot.slane %v4403, 4
        %v4406 = vor.u32 %v4402, %v4405
        %v4407 = vsel %vm3728, %v4397, %v4406
        %v4409 = vshrl.u32 %v4327, 16
        %v4411 = vrot.slane %v4409, 3
        %v4412 = vshll.u32 %v4327, 16
        %v4414 = vrot.slane %v4412, 4
        %v4415 = vor.u32 %v4411, %v4414
        %v4416 = vsel %vm3728, %v4406, %v4415
        %v4442 = vunpack.c.l.b16 %v4264
        %v4443 = vunpack.c.l.b16 %v4265
        %v4444 = vunpack.c.l.b16 %v4266
        %v4445 = vunpack.c.l.b16 %v4267
        %v4446 = vunpack.c.l.b16 %v4268
        %v4447 = vunpack.c.l.b16 %v4269
        %v4448 = vunpack.c.l.b16 %v4270
        %v4449 = vunpack.c.l.b16 %v4271
        %v4450 = vunpack.c.l.b16 %v4272
        %v4451 = vunpack.c.l.b16 %v4273
        %v4452 = vunpack.c.l.b16 %v4274
        %v4453 = vunpack.c.l.b16 %v4275
        %v4454 = vunpack.c.l.b16 %v4276
        %v4455 = vunpack.c.l.b16 %v4277
        %v4456 = vunpack.c.l.b16 %v4278
        %v4457 = vunpack.c.l.b16 %v4279
        %v4458 = vpack.c.b16 %v4443, %v4442
        %v4459 = vpack.c.b16 %v4445, %v4444
        %v4460 = vpack.c.b16 %v4447, %v4446
        %v4461 = vpack.c.b16 %v4449, %v4448
        %v4462 = vpack.c.b16 %v4451, %v4450
        %v4463 = vpack.c.b16 %v4453, %v4452
        %v4464 = vpack.c.b16 %v4455, %v4454
        %v4465 = vpack.c.b16 %v4457, %v4456
        %4474 = vmatpush.bf16.msra.mxu0 %v4465
        %4475 = vmatpush.bf16.msra.mxu0 %v4464
        %4476 = vmatpush.bf16.msra.mxu0 %v4463
        %4477 = vmatpush.bf16.msra.mxu0 %v4462
        %4478 = vmatpush.bf16.msra.mxu0 %v4461
        %4479 = vmatpush.bf16.msra.mxu0 %v4460
        %4480 = vmatpush.bf16.msra.mxu0 %v4459
        %4481 = vmatpush.bf16.msra.mxu0 %v4458
        %4482 = vmatmul.bf16.gmra.mxu0 %v4344
        %v4483 = vpop.f32.mrf.mxu0
        %v4484 = vadd.f32 0.0, %v4483
        %v4485 = vpop.f32.mrf.mxu0
        %v4486 = vadd.f32 0.0, %v4485
        %4487 = vmatmul.bf16.gmra.mxu0 %v4353
        %v4488 = vpop.f32.mrf.mxu0
        %v4489 = vadd.f32 0.0, %v4488
        %v4490 = vpop.f32.mrf.mxu0
        %v4491 = vadd.f32 0.0, %v4490
        %4492 = vmatmul.bf16.gmra.mxu0 %v4362
        %v4493 = vpop.f32.mrf.mxu0
        %v4494 = vadd.f32 0.0, %v4493
        %v4495 = vpop.f32.mrf.mxu0
        %v4496 = vadd.f32 0.0, %v4495
        %4497 = vmatmul.bf16.gmra.mxu0 %v4371
        %v4498 = vpop.f32.mrf.mxu0
        %v4499 = vadd.f32 0.0, %v4498
        %v4500 = vpop.f32.mrf.mxu0
        %v4501 = vadd.f32 0.0, %v4500
        %4502 = vmatmul.bf16.gmra.mxu0 %v4380
        %v4503 = vpop.f32.mrf.mxu0
        %v4504 = vadd.f32 0.0, %v4503
        %v4505 = vpop.f32.mrf.mxu0
        %v4506 = vadd.f32 0.0, %v4505
        %4507 = vmatmul.bf16.gmra.mxu0 %v4389
        %v4508 = vpop.f32.mrf.mxu0
        %v4509 = vadd.f32 0.0, %v4508
        %v4510 = vpop.f32.mrf.mxu0
        %v4511 = vadd.f32 0.0, %v4510
        %4512 = vmatmul.bf16.gmra.mxu0 %v4398
        %v4513 = vpop.f32.mrf.mxu0
        %v4514 = vadd.f32 0.0, %v4513
        %v4515 = vpop.f32.mrf.mxu0
        %v4516 = vadd.f32 0.0, %v4515
        %4517 = vmatmul.bf16.gmra.mxu0 %v4407
        %v4518 = vpop.f32.mrf.mxu0
        %v4519 = vadd.f32 0.0, %v4518
        %v4520 = vpop.f32.mrf.mxu0
        %v4521 = vadd.f32 0.0, %v4520
        %4522 = vmatmul.bf16.gmra.mxu0 %v4416
        %v4523 = vpop.f32.mrf.mxu0
        %v4524 = vadd.f32 0.0, %v4523
        %v4525 = vpop.f32.mrf.mxu0
        %v4526 = vadd.f32 0.0, %v4525
        %4527 = vdwg.mxu0
        %v4528 = vrot.slane %v4318, 3
        %v4529 = vrot.slane %v4319, 3
        %v4530 = vsel %vm2779, %v4528, %v4529
        %v4531 = vrot.slane %v4320, 3
        %v4532 = vsel %vm2779, %v4529, %v4531
        %v4533 = vrot.slane %v4321, 3
        %v4534 = vsel %vm2779, %v4531, %v4533
        %v4535 = vrot.slane %v4322, 3
        %v4536 = vsel %vm2779, %v4533, %v4535
        %v4537 = vrot.slane %v4323, 3
        %v4538 = vsel %vm2779, %v4535, %v4537
        %v4539 = vrot.slane %v4324, 3
        %v4540 = vsel %vm2779, %v4537, %v4539
        %v4541 = vrot.slane %v4325, 3
        %v4542 = vsel %vm2779, %v4539, %v4541
        %v4543 = vrot.slane %v4326, 3
        %v4544 = vsel %vm2779, %v4541, %v4543
        %v4545 = vrot.slane %v4327, 3
        %v4546 = vsel %vm2779, %v4543, %v4545
        %v4572 = vunpack.c.l.b16 %v4247
        %v4573 = vunpack.c.l.b16 %v4248
        %v4574 = vunpack.c.l.b16 %v4249
        %v4575 = vunpack.c.l.b16 %v4250
        %v4576 = vunpack.c.l.b16 %v4251
        %v4577 = vunpack.c.l.b16 %v4252
        %v4578 = vunpack.c.l.b16 %v4253
        %v4579 = vunpack.c.l.b16 %v4254
        %v4580 = vunpack.c.l.b16 %v4255
        %v4581 = vunpack.c.l.b16 %v4256
        %v4582 = vunpack.c.l.b16 %v4257
        %v4583 = vunpack.c.l.b16 %v4258
        %v4584 = vunpack.c.l.b16 %v4259
        %v4585 = vunpack.c.l.b16 %v4260
        %v4586 = vunpack.c.l.b16 %v4261
        %v4587 = vunpack.c.l.b16 %v4262
        %v4588 = vpack.c.b16 %v4573, %v4572
        %v4589 = vpack.c.b16 %v4575, %v4574
        %v4590 = vpack.c.b16 %v4577, %v4576
        %v4591 = vpack.c.b16 %v4579, %v4578
        %v4592 = vpack.c.b16 %v4581, %v4580
        %v4593 = vpack.c.b16 %v4583, %v4582
        %v4594 = vpack.c.b16 %v4585, %v4584
        %v4595 = vpack.c.b16 %v4587, %v4586
        %4604 = vmatpush.bf16.msra.mxu0 %v4595
        %4605 = vmatpush.bf16.msra.mxu0 %v4594
        %4606 = vmatpush.bf16.msra.mxu0 %v4593
        %4607 = vmatpush.bf16.msra.mxu0 %v4592
        %4608 = vmatpush.bf16.msra.mxu0 %v4591
        %4609 = vmatpush.bf16.msra.mxu0 %v4590
        %4610 = vmatpush.bf16.msra.mxu0 %v4589
        %4611 = vmatpush.bf16.msra.mxu0 %v4588
        %4612 = vmatmul.bf16.gmra.mxu0 %v4530
        %v4613 = vpop.f32.mrf.mxu0
        %v4614 = vadd.f32 %v4484, %v4613
        %v4615 = vpop.f32.mrf.mxu0
        %v4616 = vadd.f32 %v4486, %v4615
        %4617 = vmatmul.bf16.gmra.mxu0 %v4532
        %v4618 = vpop.f32.mrf.mxu0
        %v4619 = vadd.f32 %v4489, %v4618
        %v4620 = vpop.f32.mrf.mxu0
        %v4621 = vadd.f32 %v4491, %v4620
        %4622 = vmatmul.bf16.gmra.mxu0 %v4534
        %v4623 = vpop.f32.mrf.mxu0
        %v4624 = vadd.f32 %v4494, %v4623
        %v4625 = vpop.f32.mrf.mxu0
        %v4626 = vadd.f32 %v4496, %v4625
        %4627 = vmatmul.bf16.gmra.mxu0 %v4536
        %v4628 = vpop.f32.mrf.mxu0
        %v4629 = vadd.f32 %v4499, %v4628
        %v4630 = vpop.f32.mrf.mxu0
        %v4631 = vadd.f32 %v4501, %v4630
        %4632 = vmatmul.bf16.gmra.mxu0 %v4538
        %v4633 = vpop.f32.mrf.mxu0
        %v4634 = vadd.f32 %v4504, %v4633
        %v4635 = vpop.f32.mrf.mxu0
        %v4636 = vadd.f32 %v4506, %v4635
        %4637 = vmatmul.bf16.gmra.mxu0 %v4540
        %v4638 = vpop.f32.mrf.mxu0
        %v4639 = vadd.f32 %v4509, %v4638
        %v4640 = vpop.f32.mrf.mxu0
        %v4641 = vadd.f32 %v4511, %v4640
        %4642 = vmatmul.bf16.gmra.mxu0 %v4542
        %v4643 = vpop.f32.mrf.mxu0
        %v4644 = vadd.f32 %v4514, %v4643
        %v4645 = vpop.f32.mrf.mxu0
        %v4646 = vadd.f32 %v4516, %v4645
        %4647 = vmatmul.bf16.gmra.mxu0 %v4544
        %v4648 = vpop.f32.mrf.mxu0
        %v4649 = vadd.f32 %v4519, %v4648
        %v4650 = vpop.f32.mrf.mxu0
        %v4651 = vadd.f32 %v4521, %v4650
        %4652 = vmatmul.bf16.gmra.mxu0 %v4546
        %v4653 = vpop.f32.mrf.mxu0
        %v4654 = vadd.f32 %v4524, %v4653
        %v4655 = vpop.f32.mrf.mxu0
        %v4656 = vadd.f32 %v4526, %v4655
        %4657 = vdwg.mxu0
        %s4658 = scalar_lea.vmem [#allocation10], 128
        %v4659 = vld [vmem:[%s4658] sm:$0xf]
        %v4660 = vld [vmem:[%s4658 + $0x4] sm:$0xf]
        %v4661 = vld [vmem:[%s4658 + $0x8] sm:$0xf]
        %v4662 = vld [vmem:[%s4658 + $0xc] sm:$0xf]
        %v4663 = vld [vmem:[%s4658 + $0x10] sm:$0xf]
        %v4664 = vld [vmem:[%s4658 + $0x14] sm:$0xf]
        %v4665 = vld [vmem:[%s4658 + $0x18] sm:$0xf]
        %v4666 = vld [vmem:[%s4658 + $0x1c] sm:$0xf]
        %v4667 = vld [vmem:[%s4658 + $0x20] sm:$0xf]
        %v4668 = vld [vmem:[%s4658 + $0x24] sm:$0xf]
        %v4669 = vld [vmem:[%s4658 + $0x28] sm:$0xf]
        %v4670 = vld [vmem:[%s4658 + $0x2c] sm:$0xf]
        %v4671 = vld [vmem:[%s4658 + $0x30] sm:$0xf]
        %v4672 = vld [vmem:[%s4658 + $0x34] sm:$0xf]
        %v4673 = vld [vmem:[%s4658 + $0x38] sm:$0xf]
        %v4674 = vld [vmem:[%s4658 + $0x3c] sm:$0xf]
        %v4675 = vpack.c.b16 %v4301, %v4300
        %v4676 = vpack.c.b16 %v4303, %v4302
        %v4677 = vpack.c.b16 %v4305, %v4304
        %v4678 = vpack.c.b16 %v4307, %v4306
        %v4679 = vpack.c.b16 %v4309, %v4308
        %v4680 = vpack.c.b16 %v4311, %v4310
        %v4681 = vpack.c.b16 %v4313, %v4312
        %v4682 = vpack.c.b16 %v4315, %v4314
        %v4683 = vpack.c.b16 %v4317, %v4316
        %v4709 = vunpack.c.l.b16 %v4659
        %v4710 = vunpack.c.l.b16 %v4660
        %v4711 = vunpack.c.l.b16 %v4661
        %v4712 = vunpack.c.l.b16 %v4662
        %v4713 = vunpack.c.l.b16 %v4663
        %v4714 = vunpack.c.l.b16 %v4664
        %v4715 = vunpack.c.l.b16 %v4665
        %v4716 = vunpack.c.l.b16 %v4666
        %v4717 = vunpack.c.l.b16 %v4667
        %v4718 = vunpack.c.l.b16 %v4668
        %v4719 = vunpack.c.l.b16 %v4669
        %v4720 = vunpack.c.l.b16 %v4670
        %v4721 = vunpack.c.l.b16 %v4671
        %v4722 = vunpack.c.l.b16 %v4672
        %v4723 = vunpack.c.l.b16 %v4673
        %v4724 = vunpack.c.l.b16 %v4674
        %v4725 = vpack.c.b16 %v4710, %v4709
        %v4726 = vpack.c.b16 %v4712, %v4711
        %v4727 = vpack.c.b16 %v4714, %v4713
        %v4728 = vpack.c.b16 %v4716, %v4715
        %v4729 = vpack.c.b16 %v4718, %v4717
        %v4730 = vpack.c.b16 %v4720, %v4719
        %v4731 = vpack.c.b16 %v4722, %v4721
        %v4732 = vpack.c.b16 %v4724, %v4723
        %4741 = vmatpush.bf16.msra.mxu0 %v4732
        %4742 = vmatpush.bf16.msra.mxu0 %v4731
        %4743 = vmatpush.bf16.msra.mxu0 %v4730
        %4744 = vmatpush.bf16.msra.mxu0 %v4729
        %4745 = vmatpush.bf16.msra.mxu0 %v4728
        %4746 = vmatpush.bf16.msra.mxu0 %v4727
        %4747 = vmatpush.bf16.msra.mxu0 %v4726
        %4748 = vmatpush.bf16.msra.mxu0 %v4725
        %4749 = vmatmul.bf16.gmra.mxu0 %v4675
        %v4750 = vpop.f32.mrf.mxu0
        %v4751 = vadd.f32 0.0, %v4750
        %v4752 = vpop.f32.mrf.mxu0
        %v4753 = vadd.f32 0.0, %v4752
        %4754 = vmatmul.bf16.gmra.mxu0 %v4676
        %v4755 = vpop.f32.mrf.mxu0
        %v4756 = vadd.f32 0.0, %v4755
        %v4757 = vpop.f32.mrf.mxu0
        %v4758 = vadd.f32 0.0, %v4757
        %4759 = vmatmul.bf16.gmra.mxu0 %v4677
        %v4760 = vpop.f32.mrf.mxu0
        %v4761 = vadd.f32 0.0, %v4760
        %v4762 = vpop.f32.mrf.mxu0
        %v4763 = vadd.f32 0.0, %v4762
        %4764 = vmatmul.bf16.gmra.mxu0 %v4678
        %v4765 = vpop.f32.mrf.mxu0
        %v4766 = vadd.f32 0.0, %v4765
        %v4767 = vpop.f32.mrf.mxu0
        %v4768 = vadd.f32 0.0, %v4767
        %4769 = vmatmul.bf16.gmra.mxu0 %v4679
        %v4770 = vpop.f32.mrf.mxu0
        %v4771 = vadd.f32 0.0, %v4770
        %v4772 = vpop.f32.mrf.mxu0
        %v4773 = vadd.f32 0.0, %v4772
        %4774 = vmatmul.bf16.gmra.mxu0 %v4680
        %v4775 = vpop.f32.mrf.mxu0
        %v4776 = vadd.f32 0.0, %v4775
        %v4777 = vpop.f32.mrf.mxu0
        %v4778 = vadd.f32 0.0, %v4777
        %4779 = vmatmul.bf16.gmra.mxu0 %v4681
        %v4780 = vpop.f32.mrf.mxu0
        %v4781 = vadd.f32 0.0, %v4780
        %v4782 = vpop.f32.mrf.mxu0
        %v4783 = vadd.f32 0.0, %v4782
        %4784 = vmatmul.bf16.gmra.mxu0 %v4682
        %v4785 = vpop.f32.mrf.mxu0
        %v4786 = vadd.f32 0.0, %v4785
        %v4787 = vpop.f32.mrf.mxu0
        %v4788 = vadd.f32 0.0, %v4787
        %4789 = vmatmul.bf16.gmra.mxu0 %v4683
        %v4790 = vpop.f32.mrf.mxu0
        %v4791 = vadd.f32 0.0, %v4790
        %v4792 = vpop.f32.mrf.mxu0
        %v4793 = vadd.f32 0.0, %v4792
        %4794 = vdwg.mxu0
        %v4795 = vadd.f32 %v4614, %v4751
        %v4796 = vadd.f32 %v4616, %v4753
        %v4797 = vadd.f32 %v4619, %v4756
        %v4798 = vadd.f32 %v4621, %v4758
        %v4799 = vadd.f32 %v4624, %v4761
        %v4800 = vadd.f32 %v4626, %v4763
        %v4801 = vadd.f32 %v4629, %v4766
        %v4802 = vadd.f32 %v4631, %v4768
        %v4803 = vadd.f32 %v4634, %v4771
        %v4804 = vadd.f32 %v4636, %v4773
        %v4805 = vadd.f32 %v4639, %v4776
        %v4806 = vadd.f32 %v4641, %v4778
        %v4807 = vadd.f32 %v4644, %v4781
        %v4808 = vadd.f32 %v4646, %v4783
        %v4809 = vadd.f32 %v4649, %v4786
        %v4810 = vadd.f32 %v4651, %v4788
        %v4811 = vadd.f32 %v4654, %v4791
        %v4812 = vadd.f32 %v4656, %v4793
        %s4813 = scalar_lea.vmem [#allocation10], 192
        %v4814 = vld [vmem:[%s4813] sm:$0xf]
        %v4815 = vld [vmem:[%s4813 + $0x4] sm:$0xf]
        %v4816 = vld [vmem:[%s4813 + $0x8] sm:$0xf]
        %v4817 = vld [vmem:[%s4813 + $0xc] sm:$0xf]
        %v4818 = vld [vmem:[%s4813 + $0x10] sm:$0xf]
        %v4819 = vld [vmem:[%s4813 + $0x14] sm:$0xf]
        %v4820 = vld [vmem:[%s4813 + $0x18] sm:$0xf]
        %v4821 = vld [vmem:[%s4813 + $0x1c] sm:$0xf]
        %v4822 = vld [vmem:[%s4813 + $0x20] sm:$0xf]
        %v4823 = vld [vmem:[%s4813 + $0x24] sm:$0xf]
        %v4824 = vld [vmem:[%s4813 + $0x28] sm:$0xf]
        %v4825 = vld [vmem:[%s4813 + $0x2c] sm:$0xf]
        %v4826 = vld [vmem:[%s4813 + $0x30] sm:$0xf]
        %v4827 = vld [vmem:[%s4813 + $0x34] sm:$0xf]
        %v4828 = vld [vmem:[%s4813 + $0x38] sm:$0xf]
        %v4829 = vld [vmem:[%s4813 + $0x3c] sm:$0xf]
        %v4831 = vunpack.c.l.b16 %v4246
        %v4832 = vpack.c.b16 %v4831, %v4831
        %v4834 = vshrl.u32 %v4675, 16
        %v4836 = vshll.u32 %v4675, 16
        %v4838 = vrot.slane %v4836, 1
        %v4839 = vor.u32 %v4834, %v4838
        %v4841 = vshll.u32 %v4676, 16
        %v4843 = vrot.slane %v4841, 1
        %v4844 = vsel %vm892, %v4839, %v4843
        %v4845 = vshrl.u32 %v4676, 16
        %v4847 = vor.u32 %v4845, %v4843
        %v4849 = vshll.u32 %v4677, 16
        %v4851 = vrot.slane %v4849, 1
        %v4852 = vsel %vm892, %v4847, %v4851
        %v4853 = vshrl.u32 %v4677, 16
        %v4855 = vor.u32 %v4853, %v4851
        %v4857 = vshll.u32 %v4678, 16
        %v4859 = vrot.slane %v4857, 1
        %v4860 = vsel %vm892, %v4855, %v4859
        %v4861 = vshrl.u32 %v4678, 16
        %v4863 = vor.u32 %v4861, %v4859
        %v4865 = vshll.u32 %v4679, 16
        %v4867 = vrot.slane %v4865, 1
        %v4868 = vsel %vm892, %v4863, %v4867
        %v4869 = vshrl.u32 %v4679, 16
        %v4871 = vor.u32 %v4869, %v4867
        %v4873 = vshll.u32 %v4680, 16
        %v4875 = vrot.slane %v4873, 1
        %v4876 = vsel %vm892, %v4871, %v4875
        %v4877 = vshrl.u32 %v4680, 16
        %v4879 = vor.u32 %v4877, %v4875
        %v4881 = vshll.u32 %v4681, 16
        %v4883 = vrot.slane %v4881, 1
        %v4884 = vsel %vm892, %v4879, %v4883
        %v4885 = vshrl.u32 %v4681, 16
        %v4887 = vor.u32 %v4885, %v4883
        %v4889 = vshll.u32 %v4682, 16
        %v4891 = vrot.slane %v4889, 1
        %v4892 = vsel %vm892, %v4887, %v4891
        %v4893 = vshrl.u32 %v4682, 16
        %v4895 = vor.u32 %v4893, %v4891
        %v4897 = vshll.u32 %v4683, 16
        %v4899 = vrot.slane %v4897, 1
        %v4900 = vsel %vm892, %v4895, %v4899
        %v4901 = vshrl.u32 %v4683, 16
        %v4903 = vor.u32 %v4901, %v4899
        %v4905 = vshll.u32 %v4832, 16
        %v4907 = vrot.slane %v4905, 1
        %v4908 = vsel %vm892, %v4903, %v4907
        %v4934 = vunpack.c.l.b16 %v4814
        %v4935 = vunpack.c.l.b16 %v4815
        %v4936 = vunpack.c.l.b16 %v4816
        %v4937 = vunpack.c.l.b16 %v4817
        %v4938 = vunpack.c.l.b16 %v4818
        %v4939 = vunpack.c.l.b16 %v4819
        %v4940 = vunpack.c.l.b16 %v4820
        %v4941 = vunpack.c.l.b16 %v4821
        %v4942 = vunpack.c.l.b16 %v4822
        %v4943 = vunpack.c.l.b16 %v4823
        %v4944 = vunpack.c.l.b16 %v4824
        %v4945 = vunpack.c.l.b16 %v4825
        %v4946 = vunpack.c.l.b16 %v4826
        %v4947 = vunpack.c.l.b16 %v4827
        %v4948 = vunpack.c.l.b16 %v4828
        %v4949 = vunpack.c.l.b16 %v4829
        %v4950 = vpack.c.b16 %v4935, %v4934
        %v4951 = vpack.c.b16 %v4937, %v4936
        %v4952 = vpack.c.b16 %v4939, %v4938
        %v4953 = vpack.c.b16 %v4941, %v4940
        %v4954 = vpack.c.b16 %v4943, %v4942
        %v4955 = vpack.c.b16 %v4945, %v4944
        %v4956 = vpack.c.b16 %v4947, %v4946
        %v4957 = vpack.c.b16 %v4949, %v4948
        %4966 = vmatpush.bf16.msra.mxu0 %v4957
        %4967 = vmatpush.bf16.msra.mxu0 %v4956
        %4968 = vmatpush.bf16.msra.mxu0 %v4955
        %4969 = vmatpush.bf16.msra.mxu0 %v4954
        %4970 = vmatpush.bf16.msra.mxu0 %v4953
        %4971 = vmatpush.bf16.msra.mxu0 %v4952
        %4972 = vmatpush.bf16.msra.mxu0 %v4951
        %4973 = vmatpush.bf16.msra.mxu0 %v4950
        %4974 = vmatmul.bf16.gmra.mxu0 %v4844
        %v4975 = vpop.f32.mrf.mxu0
        %v4976 = vadd.f32 0.0, %v4975
        %v4977 = vpop.f32.mrf.mxu0
        %v4978 = vadd.f32 0.0, %v4977
        %4979 = vmatmul.bf16.gmra.mxu0 %v4852
        %v4980 = vpop.f32.mrf.mxu0
        %v4981 = vadd.f32 0.0, %v4980
        %v4982 = vpop.f32.mrf.mxu0
        %v4983 = vadd.f32 0.0, %v4982
        %4984 = vmatmul.bf16.gmra.mxu0 %v4860
        %v4985 = vpop.f32.mrf.mxu0
        %v4986 = vadd.f32 0.0, %v4985
        %v4987 = vpop.f32.mrf.mxu0
        %v4988 = vadd.f32 0.0, %v4987
        %4989 = vmatmul.bf16.gmra.mxu0 %v4868
        %v4990 = vpop.f32.mrf.mxu0
        %v4991 = vadd.f32 0.0, %v4990
        %v4992 = vpop.f32.mrf.mxu0
        %v4993 = vadd.f32 0.0, %v4992
        %4994 = vmatmul.bf16.gmra.mxu0 %v4876
        %v4995 = vpop.f32.mrf.mxu0
        %v4996 = vadd.f32 0.0, %v4995
        %v4997 = vpop.f32.mrf.mxu0
        %v4998 = vadd.f32 0.0, %v4997
        %4999 = vmatmul.bf16.gmra.mxu0 %v4884
        %v5000 = vpop.f32.mrf.mxu0
        %v5001 = vadd.f32 0.0, %v5000
        %v5002 = vpop.f32.mrf.mxu0
        %v5003 = vadd.f32 0.0, %v5002
        %5004 = vmatmul.bf16.gmra.mxu0 %v4892
        %v5005 = vpop.f32.mrf.mxu0
        %v5006 = vadd.f32 0.0, %v5005
        %v5007 = vpop.f32.mrf.mxu0
        %v5008 = vadd.f32 0.0, %v5007
        %5009 = vmatmul.bf16.gmra.mxu0 %v4900
        %v5010 = vpop.f32.mrf.mxu0
        %v5011 = vadd.f32 0.0, %v5010
        %v5012 = vpop.f32.mrf.mxu0
        %v5013 = vadd.f32 0.0, %v5012
        %5014 = vmatmul.bf16.gmra.mxu0 %v4908
        %v5015 = vpop.f32.mrf.mxu0
        %v5016 = vadd.f32 0.0, %v5015
        %v5017 = vpop.f32.mrf.mxu0
        %v5018 = vadd.f32 0.0, %v5017
        %5019 = vdwg.mxu0
        %v5020 = vadd.f32 %v4795, %v4976
        %v5021 = vadd.f32 %v4796, %v4978
        %v5022 = vadd.f32 %v4797, %v4981
        %v5023 = vadd.f32 %v4798, %v4983
        %v5024 = vadd.f32 %v4799, %v4986
        %v5025 = vadd.f32 %v4800, %v4988
        %v5026 = vadd.f32 %v4801, %v4991
        %v5027 = vadd.f32 %v4802, %v4993
        %v5028 = vadd.f32 %v4803, %v4996
        %v5029 = vadd.f32 %v4804, %v4998
        %v5030 = vadd.f32 %v4805, %v5001
        %v5031 = vadd.f32 %v4806, %v5003
        %v5032 = vadd.f32 %v4807, %v5006
        %v5033 = vadd.f32 %v4808, %v5008
        %v5034 = vadd.f32 %v4809, %v5011
        %v5035 = vadd.f32 %v4810, %v5013
        %v5036 = vadd.f32 %v4811, %v5016
        %v5037 = vadd.f32 %v4812, %v5018
        %s5038 = scalar_lea.vmem [#allocation10], 256
        %v5039 = vld [vmem:[%s5038] sm:$0xf]
        %v5040 = vld [vmem:[%s5038 + $0x4] sm:$0xf]
        %v5041 = vld [vmem:[%s5038 + $0x8] sm:$0xf]
        %v5042 = vld [vmem:[%s5038 + $0xc] sm:$0xf]
        %v5043 = vld [vmem:[%s5038 + $0x10] sm:$0xf]
        %v5044 = vld [vmem:[%s5038 + $0x14] sm:$0xf]
        %v5045 = vld [vmem:[%s5038 + $0x18] sm:$0xf]
        %v5046 = vld [vmem:[%s5038 + $0x1c] sm:$0xf]
        %v5047 = vld [vmem:[%s5038 + $0x20] sm:$0xf]
        %v5048 = vld [vmem:[%s5038 + $0x24] sm:$0xf]
        %v5049 = vld [vmem:[%s5038 + $0x28] sm:$0xf]
        %v5050 = vld [vmem:[%s5038 + $0x2c] sm:$0xf]
        %v5051 = vld [vmem:[%s5038 + $0x30] sm:$0xf]
        %v5052 = vld [vmem:[%s5038 + $0x34] sm:$0xf]
        %v5053 = vld [vmem:[%s5038 + $0x38] sm:$0xf]
        %v5054 = vld [vmem:[%s5038 + $0x3c] sm:$0xf]
        %v5055 = vrot.slane %v4675, 1
        %v5056 = vrot.slane %v4676, 1
        %v5057 = vsel %vm1223, %v5055, %v5056
        %v5058 = vrot.slane %v4677, 1
        %v5059 = vsel %vm1223, %v5056, %v5058
        %v5060 = vrot.slane %v4678, 1
        %v5061 = vsel %vm1223, %v5058, %v5060
        %v5062 = vrot.slane %v4679, 1
        %v5063 = vsel %vm1223, %v5060, %v5062
        %v5064 = vrot.slane %v4680, 1
        %v5065 = vsel %vm1223, %v5062, %v5064
        %v5066 = vrot.slane %v4681, 1
        %v5067 = vsel %vm1223, %v5064, %v5066
        %v5068 = vrot.slane %v4682, 1
        %v5069 = vsel %vm1223, %v5066, %v5068
        %v5070 = vrot.slane %v4683, 1
        %v5071 = vsel %vm1223, %v5068, %v5070
        %v5072 = vrot.slane %v4832, 1
        %v5073 = vsel %vm1223, %v5070, %v5072
        %v5099 = vunpack.c.l.b16 %v5039
        %v5100 = vunpack.c.l.b16 %v5040
        %v5101 = vunpack.c.l.b16 %v5041
        %v5102 = vunpack.c.l.b16 %v5042
        %v5103 = vunpack.c.l.b16 %v5043
        %v5104 = vunpack.c.l.b16 %v5044
        %v5105 = vunpack.c.l.b16 %v5045
        %v5106 = vunpack.c.l.b16 %v5046
        %v5107 = vunpack.c.l.b16 %v5047
        %v5108 = vunpack.c.l.b16 %v5048
        %v5109 = vunpack.c.l.b16 %v5049
        %v5110 = vunpack.c.l.b16 %v5050
        %v5111 = vunpack.c.l.b16 %v5051
        %v5112 = vunpack.c.l.b16 %v5052
        %v5113 = vunpack.c.l.b16 %v5053
        %v5114 = vunpack.c.l.b16 %v5054
        %v5115 = vpack.c.b16 %v5100, %v5099
        %v5116 = vpack.c.b16 %v5102, %v5101
        %v5117 = vpack.c.b16 %v5104, %v5103
        %v5118 = vpack.c.b16 %v5106, %v5105
        %v5119 = vpack.c.b16 %v5108, %v5107
        %v5120 = vpack.c.b16 %v5110, %v5109
        %v5121 = vpack.c.b16 %v5112, %v5111
        %v5122 = vpack.c.b16 %v5114, %v5113
        %5131 = vmatpush.bf16.msra.mxu0 %v5122
        %5132 = vmatpush.bf16.msra.mxu0 %v5121
        %5133 = vmatpush.bf16.msra.mxu0 %v5120
        %5134 = vmatpush.bf16.msra.mxu0 %v5119
        %5135 = vmatpush.bf16.msra.mxu0 %v5118
        %5136 = vmatpush.bf16.msra.mxu0 %v5117
        %5137 = vmatpush.bf16.msra.mxu0 %v5116
        %5138 = vmatpush.bf16.msra.mxu0 %v5115
        %5139 = vmatmul.bf16.gmra.mxu0 %v5057
        %v5140 = vpop.f32.mrf.mxu0
        %v5141 = vadd.f32 0.0, %v5140
        %v5142 = vpop.f32.mrf.mxu0
        %v5143 = vadd.f32 0.0, %v5142
        %5144 = vmatmul.bf16.gmra.mxu0 %v5059
        %v5145 = vpop.f32.mrf.mxu0
        %v5146 = vadd.f32 0.0, %v5145
        %v5147 = vpop.f32.mrf.mxu0
        %v5148 = vadd.f32 0.0, %v5147
        %5149 = vmatmul.bf16.gmra.mxu0 %v5061
        %v5150 = vpop.f32.mrf.mxu0
        %v5151 = vadd.f32 0.0, %v5150
        %v5152 = vpop.f32.mrf.mxu0
        %v5153 = vadd.f32 0.0, %v5152
        %5154 = vmatmul.bf16.gmra.mxu0 %v5063
        %v5155 = vpop.f32.mrf.mxu0
        %v5156 = vadd.f32 0.0, %v5155
        %v5157 = vpop.f32.mrf.mxu0
        %v5158 = vadd.f32 0.0, %v5157
        %5159 = vmatmul.bf16.gmra.mxu0 %v5065
        %v5160 = vpop.f32.mrf.mxu0
        %v5161 = vadd.f32 0.0, %v5160
        %v5162 = vpop.f32.mrf.mxu0
        %v5163 = vadd.f32 0.0, %v5162
        %5164 = vmatmul.bf16.gmra.mxu0 %v5067
        %v5165 = vpop.f32.mrf.mxu0
        %v5166 = vadd.f32 0.0, %v5165
        %v5167 = vpop.f32.mrf.mxu0
        %v5168 = vadd.f32 0.0, %v5167
        %5169 = vmatmul.bf16.gmra.mxu0 %v5069
        %v5170 = vpop.f32.mrf.mxu0
        %v5171 = vadd.f32 0.0, %v5170
        %v5172 = vpop.f32.mrf.mxu0
        %v5173 = vadd.f32 0.0, %v5172
        %5174 = vmatmul.bf16.gmra.mxu0 %v5071
        %v5175 = vpop.f32.mrf.mxu0
        %v5176 = vadd.f32 0.0, %v5175
        %v5177 = vpop.f32.mrf.mxu0
        %v5178 = vadd.f32 0.0, %v5177
        %5179 = vmatmul.bf16.gmra.mxu0 %v5073
        %v5180 = vpop.f32.mrf.mxu0
        %v5181 = vadd.f32 0.0, %v5180
        %v5182 = vpop.f32.mrf.mxu0
        %v5183 = vadd.f32 0.0, %v5182
        %5184 = vdwg.mxu0
        %v5185 = vadd.f32 %v5020, %v5141
        %v5186 = vadd.f32 %v5021, %v5143
        %v5187 = vadd.f32 %v5022, %v5146
        %v5188 = vadd.f32 %v5023, %v5148
        %v5189 = vadd.f32 %v5024, %v5151
        %v5190 = vadd.f32 %v5025, %v5153
        %v5191 = vadd.f32 %v5026, %v5156
        %v5192 = vadd.f32 %v5027, %v5158
        %v5193 = vadd.f32 %v5028, %v5161
        %v5194 = vadd.f32 %v5029, %v5163
        %v5195 = vadd.f32 %v5030, %v5166
        %v5196 = vadd.f32 %v5031, %v5168
        %v5197 = vadd.f32 %v5032, %v5171
        %v5198 = vadd.f32 %v5033, %v5173
        %v5199 = vadd.f32 %v5034, %v5176
        %v5200 = vadd.f32 %v5035, %v5178
        %v5201 = vadd.f32 %v5036, %v5181
        %v5202 = vadd.f32 %v5037, %v5183
        %v5203 = vld [vmem:[%s11] sm:$0x1]
        %v5205 = vperm.slane %v5203, 0
        %v5207 = vmul.f32 %v5185, %v5205
        %v5208 = vmul.f32 %v5186, %v5205
        %v5209 = vmul.f32 %v5187, %v5205
        %v5210 = vmul.f32 %v5188, %v5205
        %v5211 = vmul.f32 %v5189, %v5205
        %v5212 = vmul.f32 %v5190, %v5205
        %v5213 = vmul.f32 %v5191, %v5205
        %v5214 = vmul.f32 %v5192, %v5205
        %v5215 = vmul.f32 %v5193, %v5205
        %v5216 = vmul.f32 %v5194, %v5205
        %v5217 = vmul.f32 %v5195, %v5205
        %v5218 = vmul.f32 %v5196, %v5205
        %v5219 = vmul.f32 %v5197, %v5205
        %v5220 = vmul.f32 %v5198, %v5205
        %v5221 = vmul.f32 %v5199, %v5205
        %v5222 = vmul.f32 %v5200, %v5205
        %v5223 = vmul.f32 %v5201, %v5205
        %v5224 = vmul.f32 %v5202, %v5205
        %v5225 = vld [vmem:[%s12] sm:$0x1]
        %v5227 = vperm.slane %v5225, 0
        %v5229 = vadd.f32 %v5207, %v5227
        %v5230 = vadd.f32 %v5208, %v5227
        %v5231 = vadd.f32 %v5209, %v5227
        %v5232 = vadd.f32 %v5210, %v5227
        %v5233 = vadd.f32 %v5211, %v5227
        %v5234 = vadd.f32 %v5212, %v5227
        %v5235 = vadd.f32 %v5213, %v5227
        %v5236 = vadd.f32 %v5214, %v5227
        %v5237 = vadd.f32 %v5215, %v5227
        %v5238 = vadd.f32 %v5216, %v5227
        %v5239 = vadd.f32 %v5217, %v5227
        %v5240 = vadd.f32 %v5218, %v5227
        %v5241 = vadd.f32 %v5219, %v5227
        %v5242 = vadd.f32 %v5220, %v5227
        %v5243 = vadd.f32 %v5221, %v5227
        %v5244 = vadd.f32 %v5222, %v5227
        %v5245 = vadd.f32 %v5223, %v5227
        %v5246 = vadd.f32 %v5224, %v5227
        %v5247 = vtanh.pop %v5229
        %v5248 = vtanh.pop %v5230
        %v5249 = vtanh.pop %v5231
        %v5250 = vtanh.pop %v5232
        %v5251 = vtanh.pop %v5233
        %v5252 = vtanh.pop %v5234
        %v5253 = vtanh.pop %v5235
        %v5254 = vtanh.pop %v5236
        %v5255 = vtanh.pop %v5237
        %v5256 = vtanh.pop %v5238
        %v5257 = vtanh.pop %v5239
        %v5258 = vtanh.pop %v5240
        %v5259 = vtanh.pop %v5241
        %v5260 = vtanh.pop %v5242
        %v5261 = vtanh.pop %v5243
        %v5262 = vtanh.pop %v5244
        %v5263 = vtanh.pop %v5245
        %v5264 = vtanh.pop %v5246
        %v5265 = vsel %vm1837, %v5247, 0.0
        %v5266 = vsel %vm1838, %v5248, 0.0
        %v5267 = vsel %vm1839, %v5249, 0.0
        %v5268 = vsel %vm1840, %v5250, 0.0
        %v5269 = vsel %vm1841, %v5251, 0.0
        %v5270 = vsel %vm1842, %v5252, 0.0
        %v5271 = vsel %vm1843, %v5253, 0.0
        %v5272 = vsel %vm1844, %v5254, 0.0
        %v5273 = vsel %vm1845, %v5255, 0.0
        %v5274 = vsel %vm1846, %v5256, 0.0
        %v5275 = vsel %vm1847, %v5257, 0.0
        %v5276 = vsel %vm1848, %v5258, 0.0
        %v5277 = vsel %vm1849, %v5259, 0.0
        %v5278 = vsel %vm1850, %v5260, 0.0
        %v5279 = vsel %vm1851, %v5261, 0.0
        %v5280 = vsel %vm1852, %v5262, 0.0
        %v5281 = vsel %vm1853, %v5263, 0.0
        %v5282 = vsel %vm1854, %v5264, 0.0
        %v5283 = vpack.c.bf16 %v5265, %v5265
        %v5284 = vpack.c.bf16 %v5266, %v5266
        %v5285 = vpack.c.bf16 %v5267, %v5267
        %v5286 = vpack.c.bf16 %v5268, %v5268
        %v5287 = vpack.c.bf16 %v5269, %v5269
        %v5288 = vpack.c.bf16 %v5270, %v5270
        %v5289 = vpack.c.bf16 %v5271, %v5271
        %v5290 = vpack.c.bf16 %v5272, %v5272
        %v5291 = vpack.c.bf16 %v5273, %v5273
        %v5292 = vpack.c.bf16 %v5274, %v5274
        %v5293 = vpack.c.bf16 %v5275, %v5275
        %v5294 = vpack.c.bf16 %v5276, %v5276
        %v5295 = vpack.c.bf16 %v5277, %v5277
        %v5296 = vpack.c.bf16 %v5278, %v5278
        %v5297 = vpack.c.bf16 %v5279, %v5279
        %v5298 = vpack.c.bf16 %v5280, %v5280
        %v5299 = vpack.c.bf16 %v5281, %v5281
        %v5300 = vpack.c.bf16 %v5282, %v5282
        %v5301 = vld [vmem:[#allocation12] sm:$0xf]
        %v5302 = vld [vmem:[#allocation12 + $0x4] sm:$0xf]
        %v5303 = vld [vmem:[#allocation12 + $0x8] sm:$0xf]
        %v5304 = vld [vmem:[#allocation12 + $0xc] sm:$0xf]
        %v5305 = vld [vmem:[#allocation12 + $0x10] sm:$0xf]
        %v5306 = vld [vmem:[#allocation12 + $0x14] sm:$0xf]
        %v5307 = vld [vmem:[#allocation12 + $0x18] sm:$0xf]
        %v5308 = vld [vmem:[#allocation12 + $0x1c] sm:$0xf]
        %v5309 = vld [vmem:[#allocation12 + $0x20] sm:$0xf]
        %v5310 = vld [vmem:[#allocation12 + $0x24] sm:$0xf]
        %v5311 = vld [vmem:[#allocation12 + $0x28] sm:$0xf]
        %v5312 = vld [vmem:[#allocation12 + $0x2c] sm:$0xf]
        %v5313 = vld [vmem:[#allocation12 + $0x30] sm:$0xf]
        %v5314 = vld [vmem:[#allocation12 + $0x34] sm:$0xf]
        %v5315 = vld [vmem:[#allocation12 + $0x38] sm:$0xf]
        %v5316 = vld [vmem:[#allocation12 + $0x3c] sm:$0xf]
        %s5317 = scalar_lea.vmem [#allocation12], 64
        %v5318 = vld [vmem:[%s5317] sm:$0xf]
        %v5319 = vld [vmem:[%s5317 + $0x4] sm:$0xf]
        %v5320 = vld [vmem:[%s5317 + $0x8] sm:$0xf]
        %v5321 = vld [vmem:[%s5317 + $0xc] sm:$0xf]
        %v5322 = vld [vmem:[%s5317 + $0x10] sm:$0xf]
        %v5323 = vld [vmem:[%s5317 + $0x14] sm:$0xf]
        %v5324 = vld [vmem:[%s5317 + $0x18] sm:$0xf]
        %v5325 = vld [vmem:[%s5317 + $0x1c] sm:$0xf]
        %v5326 = vld [vmem:[%s5317 + $0x20] sm:$0xf]
        %v5327 = vld [vmem:[%s5317 + $0x24] sm:$0xf]
        %v5328 = vld [vmem:[%s5317 + $0x28] sm:$0xf]
        %v5329 = vld [vmem:[%s5317 + $0x2c] sm:$0xf]
        %v5330 = vld [vmem:[%s5317 + $0x30] sm:$0xf]
        %v5331 = vld [vmem:[%s5317 + $0x34] sm:$0xf]
        %v5332 = vld [vmem:[%s5317 + $0x38] sm:$0xf]
        %v5333 = vld [vmem:[%s5317 + $0x3c] sm:$0xf]
        %v5352 = vunpack.c.l.b16 %v5283
        %v5353 = vunpack.c.l.b16 %v5284
        %v5354 = vunpack.c.l.b16 %v5285
        %v5355 = vunpack.c.l.b16 %v5286
        %v5356 = vunpack.c.l.b16 %v5287
        %v5357 = vunpack.c.l.b16 %v5288
        %v5358 = vunpack.c.l.b16 %v5289
        %v5359 = vunpack.c.l.b16 %v5290
        %v5360 = vunpack.c.l.b16 %v5291
        %v5361 = vunpack.c.l.b16 %v5292
        %v5362 = vunpack.c.l.b16 %v5293
        %v5363 = vunpack.c.l.b16 %v5294
        %v5364 = vunpack.c.l.b16 %v5295
        %v5365 = vunpack.c.l.b16 %v5296
        %v5366 = vunpack.c.l.b16 %v5297
        %v5367 = vunpack.c.l.b16 %v5298
        %v5368 = vunpack.c.l.b16 %v5299
        %v5369 = vunpack.c.l.b16 %v5300
        %v5370 = vpack.c.b16 %v5353, %v5352
        %v5371 = vpack.c.b16 %v5355, %v5354
        %v5372 = vpack.c.b16 %v5357, %v5356
        %v5373 = vpack.c.b16 %v5359, %v5358
        %v5374 = vpack.c.b16 %v5361, %v5360
        %v5375 = vpack.c.b16 %v5363, %v5362
        %v5376 = vpack.c.b16 %v5365, %v5364
        %v5377 = vpack.c.b16 %v5367, %v5366
        %v5378 = vpack.c.b16 %v5369, %v5368
        %v5380 = vshrl.u32 %v5370, 16
        %v5382 = vshll.u32 %v5370, 16
        %v5384 = vrot.slane %v5382, 1
        %v5385 = vor.u32 %v5380, %v5384
        %v5387 = vshll.u32 %v5371, 16
        %v5389 = vrot.slane %v5387, 1
        %v5390 = vsel %vm892, %v5385, %v5389
        %v5391 = vshrl.u32 %v5371, 16
        %v5393 = vor.u32 %v5391, %v5389
        %v5395 = vshll.u32 %v5372, 16
        %v5397 = vrot.slane %v5395, 1
        %v5398 = vsel %vm892, %v5393, %v5397
        %v5399 = vshrl.u32 %v5372, 16
        %v5401 = vor.u32 %v5399, %v5397
        %v5403 = vshll.u32 %v5373, 16
        %v5405 = vrot.slane %v5403, 1
        %v5406 = vsel %vm892, %v5401, %v5405
        %v5407 = vshrl.u32 %v5373, 16
        %v5409 = vor.u32 %v5407, %v5405
        %v5411 = vshll.u32 %v5374, 16
        %v5413 = vrot.slane %v5411, 1
        %v5414 = vsel %vm892, %v5409, %v5413
        %v5415 = vshrl.u32 %v5374, 16
        %v5417 = vor.u32 %v5415, %v5413
        %v5419 = vshll.u32 %v5375, 16
        %v5421 = vrot.slane %v5419, 1
        %v5422 = vsel %vm892, %v5417, %v5421
        %v5423 = vshrl.u32 %v5375, 16
        %v5425 = vor.u32 %v5423, %v5421
        %v5427 = vshll.u32 %v5376, 16
        %v5429 = vrot.slane %v5427, 1
        %v5430 = vsel %vm892, %v5425, %v5429
        %v5431 = vshrl.u32 %v5376, 16
        %v5433 = vor.u32 %v5431, %v5429
        %v5435 = vshll.u32 %v5377, 16
        %v5437 = vrot.slane %v5435, 1
        %v5438 = vsel %vm892, %v5433, %v5437
        %v5439 = vshrl.u32 %v5377, 16
        %v5441 = vor.u32 %v5439, %v5437
        %v5443 = vshll.u32 %v5378, 16
        %v5445 = vrot.slane %v5443, 1
        %v5446 = vsel %vm892, %v5441, %v5445
        %v5447 = vshrl.u32 %v5378, 16
        %v5449 = vor.u32 %v5447, %v5445
        %v5475 = vunpack.c.l.b16 %v5318
        %v5476 = vunpack.c.l.b16 %v5319
        %v5477 = vunpack.c.l.b16 %v5320
        %v5478 = vunpack.c.l.b16 %v5321
        %v5479 = vunpack.c.l.b16 %v5322
        %v5480 = vunpack.c.l.b16 %v5323
        %v5481 = vunpack.c.l.b16 %v5324
        %v5482 = vunpack.c.l.b16 %v5325
        %v5483 = vunpack.c.l.b16 %v5326
        %v5484 = vunpack.c.l.b16 %v5327
        %v5485 = vunpack.c.l.b16 %v5328
        %v5486 = vunpack.c.l.b16 %v5329
        %v5487 = vunpack.c.l.b16 %v5330
        %v5488 = vunpack.c.l.b16 %v5331
        %v5489 = vunpack.c.l.b16 %v5332
        %v5490 = vunpack.c.l.b16 %v5333
        %v5491 = vpack.c.b16 %v5476, %v5475
        %v5492 = vpack.c.b16 %v5478, %v5477
        %v5493 = vpack.c.b16 %v5480, %v5479
        %v5494 = vpack.c.b16 %v5482, %v5481
        %v5495 = vpack.c.b16 %v5484, %v5483
        %v5496 = vpack.c.b16 %v5486, %v5485
        %v5497 = vpack.c.b16 %v5488, %v5487
        %v5498 = vpack.c.b16 %v5490, %v5489
        %5507 = vmatpush.bf16.msra.mxu0 %v5498
        %5508 = vmatpush.bf16.msra.mxu0 %v5497
        %5509 = vmatpush.bf16.msra.mxu0 %v5496
        %5510 = vmatpush.bf16.msra.mxu0 %v5495
        %5511 = vmatpush.bf16.msra.mxu0 %v5494
        %5512 = vmatpush.bf16.msra.mxu0 %v5493
        %5513 = vmatpush.bf16.msra.mxu0 %v5492
        %5514 = vmatpush.bf16.msra.mxu0 %v5491
        %5515 = vmatmul.bf16.gmra.mxu0 %v5390
        %v5516 = vpop.f32.mrf.mxu0
        %v5517 = vadd.f32 0.0, %v5516
        %v5518 = vpop.f32.mrf.mxu0
        %v5519 = vadd.f32 0.0, %v5518
        %5520 = vmatmul.bf16.gmra.mxu0 %v5398
        %v5521 = vpop.f32.mrf.mxu0
        %v5522 = vadd.f32 0.0, %v5521
        %v5523 = vpop.f32.mrf.mxu0
        %v5524 = vadd.f32 0.0, %v5523
        %5525 = vmatmul.bf16.gmra.mxu0 %v5406
        %v5526 = vpop.f32.mrf.mxu0
        %v5527 = vadd.f32 0.0, %v5526
        %v5528 = vpop.f32.mrf.mxu0
        %v5529 = vadd.f32 0.0, %v5528
        %5530 = vmatmul.bf16.gmra.mxu0 %v5414
        %v5531 = vpop.f32.mrf.mxu0
        %v5532 = vadd.f32 0.0, %v5531
        %v5533 = vpop.f32.mrf.mxu0
        %v5534 = vadd.f32 0.0, %v5533
        %5535 = vmatmul.bf16.gmra.mxu0 %v5422
        %v5536 = vpop.f32.mrf.mxu0
        %v5537 = vadd.f32 0.0, %v5536
        %v5538 = vpop.f32.mrf.mxu0
        %v5539 = vadd.f32 0.0, %v5538
        %5540 = vmatmul.bf16.gmra.mxu0 %v5430
        %v5541 = vpop.f32.mrf.mxu0
        %v5542 = vadd.f32 0.0, %v5541
        %v5543 = vpop.f32.mrf.mxu0
        %v5544 = vadd.f32 0.0, %v5543
        %5545 = vmatmul.bf16.gmra.mxu0 %v5438
        %v5546 = vpop.f32.mrf.mxu0
        %v5547 = vadd.f32 0.0, %v5546
        %v5548 = vpop.f32.mrf.mxu0
        %v5549 = vadd.f32 0.0, %v5548
        %5550 = vmatmul.bf16.gmra.mxu0 %v5446
        %v5551 = vpop.f32.mrf.mxu0
        %v5552 = vadd.f32 0.0, %v5551
        %v5553 = vpop.f32.mrf.mxu0
        %v5554 = vadd.f32 0.0, %v5553
        %5555 = vmatmul.bf16.gmra.mxu0 %v5449
        %v5556 = vpop.f32.mrf.mxu0
        %v5557 = vadd.f32 0.0, %v5556
        %v5558 = vpop.f32.mrf.mxu0
        %5559 = vdwg.mxu0
        %v5585 = vunpack.c.l.b16 %v5301
        %v5586 = vunpack.c.l.b16 %v5302
        %v5587 = vunpack.c.l.b16 %v5303
        %v5588 = vunpack.c.l.b16 %v5304
        %v5589 = vunpack.c.l.b16 %v5305
        %v5590 = vunpack.c.l.b16 %v5306
        %v5591 = vunpack.c.l.b16 %v5307
        %v5592 = vunpack.c.l.b16 %v5308
        %v5593 = vunpack.c.l.b16 %v5309
        %v5594 = vunpack.c.l.b16 %v5310
        %v5595 = vunpack.c.l.b16 %v5311
        %v5596 = vunpack.c.l.b16 %v5312
        %v5597 = vunpack.c.l.b16 %v5313
        %v5598 = vunpack.c.l.b16 %v5314
        %v5599 = vunpack.c.l.b16 %v5315
        %v5600 = vunpack.c.l.b16 %v5316
        %v5601 = vpack.c.b16 %v5586, %v5585
        %v5602 = vpack.c.b16 %v5588, %v5587
        %v5603 = vpack.c.b16 %v5590, %v5589
        %v5604 = vpack.c.b16 %v5592, %v5591
        %v5605 = vpack.c.b16 %v5594, %v5593
        %v5606 = vpack.c.b16 %v5596, %v5595
        %v5607 = vpack.c.b16 %v5598, %v5597
        %v5608 = vpack.c.b16 %v5600, %v5599
        %5617 = vmatpush.bf16.msra.mxu0 %v5608
        %5618 = vmatpush.bf16.msra.mxu0 %v5607
        %5619 = vmatpush.bf16.msra.mxu0 %v5606
        %5620 = vmatpush.bf16.msra.mxu0 %v5605
        %5621 = vmatpush.bf16.msra.mxu0 %v5604
        %5622 = vmatpush.bf16.msra.mxu0 %v5603
        %5623 = vmatpush.bf16.msra.mxu0 %v5602
        %5624 = vmatpush.bf16.msra.mxu0 %v5601
        %5625 = vmatmul.bf16.gmra.mxu0 %v5370
        %v5626 = vpop.f32.mrf.mxu0
        %v5627 = vadd.f32 %v5517, %v5626
        %v5628 = vpop.f32.mrf.mxu0
        %v5629 = vadd.f32 %v5519, %v5628
        %5630 = vmatmul.bf16.gmra.mxu0 %v5371
        %v5631 = vpop.f32.mrf.mxu0
        %v5632 = vadd.f32 %v5522, %v5631
        %v5633 = vpop.f32.mrf.mxu0
        %v5634 = vadd.f32 %v5524, %v5633
        %5635 = vmatmul.bf16.gmra.mxu0 %v5372
        %v5636 = vpop.f32.mrf.mxu0
        %v5637 = vadd.f32 %v5527, %v5636
        %v5638 = vpop.f32.mrf.mxu0
        %v5639 = vadd.f32 %v5529, %v5638
        %5640 = vmatmul.bf16.gmra.mxu0 %v5373
        %v5641 = vpop.f32.mrf.mxu0
        %v5642 = vadd.f32 %v5532, %v5641
        %v5643 = vpop.f32.mrf.mxu0
        %v5644 = vadd.f32 %v5534, %v5643
        %5645 = vmatmul.bf16.gmra.mxu0 %v5374
        %v5646 = vpop.f32.mrf.mxu0
        %v5647 = vadd.f32 %v5537, %v5646
        %v5648 = vpop.f32.mrf.mxu0
        %v5649 = vadd.f32 %v5539, %v5648
        %5650 = vmatmul.bf16.gmra.mxu0 %v5375
        %v5651 = vpop.f32.mrf.mxu0
        %v5652 = vadd.f32 %v5542, %v5651
        %v5653 = vpop.f32.mrf.mxu0
        %v5654 = vadd.f32 %v5544, %v5653
        %5655 = vmatmul.bf16.gmra.mxu0 %v5376
        %v5656 = vpop.f32.mrf.mxu0
        %v5657 = vadd.f32 %v5547, %v5656
        %v5658 = vpop.f32.mrf.mxu0
        %v5659 = vadd.f32 %v5549, %v5658
        %5660 = vmatmul.bf16.gmra.mxu0 %v5377
        %v5661 = vpop.f32.mrf.mxu0
        %v5662 = vadd.f32 %v5552, %v5661
        %v5663 = vpop.f32.mrf.mxu0
        %v5664 = vadd.f32 %v5554, %v5663
        %5665 = vmatmul.bf16.gmra.mxu0 %v5378
        %v5666 = vpop.f32.mrf.mxu0
        %v5667 = vadd.f32 %v5557, %v5666
        %v5668 = vpop.f32.mrf.mxu0
        %5669 = vdwg.mxu0
        %s5670 = scalar_lea.vmem [#allocation12], 128
        %v5671 = vld [vmem:[%s5670] sm:$0xf]
        %v5672 = vld [vmem:[%s5670 + $0x4] sm:$0xf]
        %v5673 = vld [vmem:[%s5670 + $0x8] sm:$0xf]
        %v5674 = vld [vmem:[%s5670 + $0xc] sm:$0xf]
        %v5675 = vld [vmem:[%s5670 + $0x10] sm:$0xf]
        %v5676 = vld [vmem:[%s5670 + $0x14] sm:$0xf]
        %v5677 = vld [vmem:[%s5670 + $0x18] sm:$0xf]
        %v5678 = vld [vmem:[%s5670 + $0x1c] sm:$0xf]
        %v5679 = vld [vmem:[%s5670 + $0x20] sm:$0xf]
        %v5680 = vld [vmem:[%s5670 + $0x24] sm:$0xf]
        %v5681 = vld [vmem:[%s5670 + $0x28] sm:$0xf]
        %v5682 = vld [vmem:[%s5670 + $0x2c] sm:$0xf]
        %v5683 = vld [vmem:[%s5670 + $0x30] sm:$0xf]
        %v5684 = vld [vmem:[%s5670 + $0x34] sm:$0xf]
        %v5685 = vld [vmem:[%s5670 + $0x38] sm:$0xf]
        %v5686 = vld [vmem:[%s5670 + $0x3c] sm:$0xf]
        %v5687 = vrot.slane %v5370, 1
        %v5688 = vrot.slane %v5371, 1
        %v5689 = vsel %vm1223, %v5687, %v5688
        %v5690 = vrot.slane %v5372, 1
        %v5691 = vsel %vm1223, %v5688, %v5690
        %v5692 = vrot.slane %v5373, 1
        %v5693 = vsel %vm1223, %v5690, %v5692
        %v5694 = vrot.slane %v5374, 1
        %v5695 = vsel %vm1223, %v5692, %v5694
        %v5696 = vrot.slane %v5375, 1
        %v5697 = vsel %vm1223, %v5694, %v5696
        %v5698 = vrot.slane %v5376, 1
        %v5699 = vsel %vm1223, %v5696, %v5698
        %v5700 = vrot.slane %v5377, 1
        %v5701 = vsel %vm1223, %v5698, %v5700
        %v5702 = vrot.slane %v5378, 1
        %v5703 = vsel %vm1223, %v5700, %v5702
        %v5729 = vunpack.c.l.b16 %v5671
        %v5730 = vunpack.c.l.b16 %v5672
        %v5731 = vunpack.c.l.b16 %v5673
        %v5732 = vunpack.c.l.b16 %v5674
        %v5733 = vunpack.c.l.b16 %v5675
        %v5734 = vunpack.c.l.b16 %v5676
        %v5735 = vunpack.c.l.b16 %v5677
        %v5736 = vunpack.c.l.b16 %v5678
        %v5737 = vunpack.c.l.b16 %v5679
        %v5738 = vunpack.c.l.b16 %v5680
        %v5739 = vunpack.c.l.b16 %v5681
        %v5740 = vunpack.c.l.b16 %v5682
        %v5741 = vunpack.c.l.b16 %v5683
        %v5742 = vunpack.c.l.b16 %v5684
        %v5743 = vunpack.c.l.b16 %v5685
        %v5744 = vunpack.c.l.b16 %v5686
        %v5745 = vpack.c.b16 %v5730, %v5729
        %v5746 = vpack.c.b16 %v5732, %v5731
        %v5747 = vpack.c.b16 %v5734, %v5733
        %v5748 = vpack.c.b16 %v5736, %v5735
        %v5749 = vpack.c.b16 %v5738, %v5737
        %v5750 = vpack.c.b16 %v5740, %v5739
        %v5751 = vpack.c.b16 %v5742, %v5741
        %v5752 = vpack.c.b16 %v5744, %v5743
        %5761 = vmatpush.bf16.msra.mxu0 %v5752
        %5762 = vmatpush.bf16.msra.mxu0 %v5751
        %5763 = vmatpush.bf16.msra.mxu0 %v5750
        %5764 = vmatpush.bf16.msra.mxu0 %v5749
        %5765 = vmatpush.bf16.msra.mxu0 %v5748
        %5766 = vmatpush.bf16.msra.mxu0 %v5747
        %5767 = vmatpush.bf16.msra.mxu0 %v5746
        %5768 = vmatpush.bf16.msra.mxu0 %v5745
        %5769 = vmatmul.bf16.gmra.mxu0 %v5689
        %v5770 = vpop.f32.mrf.mxu0
        %v5771 = vadd.f32 0.0, %v5770
        %v5772 = vpop.f32.mrf.mxu0
        %v5773 = vadd.f32 0.0, %v5772
        %5774 = vmatmul.bf16.gmra.mxu0 %v5691
        %v5775 = vpop.f32.mrf.mxu0
        %v5776 = vadd.f32 0.0, %v5775
        %v5777 = vpop.f32.mrf.mxu0
        %v5778 = vadd.f32 0.0, %v5777
        %5779 = vmatmul.bf16.gmra.mxu0 %v5693
        %v5780 = vpop.f32.mrf.mxu0
        %v5781 = vadd.f32 0.0, %v5780
        %v5782 = vpop.f32.mrf.mxu0
        %v5783 = vadd.f32 0.0, %v5782
        %5784 = vmatmul.bf16.gmra.mxu0 %v5695
        %v5785 = vpop.f32.mrf.mxu0
        %v5786 = vadd.f32 0.0, %v5785
        %v5787 = vpop.f32.mrf.mxu0
        %v5788 = vadd.f32 0.0, %v5787
        %5789 = vmatmul.bf16.gmra.mxu0 %v5697
        %v5790 = vpop.f32.mrf.mxu0
        %v5791 = vadd.f32 0.0, %v5790
        %v5792 = vpop.f32.mrf.mxu0
        %v5793 = vadd.f32 0.0, %v5792
        %5794 = vmatmul.bf16.gmra.mxu0 %v5699
        %v5795 = vpop.f32.mrf.mxu0
        %v5796 = vadd.f32 0.0, %v5795
        %v5797 = vpop.f32.mrf.mxu0
        %v5798 = vadd.f32 0.0, %v5797
        %5799 = vmatmul.bf16.gmra.mxu0 %v5701
        %v5800 = vpop.f32.mrf.mxu0
        %v5801 = vadd.f32 0.0, %v5800
        %v5802 = vpop.f32.mrf.mxu0
        %v5803 = vadd.f32 0.0, %v5802
        %5804 = vmatmul.bf16.gmra.mxu0 %v5703
        %v5805 = vpop.f32.mrf.mxu0
        %v5806 = vadd.f32 0.0, %v5805
        %v5807 = vpop.f32.mrf.mxu0
        %v5808 = vadd.f32 0.0, %v5807
        %5809 = vmatmul.bf16.gmra.mxu0 %v5702
        %v5810 = vpop.f32.mrf.mxu0
        %v5811 = vadd.f32 0.0, %v5810
        %v5812 = vpop.f32.mrf.mxu0
        %5813 = vdwg.mxu0
        %v5814 = vadd.f32 %v5627, %v5771
        %v5815 = vadd.f32 %v5629, %v5773
        %v5816 = vadd.f32 %v5632, %v5776
        %v5817 = vadd.f32 %v5634, %v5778
        %v5818 = vadd.f32 %v5637, %v5781
        %v5819 = vadd.f32 %v5639, %v5783
        %v5820 = vadd.f32 %v5642, %v5786
        %v5821 = vadd.f32 %v5644, %v5788
        %v5822 = vadd.f32 %v5647, %v5791
        %v5823 = vadd.f32 %v5649, %v5793
        %v5824 = vadd.f32 %v5652, %v5796
        %v5825 = vadd.f32 %v5654, %v5798
        %v5826 = vadd.f32 %v5657, %v5801
        %v5827 = vadd.f32 %v5659, %v5803
        %v5828 = vadd.f32 %v5662, %v5806
        %v5829 = vadd.f32 %v5664, %v5808
        %v5830 = vadd.f32 %v5667, %v5811
        %s5831 = scalar_lea.vmem [#allocation12], 192
        %v5832 = vld [vmem:[%s5831] sm:$0xf]
        %v5833 = vld [vmem:[%s5831 + $0x4] sm:$0xf]
        %v5834 = vld [vmem:[%s5831 + $0x8] sm:$0xf]
        %v5835 = vld [vmem:[%s5831 + $0xc] sm:$0xf]
        %v5836 = vld [vmem:[%s5831 + $0x10] sm:$0xf]
        %v5837 = vld [vmem:[%s5831 + $0x14] sm:$0xf]
        %v5838 = vld [vmem:[%s5831 + $0x18] sm:$0xf]
        %v5839 = vld [vmem:[%s5831 + $0x1c] sm:$0xf]
        %v5840 = vld [vmem:[%s5831 + $0x20] sm:$0xf]
        %v5841 = vld [vmem:[%s5831 + $0x24] sm:$0xf]
        %v5842 = vld [vmem:[%s5831 + $0x28] sm:$0xf]
        %v5843 = vld [vmem:[%s5831 + $0x2c] sm:$0xf]
        %v5844 = vld [vmem:[%s5831 + $0x30] sm:$0xf]
        %v5845 = vld [vmem:[%s5831 + $0x34] sm:$0xf]
        %v5846 = vld [vmem:[%s5831 + $0x38] sm:$0xf]
        %v5847 = vld [vmem:[%s5831 + $0x3c] sm:$0xf]
        %v5848 = vrot.slane %v5380, 1
        %v5849 = vrot.slane %v5382, 2
        %v5850 = vor.u32 %v5848, %v5849
        %v5851 = vrot.slane %v5391, 1
        %v5852 = vrot.slane %v5387, 2
        %v5853 = vor.u32 %v5851, %v5852
        %v5854 = vsel %vm1397, %v5850, %v5853
        %v5855 = vrot.slane %v5399, 1
        %v5856 = vrot.slane %v5395, 2
        %v5857 = vor.u32 %v5855, %v5856
        %v5858 = vsel %vm1397, %v5853, %v5857
        %v5859 = vrot.slane %v5407, 1
        %v5860 = vrot.slane %v5403, 2
        %v5861 = vor.u32 %v5859, %v5860
        %v5862 = vsel %vm1397, %v5857, %v5861
        %v5863 = vrot.slane %v5415, 1
        %v5864 = vrot.slane %v5411, 2
        %v5865 = vor.u32 %v5863, %v5864
        %v5866 = vsel %vm1397, %v5861, %v5865
        %v5867 = vrot.slane %v5423, 1
        %v5868 = vrot.slane %v5419, 2
        %v5869 = vor.u32 %v5867, %v5868
        %v5870 = vsel %vm1397, %v5865, %v5869
        %v5871 = vrot.slane %v5431, 1
        %v5872 = vrot.slane %v5427, 2
        %v5873 = vor.u32 %v5871, %v5872
        %v5874 = vsel %vm1397, %v5869, %v5873
        %v5875 = vrot.slane %v5439, 1
        %v5876 = vrot.slane %v5435, 2
        %v5877 = vor.u32 %v5875, %v5876
        %v5878 = vsel %vm1397, %v5873, %v5877
        %v5879 = vrot.slane %v5447, 1
        %v5880 = vrot.slane %v5443, 2
        %v5881 = vor.u32 %v5879, %v5880
        %v5882 = vsel %vm1397, %v5877, %v5881
        %v5908 = vunpack.c.l.b16 %v5832
        %v5909 = vunpack.c.l.b16 %v5833
        %v5910 = vunpack.c.l.b16 %v5834
        %v5911 = vunpack.c.l.b16 %v5835
        %v5912 = vunpack.c.l.b16 %v5836
        %v5913 = vunpack.c.l.b16 %v5837
        %v5914 = vunpack.c.l.b16 %v5838
        %v5915 = vunpack.c.l.b16 %v5839
        %v5916 = vunpack.c.l.b16 %v5840
        %v5917 = vunpack.c.l.b16 %v5841
        %v5918 = vunpack.c.l.b16 %v5842
        %v5919 = vunpack.c.l.b16 %v5843
        %v5920 = vunpack.c.l.b16 %v5844
        %v5921 = vunpack.c.l.b16 %v5845
        %v5922 = vunpack.c.l.b16 %v5846
        %v5923 = vunpack.c.l.b16 %v5847
        %v5924 = vpack.c.b16 %v5909, %v5908
        %v5925 = vpack.c.b16 %v5911, %v5910
        %v5926 = vpack.c.b16 %v5913, %v5912
        %v5927 = vpack.c.b16 %v5915, %v5914
        %v5928 = vpack.c.b16 %v5917, %v5916
        %v5929 = vpack.c.b16 %v5919, %v5918
        %v5930 = vpack.c.b16 %v5921, %v5920
        %v5931 = vpack.c.b16 %v5923, %v5922
        %5940 = vmatpush.bf16.msra.mxu0 %v5931
        %5941 = vmatpush.bf16.msra.mxu0 %v5930
        %5942 = vmatpush.bf16.msra.mxu0 %v5929
        %5943 = vmatpush.bf16.msra.mxu0 %v5928
        %5944 = vmatpush.bf16.msra.mxu0 %v5927
        %5945 = vmatpush.bf16.msra.mxu0 %v5926
        %5946 = vmatpush.bf16.msra.mxu0 %v5925
        %5947 = vmatpush.bf16.msra.mxu0 %v5924
        %5948 = vmatmul.bf16.gmra.mxu0 %v5854
        %v5949 = vpop.f32.mrf.mxu0
        %v5950 = vadd.f32 0.0, %v5949
        %v5951 = vpop.f32.mrf.mxu0
        %v5952 = vadd.f32 0.0, %v5951
        %5953 = vmatmul.bf16.gmra.mxu0 %v5858
        %v5954 = vpop.f32.mrf.mxu0
        %v5955 = vadd.f32 0.0, %v5954
        %v5956 = vpop.f32.mrf.mxu0
        %v5957 = vadd.f32 0.0, %v5956
        %5958 = vmatmul.bf16.gmra.mxu0 %v5862
        %v5959 = vpop.f32.mrf.mxu0
        %v5960 = vadd.f32 0.0, %v5959
        %v5961 = vpop.f32.mrf.mxu0
        %v5962 = vadd.f32 0.0, %v5961
        %5963 = vmatmul.bf16.gmra.mxu0 %v5866
        %v5964 = vpop.f32.mrf.mxu0
        %v5965 = vadd.f32 0.0, %v5964
        %v5966 = vpop.f32.mrf.mxu0
        %v5967 = vadd.f32 0.0, %v5966
        %5968 = vmatmul.bf16.gmra.mxu0 %v5870
        %v5969 = vpop.f32.mrf.mxu0
        %v5970 = vadd.f32 0.0, %v5969
        %v5971 = vpop.f32.mrf.mxu0
        %v5972 = vadd.f32 0.0, %v5971
        %5973 = vmatmul.bf16.gmra.mxu0 %v5874
        %v5974 = vpop.f32.mrf.mxu0
        %v5975 = vadd.f32 0.0, %v5974
        %v5976 = vpop.f32.mrf.mxu0
        %v5977 = vadd.f32 0.0, %v5976
        %5978 = vmatmul.bf16.gmra.mxu0 %v5878
        %v5979 = vpop.f32.mrf.mxu0
        %v5980 = vadd.f32 0.0, %v5979
        %v5981 = vpop.f32.mrf.mxu0
        %v5982 = vadd.f32 0.0, %v5981
        %5983 = vmatmul.bf16.gmra.mxu0 %v5882
        %v5984 = vpop.f32.mrf.mxu0
        %v5985 = vadd.f32 0.0, %v5984
        %v5986 = vpop.f32.mrf.mxu0
        %v5987 = vadd.f32 0.0, %v5986
        %5988 = vmatmul.bf16.gmra.mxu0 %v5881
        %v5989 = vpop.f32.mrf.mxu0
        %v5990 = vadd.f32 0.0, %v5989
        %v5991 = vpop.f32.mrf.mxu0
        %5992 = vdwg.mxu0
        %v5993 = vadd.f32 %v5814, %v5950
        %v5994 = vadd.f32 %v5815, %v5952
        %v5995 = vadd.f32 %v5816, %v5955
        %v5996 = vadd.f32 %v5817, %v5957
        %v5997 = vadd.f32 %v5818, %v5960
        %v5998 = vadd.f32 %v5819, %v5962
        %v5999 = vadd.f32 %v5820, %v5965
        %v6000 = vadd.f32 %v5821, %v5967
        %v6001 = vadd.f32 %v5822, %v5970
        %v6002 = vadd.f32 %v5823, %v5972
        %v6003 = vadd.f32 %v5824, %v5975
        %v6004 = vadd.f32 %v5825, %v5977
        %v6005 = vadd.f32 %v5826, %v5980
        %v6006 = vadd.f32 %v5827, %v5982
        %v6007 = vadd.f32 %v5828, %v5985
        %v6008 = vadd.f32 %v5829, %v5987
        %v6009 = vadd.f32 %v5830, %v5990
        %s6010 = scalar_lea.vmem [#allocation12], 256
        %v6011 = vld [vmem:[%s6010] sm:$0xf]
        %v6012 = vld [vmem:[%s6010 + $0x4] sm:$0xf]
        %v6013 = vld [vmem:[%s6010 + $0x8] sm:$0xf]
        %v6014 = vld [vmem:[%s6010 + $0xc] sm:$0xf]
        %v6015 = vld [vmem:[%s6010 + $0x10] sm:$0xf]
        %v6016 = vld [vmem:[%s6010 + $0x14] sm:$0xf]
        %v6017 = vld [vmem:[%s6010 + $0x18] sm:$0xf]
        %v6018 = vld [vmem:[%s6010 + $0x1c] sm:$0xf]
        %v6019 = vld [vmem:[%s6010 + $0x20] sm:$0xf]
        %v6020 = vld [vmem:[%s6010 + $0x24] sm:$0xf]
        %v6021 = vld [vmem:[%s6010 + $0x28] sm:$0xf]
        %v6022 = vld [vmem:[%s6010 + $0x2c] sm:$0xf]
        %v6023 = vld [vmem:[%s6010 + $0x30] sm:$0xf]
        %v6024 = vld [vmem:[%s6010 + $0x34] sm:$0xf]
        %v6025 = vld [vmem:[%s6010 + $0x38] sm:$0xf]
        %v6026 = vld [vmem:[%s6010 + $0x3c] sm:$0xf]
        %v6027 = vrot.slane %v5370, 2
        %v6028 = vrot.slane %v5371, 2
        %v6029 = vsel %vm1591, %v6027, %v6028
        %v6030 = vrot.slane %v5372, 2
        %v6031 = vsel %vm1591, %v6028, %v6030
        %v6032 = vrot.slane %v5373, 2
        %v6033 = vsel %vm1591, %v6030, %v6032
        %v6034 = vrot.slane %v5374, 2
        %v6035 = vsel %vm1591, %v6032, %v6034
        %v6036 = vrot.slane %v5375, 2
        %v6037 = vsel %vm1591, %v6034, %v6036
        %v6038 = vrot.slane %v5376, 2
        %v6039 = vsel %vm1591, %v6036, %v6038
        %v6040 = vrot.slane %v5377, 2
        %v6041 = vsel %vm1591, %v6038, %v6040
        %v6042 = vrot.slane %v5378, 2
        %v6043 = vsel %vm1591, %v6040, %v6042
        %v6069 = vunpack.c.l.b16 %v6011
        %v6070 = vunpack.c.l.b16 %v6012
        %v6071 = vunpack.c.l.b16 %v6013
        %v6072 = vunpack.c.l.b16 %v6014
        %v6073 = vunpack.c.l.b16 %v6015
        %v6074 = vunpack.c.l.b16 %v6016
        %v6075 = vunpack.c.l.b16 %v6017
        %v6076 = vunpack.c.l.b16 %v6018
        %v6077 = vunpack.c.l.b16 %v6019
        %v6078 = vunpack.c.l.b16 %v6020
        %v6079 = vunpack.c.l.b16 %v6021
        %v6080 = vunpack.c.l.b16 %v6022
        %v6081 = vunpack.c.l.b16 %v6023
        %v6082 = vunpack.c.l.b16 %v6024
        %v6083 = vunpack.c.l.b16 %v6025
        %v6084 = vunpack.c.l.b16 %v6026
        %v6085 = vpack.c.b16 %v6070, %v6069
        %v6086 = vpack.c.b16 %v6072, %v6071
        %v6087 = vpack.c.b16 %v6074, %v6073
        %v6088 = vpack.c.b16 %v6076, %v6075
        %v6089 = vpack.c.b16 %v6078, %v6077
        %v6090 = vpack.c.b16 %v6080, %v6079
        %v6091 = vpack.c.b16 %v6082, %v6081
        %v6092 = vpack.c.b16 %v6084, %v6083
        %6101 = vmatpush.bf16.msra.mxu0 %v6092
        %6102 = vmatpush.bf16.msra.mxu0 %v6091
        %6103 = vmatpush.bf16.msra.mxu0 %v6090
        %6104 = vmatpush.bf16.msra.mxu0 %v6089
        %6105 = vmatpush.bf16.msra.mxu0 %v6088
        %6106 = vmatpush.bf16.msra.mxu0 %v6087
        %6107 = vmatpush.bf16.msra.mxu0 %v6086
        %6108 = vmatpush.bf16.msra.mxu0 %v6085
        %6109 = vmatmul.bf16.gmra.mxu0 %v6029
        %v6110 = vpop.f32.mrf.mxu0
        %v6111 = vadd.f32 0.0, %v6110
        %v6112 = vpop.f32.mrf.mxu0
        %v6113 = vadd.f32 0.0, %v6112
        %6114 = vmatmul.bf16.gmra.mxu0 %v6031
        %v6115 = vpop.f32.mrf.mxu0
        %v6116 = vadd.f32 0.0, %v6115
        %v6117 = vpop.f32.mrf.mxu0
        %v6118 = vadd.f32 0.0, %v6117
        %6119 = vmatmul.bf16.gmra.mxu0 %v6033
        %v6120 = vpop.f32.mrf.mxu0
        %v6121 = vadd.f32 0.0, %v6120
        %v6122 = vpop.f32.mrf.mxu0
        %v6123 = vadd.f32 0.0, %v6122
        %6124 = vmatmul.bf16.gmra.mxu0 %v6035
        %v6125 = vpop.f32.mrf.mxu0
        %v6126 = vadd.f32 0.0, %v6125
        %v6127 = vpop.f32.mrf.mxu0
        %v6128 = vadd.f32 0.0, %v6127
        %6129 = vmatmul.bf16.gmra.mxu0 %v6037
        %v6130 = vpop.f32.mrf.mxu0
        %v6131 = vadd.f32 0.0, %v6130
        %v6132 = vpop.f32.mrf.mxu0
        %v6133 = vadd.f32 0.0, %v6132
        %6134 = vmatmul.bf16.gmra.mxu0 %v6039
        %v6135 = vpop.f32.mrf.mxu0
        %v6136 = vadd.f32 0.0, %v6135
        %v6137 = vpop.f32.mrf.mxu0
        %v6138 = vadd.f32 0.0, %v6137
        %6139 = vmatmul.bf16.gmra.mxu0 %v6041
        %v6140 = vpop.f32.mrf.mxu0
        %v6141 = vadd.f32 0.0, %v6140
        %v6142 = vpop.f32.mrf.mxu0
        %v6143 = vadd.f32 0.0, %v6142
        %6144 = vmatmul.bf16.gmra.mxu0 %v6043
        %v6145 = vpop.f32.mrf.mxu0
        %v6146 = vadd.f32 0.0, %v6145
        %v6147 = vpop.f32.mrf.mxu0
        %v6148 = vadd.f32 0.0, %v6147
        %6149 = vmatmul.bf16.gmra.mxu0 %v6042
        %v6150 = vpop.f32.mrf.mxu0
        %v6151 = vadd.f32 0.0, %v6150
        %v6152 = vpop.f32.mrf.mxu0
        %6153 = vdwg.mxu0
        %v6154 = vadd.f32 %v5993, %v6111
        %v6155 = vadd.f32 %v5994, %v6113
        %v6156 = vadd.f32 %v5995, %v6116
        %v6157 = vadd.f32 %v5996, %v6118
        %v6158 = vadd.f32 %v5997, %v6121
        %v6159 = vadd.f32 %v5998, %v6123
        %v6160 = vadd.f32 %v5999, %v6126
        %v6161 = vadd.f32 %v6000, %v6128
        %v6162 = vadd.f32 %v6001, %v6131
        %v6163 = vadd.f32 %v6002, %v6133
        %v6164 = vadd.f32 %v6003, %v6136
        %v6165 = vadd.f32 %v6004, %v6138
        %v6166 = vadd.f32 %v6005, %v6141
        %v6167 = vadd.f32 %v6006, %v6143
        %v6168 = vadd.f32 %v6007, %v6146
        %v6169 = vadd.f32 %v6008, %v6148
        %v6170 = vadd.f32 %v6009, %v6151
        %v6171 = vld [vmem:[%s14] sm:$0x1]
        %v6173 = vperm.slane %v6171, 0
        %v6175 = vmul.f32 %v6154, %v6173
        %v6176 = vmul.f32 %v6155, %v6173
        %v6177 = vmul.f32 %v6156, %v6173
        %v6178 = vmul.f32 %v6157, %v6173
        %v6179 = vmul.f32 %v6158, %v6173
        %v6180 = vmul.f32 %v6159, %v6173
        %v6181 = vmul.f32 %v6160, %v6173
        %v6182 = vmul.f32 %v6161, %v6173
        %v6183 = vmul.f32 %v6162, %v6173
        %v6184 = vmul.f32 %v6163, %v6173
        %v6185 = vmul.f32 %v6164, %v6173
        %v6186 = vmul.f32 %v6165, %v6173
        %v6187 = vmul.f32 %v6166, %v6173
        %v6188 = vmul.f32 %v6167, %v6173
        %v6189 = vmul.f32 %v6168, %v6173
        %v6190 = vmul.f32 %v6169, %v6173
        %v6191 = vmul.f32 %v6170, %v6173
        %v6192 = vld [vmem:[%s15] sm:$0x1]
        %v6194 = vperm.slane %v6192, 0
        %v6196 = vadd.f32 %v6175, %v6194
        %v6197 = vadd.f32 %v6176, %v6194
        %v6198 = vadd.f32 %v6177, %v6194
        %v6199 = vadd.f32 %v6178, %v6194
        %v6200 = vadd.f32 %v6179, %v6194
        %v6201 = vadd.f32 %v6180, %v6194
        %v6202 = vadd.f32 %v6181, %v6194
        %v6203 = vadd.f32 %v6182, %v6194
        %v6204 = vadd.f32 %v6183, %v6194
        %v6205 = vadd.f32 %v6184, %v6194
        %v6206 = vadd.f32 %v6185, %v6194
        %v6207 = vadd.f32 %v6186, %v6194
        %v6208 = vadd.f32 %v6187, %v6194
        %v6209 = vadd.f32 %v6188, %v6194
        %v6210 = vadd.f32 %v6189, %v6194
        %v6211 = vadd.f32 %v6190, %v6194
        %v6212 = vadd.f32 %v6191, %v6194
        %v6229 = vrot.slane %v670, 2
        %v6230 = vrot.slane %v671, 2
        %v6231 = vsel %vm4149, %v6229, %v6230
        %v6232 = vrot.slane %v672, 2
        %v6233 = vsel %vm4149, %v6230, %v6232
        %v6234 = vrot.slane %v673, 2
        %v6235 = vsel %vm4149, %v6232, %v6234
        %v6236 = vrot.slane %v674, 2
        %v6237 = vsel %vm4149, %v6234, %v6236
        %v6238 = vrot.slane %v675, 2
        %v6239 = vsel %vm4149, %v6236, %v6238
        %v6240 = vrot.slane %v676, 2
        %v6241 = vsel %vm4149, %v6238, %v6240
        %v6242 = vrot.slane %v677, 2
        %v6243 = vsel %vm4149, %v6240, %v6242
        %v6244 = vrot.slane %v678, 2
        %v6245 = vsel %vm4149, %v6242, %v6244
        %v6246 = vrot.slane %v679, 2
        %v6247 = vsel %vm4149, %v6244, %v6246
        %v6248 = vrot.slane %v680, 2
        %v6249 = vsel %vm4149, %v6246, %v6248
        %v6250 = vrot.slane %v681, 2
        %v6251 = vsel %vm4149, %v6248, %v6250
        %v6252 = vrot.slane %v682, 2
        %v6253 = vsel %vm4149, %v6250, %v6252
        %v6254 = vrot.slane %v683, 2
        %v6255 = vsel %vm4149, %v6252, %v6254
        %v6256 = vrot.slane %v684, 2
        %v6257 = vsel %vm4149, %v6254, %v6256
        %v6258 = vrot.slane %v685, 2
        %v6259 = vsel %vm4149, %v6256, %v6258
        %v6277 = vadd.f32 %v6196, %v6229
        %v6278 = vadd.f32 %v6197, %v6231
        %v6279 = vadd.f32 %v6198, %v6233
        %v6280 = vadd.f32 %v6199, %v6235
        %v6281 = vadd.f32 %v6200, %v6237
        %v6282 = vadd.f32 %v6201, %v6239
        %v6283 = vadd.f32 %v6202, %v6241
        %v6284 = vadd.f32 %v6203, %v6243
        %v6285 = vadd.f32 %v6204, %v6245
        %v6286 = vadd.f32 %v6205, %v6247
        %v6287 = vadd.f32 %v6206, %v6249
        %v6288 = vadd.f32 %v6207, %v6251
        %v6289 = vadd.f32 %v6208, %v6253
        %v6290 = vadd.f32 %v6209, %v6255
        %v6291 = vadd.f32 %v6210, %v6257
        %v6292 = vadd.f32 %v6211, %v6259
        %v6293 = vadd.f32 %v6212, %v6258
        %6294 = vst [vmem:[%s570 - $0x6] sm:$0xc0] %v6277
        %6295 = vst [vmem:[%s570 + $0x2] sm:$0xff] %v6278
        %6296 = vst [vmem:[%s570 + $0xa] sm:$0xff] %v6279
        %6297 = vst [vmem:[%s570 + $0x12] sm:$0xff] %v6280
        %6298 = vst [vmem:[%s570 + $0x1a] sm:$0xff] %v6281
        %6299 = vst [vmem:[%s570 + $0x22] sm:$0xff] %v6282
        %6300 = vst [vmem:[%s570 + $0x2a] sm:$0xff] %v6283
        %6301 = vst [vmem:[%s570 + $0x32] sm:$0xff] %v6284
        %6302 = vst [vmem:[%s570 + $0x3a] sm:$0xff] %v6285
        %6303 = vst [vmem:[%s570 + $0x42] sm:$0xff] %v6286
        %6304 = vst [vmem:[%s570 + $0x4a] sm:$0xff] %v6287
        %6305 = vst [vmem:[%s570 + $0x52] sm:$0xff] %v6288
        %6306 = vst [vmem:[%s570 + $0x5a] sm:$0xff] %v6289
        %6307 = vst [vmem:[%s570 + $0x62] sm:$0xff] %v6290
        %6308 = vst [vmem:[%s570 + $0x6a] sm:$0xff] %v6291
        %6309 = vst [vmem:[%s570 + $0x72] sm:$0xff] %v6292
        %6310 = vst [vmem:[%s570 + $0x7a] sm:$0x3f] %v6293
        %s6311 = sand.u32 %s370, 1
        %s6312 = scalar_lea.sflag [#allocation6], %s6311
        %s6313 = sand.u32 %s370, 1
        %s6314 = smul.addr %s6313, 128
        %s6315 = scalar_lea.vmem [#allocation13], %s6314
        // Predicated region
        $region117: #{tpu_custom_call.1} parent=79 // pred_check
          %p6316 = pneg %p380
        $region118: #{tpu_custom_call.1} parent=79 // pred_check_branch
          %6318 = sbr.rel (%p6316) target = $region120
        $region119: #{tpu_custom_call.1} parent=79 // pred_region
          %s6319 = smul.u32 16, %s38
          %6321 = vsyncadd %s6312, 0
          %s6322 = smul.addr %s37, 32
          %s6323 = sadd.s32 %s6319, %s6322
          %s6324 = smul.addr %s6323, 8
          %s6325 = scalar_lea.hbm %s16, %s6324
          %s6326 = sshll.u32 %s6315, 4
          %s6327 = int_to_ptr.vmem [resolvable:$true] %s6326
          %s6328 = sshll.u32 %s6325, 4
          %s6329 = int_to_ptr.hbm [resolvable:$true] %s6328
          %6334 = dma.vmem_to_hbm [thread:$0]  %s6327, 2048, %s6329, %s6312, 128, 128, 8
        $region120: #{tpu_custom_call.1} parent=79 // pred_fallthru
          _
      $region80: #{tpu_custom_call.1} parent=5 // pred_fallthru
        _
      %p6335 = scmp.le.s32.totalorder 2, %s28
      // Predicated region
      $region121: #{tpu_custom_call.1} parent=5 // pred_check
        %p6336 = pneg %p6335
      $region122: #{tpu_custom_call.1} parent=5 // pred_check_branch
        %6338 = sbr.rel (%p6336) target = $region124
      $region123: #{tpu_custom_call.1} parent=5 // pred_region
        %s6339 = ssub.s32 %s28, 2
        // Predicated region
        $region125: #{tpu_custom_call.1} parent=123 // pred_check
          %p6340 = pneg %p386
        $region126: #{tpu_custom_call.1} parent=123 // pred_check_branch
          %6342 = sbr.rel (%p6340) target = $region128
        $region127: #{tpu_custom_call.1} parent=123 // pred_region
          %s6343 = sand.u32 %s371, 1
          %s6344 = scalar_lea.sflag [#allocation6], %s6343
          %s6345 = sand.u32 %s371, 1
          %s6346 = smul.addr %s6345, 128
          %s6347 = scalar_lea.vmem [#allocation13], %s6346
          %6349 = dma.done %s6344, 2048
        $region128: #{tpu_custom_call.1} parent=123 // pred_fallthru
          _
      $region124: #{tpu_custom_call.1} parent=5 // pred_fallthru
        _
    $region6: #{tpu_custom_call.1} parent=1 // loop_footer
      %s32 = sadd.s32 1, %s28
    $region7: #{tpu_custom_call.1} parent=1 // loop_footer_branch
      %27 = sbr.rel target = $region3
    $region8: #{tpu_custom_call.1} parent=1 // loop_exit
      _
    %6350 = vsyncpa [#allocation5], 1
    %s6351 = scalar_lea.sflag [#allocation5], 1
    %6352 = vsyncpa %s6351, 1
    %6353 = vsyncpa [#allocation8], 1
    %6354 = vsyncpa [#allocation11], 1
    %6355 = vsyncpa [#allocation6], 1
    %s6356 = scalar_lea.sflag [#allocation6], 1
    %6357 = vsyncpa %s6356, 1
  %6358 = vsyncmov [#allocation3]
  %s6359 = vpop.sfrf %6358
  %p6360 = scmp.eq.s32.totalorder %s6359, 0
  %p6361 = pneg %p6360
  %6363 = shalt.err (%p6361)
  %s6364 = scalar_lea.sflag [#allocation3], 1
  %6365 = vsyncmov %s6364
  %s6366 = vpop.sfrf %6365
  %p6367 = scmp.eq.s32.totalorder %s6366, 0
  %p6368 = pneg %p6367
  %6370 = shalt.err (%p6368)

</llo_original>
